<compile_context>
chip_gen: v7x
topology: tpu7x:2x2x1
jax: 0.10.0
libtpu: 0.0.40
codegen_flags: <defaults>
</compile_context>

<pallas_src>
import functools
import math

import jax
import jax.numpy as jnp
from jax.experimental import pallas as pl
from jax.experimental.pallas import tpu as pltpu


# ----------------------------------------------------------------------------
# Fused Pallas kernel: all layers, both directions, skip connection.
# ----------------------------------------------------------------------------
def _bilstm_fused_kernel(*refs, num_layers, seq_len):
    # refs layout:
    #   refs[0]            x        (T*Bp, H)   time-major flattened (padded) input
    #   refs[1]            x_rev    (T*Bp, H)   time-reversed input (layer-0 bwd proj)
    #   refs[2 : 2+4L]     per layer: wf (Din,8H), wb (Din,8H), whh_blk (2H,8H), b (1,8H)
    #   refs[2+4L]         out      (T*Bp, H)
    #   refs[3+4L]         hn       (2L, Bp, H)
    #   refs[4+4L]         cn       (2L, Bp, H)
    #   refs[5+4L]         xw       (T*Bp, 8H)  scratch: hoisted projection (packed gates)
    #   refs[6+4L]         act      (T*Bp, 2H)  scratch: time-aligned   [h_f(t)     | h_b(t)    ]
    #   refs[7+4L]         act_rev  (T*Bp, 2H)  scratch: time-reversed  [h_f(T-1-t) | h_b(T-1-t)]
    n_w = 4 * num_layers
    x_ref = refs[0]
    xrev_ref = refs[1]
    w_refs = refs[2:2 + n_w]
    out_ref = refs[2 + n_w]
    hn_ref = refs[3 + n_w]
    cn_ref = refs[4 + n_w]
    xw_ref = refs[5 + n_w]
    act_ref = refs[6 + n_w]
    actrev_ref = refs[7 + n_w]

    T = seq_len
    rows, H = x_ref.shape            # rows = T * Bp
    Bp = rows // T
    H2, H6 = 2 * H, 6 * H

    for layer in range(num_layers):
        wf = w_refs[4 * layer + 0][...]      # (Din, 8H)  fwd weights in fwd gate cols
        wb = w_refs[4 * layer + 1][...]      # (Din, 8H)  bwd weights in bwd gate cols
        whh = w_refs[4 * layer + 2][...]     # (2H, 8H)   block-diagonal recurrent weight
        b = w_refs[4 * layer + 3][...]       # (1, 8H)

        if layer == 0:
            inp = x_ref[...]
            inp_rev = xrev_ref[...]
        else:
            inp = act_ref[...]               # (T*Bp, 2H) [h_f(t) | h_b(t)]
            inp_rev = actrev_ref[...]        # (T*Bp, 2H) time-reversed stream

        # ---- Hoisted input projection (both directions), bias folded in. ----
        # Row block s holds: fwd gate pre-acts for time s  AND  bwd gate
        # pre-acts for time T-1-s, already in the packed gate-column layout.
        # Spilled to VMEM scratch; re-loaded per step to cap vreg pressure.
        xw_ref[...] = (jnp.dot(inp, wf, preferred_element_type=jnp.float32)
                       + jnp.dot(inp_rev, wb, preferred_element_type=jnp.float32)
                       + b)

        # ---- Fused fwd+bwd recurrence, lane-packed state (Bp, 2H). ----
        # TODO(synk): on v7x, push whh once per layer via pltpu.matmul_push_rhs
        # and drive the T steps with matmul_acc_lhs/matmul_pop (weight-stationary).
        h = jnp.zeros((Bp, H2), jnp.float32)
        c = jnp.zeros((Bp, H2), jnp.float32)
        last_layer = (layer == num_layers - 1)
        for s in range(T):                   # fully unrolled (T small, static)
            r = s * Bp                       # fwd time s / bwd time T-1-s
            rb = (T - 1 - s) * Bp
            gates = xw_ref[r:r + Bp, :] + jnp.dot(
                h, whh, preferred_element_type=jnp.float32)     # (Bp, 8H)
            sig = jax.nn.sigmoid(gates[:, :H6])   # i,f,o (both dirs)  -- 3/4 of lanes
            g_g = jnp.tanh(gates[:, H6:])         # g      (both dirs) -- 1/4 of lanes
            i_g = sig[:, 0 * H2:1 * H2]
            f_g = sig[:, 1 * H2:2 * H2]
            o_g = sig[:, 2 * H2:3 * H2]
            c = f_g * c + i_g * g_g
            h = o_g * jnp.tanh(c)
            # Streaming stores (off the dependency chain):
            act_ref[r:r + Bp, :H] = h[:, :H]        # fwd output at time s
            act_ref[rb:rb + Bp, H:] = h[:, H:]      # bwd output at time T-1-s
            if not last_layer:                      # reversed stream feeds next layer
                actrev_ref[rb:rb + Bp, :H] = h[:, :H]
                actrev_ref[r:r + Bp, H:] = h[:, H:]

        # Final states, PyTorch ordering: index = 2*layer + direction.
        hn_ref[2 * layer] = h[:, :H]
        hn_ref[2 * layer + 1] = h[:, H:]
        cn_ref[2 * layer] = c[:, :H]
        cn_ref[2 * layer + 1] = c[:, H:]

    # Skip connection: forward + backward + input (Appendix A.2).
    # TODO(synk): if T/B/H grow, present a lane-dense (>=128-wide) out layout.
    out_ref[...] = act_ref[:, :H] + act_ref[:, H:] + x_ref[...]


# ----------------------------------------------------------------------------
# Wrapper: weight packing, batch padding, single pallas_call, unpad.
# ----------------------------------------------------------------------------
def _pack_layer(params_f, params_b, H, d_in):
    """Pack one layer's torch-style params into the kernel's gate layout.

    Kernel gate-column layout (width 8H): [i_f i_b | f_f f_b | o_f o_b | g_f g_b]
    (gate-major, direction-minor; per-direction gate order (i, f, o, g)).
    """
    wih_f, whh_f, bih_f, bhh_f = params_f   # torch layout: rows = (i,f,g,o) blocks
    wih_b, whh_b, bih_b, bhh_b = params_b
    order = (0, 1, 3, 2)                    # pick i, f, o, g out of torch's (i,f,g,o)
    bf = bih_f + bhh_f
    bb = bih_b + bhh_b

    wf = jnp.zeros((d_in, 8 * H), jnp.float32)     # fwd weights -> fwd gate cols only
    wb = jnp.zeros((d_in, 8 * H), jnp.float32)     # bwd weights -> bwd gate cols only
    whh = jnp.zeros((2 * H, 8 * H), jnp.float32)   # block diagonal recurrent weight
    bias = jnp.zeros((1, 8 * H), jnp.float32)

    for k, g in enumerate(order):
        gs = slice(g * H, (g + 1) * H)             # torch gate row block
        cf = slice((2 * k) * H, (2 * k + 1) * H)   # packed fwd column block
        cb = slice((2 * k + 1) * H, (2 * k + 2) * H)  # packed bwd column block
        wf = wf.at[:, cf].set(wih_f[gs, :].T)
        wb = wb.at[:, cb].set(wih_b[gs, :].T)
        whh = whh.at[:H, cf].set(whh_f[gs, :].T)   # h_f rows feed fwd gates
        whh = whh.at[H:, cb].set(whh_b[gs, :].T)   # h_b rows feed bwd gates
        bias = bias.at[0, cf].set(bf[gs])
        bias = bias.at[0, cb].set(bb[gs])
    return wf, wb, whh, bias


def bidirectional_lstm_forward(inputs, params, num_layers, size):
    """inputs: (T, B, size) float32 -> (output, hn, cn) like the PyTorch module."""
    T, B, H = inputs.shape
    assert H == size
    Bp = ((B + 7) // 8) * 8                     # pad batch rows to one sublane group

    x_pad = jnp.pad(inputs.astype(jnp.float32), ((0, 0), (0, Bp - B), (0, 0)))
    x2 = x_pad.reshape(T * Bp, H)               # row = t*Bp + b
    x2rev = x_pad[::-1].reshape(T * Bp, H)      # time-reversed copy (layer-0 bwd proj)

    weight_args = []
    for layer in range(num_layers):
        d_in = H if layer == 0 else 2 * H
        weight_args += list(_pack_layer(params[(layer, "fwd")],
                                        params[(layer, "bwd")], H, d_in))

    vmem = pl.BlockSpec(memory_space=pltpu.MemorySpace.VMEM)
    kernel = functools.partial(_bilstm_fused_kernel,
                               num_layers=num_layers, seq_len=T)

    # TODO(synk): if T/B/H grow beyond toy scale, add a batch-block grid axis
    # marked "parallel" (megacore on v7x), a time-blocked pipeline for x/xw/act,
    # and an explicit vmem_limit_bytes (v7x has 64 MiB VMEM).
    out2, hn_p, cn_p = pl.pallas_call(
        kernel,
        out_shape=(
            jax.ShapeDtypeStruct((T * Bp, H), jnp.float32),
            jax.ShapeDtypeStruct((2 * num_layers, Bp, H), jnp.float32),
            jax.ShapeDtypeStruct((2 * num_layers, Bp, H), jnp.float32),
        ),
        in_specs=[vmem] * (2 + 4 * num_layers),
        out_specs=(vmem, vmem, vmem),
        scratch_shapes=[
            pltpu.VMEM((T * Bp, 8 * H), jnp.float32),   # hoisted projection (packed)
            pltpu.VMEM((T * Bp, 2 * H), jnp.float32),   # time-aligned hidden stream
            pltpu.VMEM((T * Bp, 2 * H), jnp.float32),   # time-reversed hidden stream
        ],
    )(x2, x2rev, *weight_args)

    output = out2.reshape(T, Bp, H)[:, :B, :]
    hn = hn_p[:, :B, :]
    cn = cn_p[:, :B, :]
    return output, hn, cn


# ----------------------------------------------------------------------------
# Parameter init (mimics torch.nn.LSTM: uniform(-1/sqrt(H), 1/sqrt(H))).
# Raw torch layout: w_ih (4H, Din), w_hh (4H, H), b_ih (4H,), b_hh (4H,),
# gate row order (i, f, g, o).
# ----------------------------------------------------------------------------
def init_lstm_params(key, size, num_layers):
    H = size
    k = 1.0 / math.sqrt(H)
    params = {}
    for layer in range(num_layers):
        d_in = size if layer == 0 else 2 * size
        for direction in ("fwd", "bwd"):
            key, k1, k2, k3, k4 = jax.random.split(key, 5)
            w_ih = jax.random.uniform(k1, (4 * H, d_in), jnp.float32, -k, k)
            w_hh = jax.random.uniform(k2, (4 * H, H), jnp.float32, -k, k)
            b_ih = jax.random.uniform(k3, (4 * H,), jnp.float32, -k, k)
            b_hh = jax.random.uniform(k4, (4 * H,), jnp.float32, -k, k)
            params[(layer, direction)] = (w_ih, w_hh, b_ih, b_hh)
    return params


# ----------------------------------------------------------------------------
# Pure-JAX reference (correctness check), torch semantics.
# ----------------------------------------------------------------------------
def _ref_lstm_direction(x, w_ih, w_hh, b_ih, b_hh):
    T, B, _ = x.shape
    H = w_hh.shape[1]
    wih_t, whh_t = w_ih.T, w_hh.T
    b = (b_ih + b_hh)[None, :]
    h = jnp.zeros((B, H), jnp.float32)
    c = jnp.zeros((B, H), jnp.float32)
    outs = []
    for t in range(T):
        gates = x[t] @ wih_t + h @ whh_t + b
        i = jax.nn.sigmoid(gates[:, 0 * H:1 * H])
        f = jax.nn.sigmoid(gates[:, 1 * H:2 * H])
        g = jnp.tanh(gates[:, 2 * H:3 * H])
        o = jax.nn.sigmoid(gates[:, 3 * H:4 * H])
        c = f * c + i * g
        h = o * jnp.tanh(c)
        outs.append(h)
    return jnp.stack(outs, 0), h, c


def _ref_forward(inputs, params, num_layers, size):
    x = inputs
    h_list, c_list = [], []
    for layer in range(num_layers):
        of, hf, cf = _ref_lstm_direction(x, *params[(layer, "fwd")])
        obr, hb, cb = _ref_lstm_direction(x[::-1], *params[(layer, "bwd")])
        x = jnp.concatenate([of, obr[::-1]], axis=-1)
        h_list += [hf, hb]
        c_list += [cf, cb]
    H = size
    out = x[:, :, :H] + x[:, :, H:] + inputs
    return out, jnp.stack(h_list, 0), jnp.stack(c_list, 0)


if __name__ == "__main__":
    SEQ, BATCH, SIZE, LAYERS = 8, 2, 32, 2

    key = jax.random.PRNGKey(0)
    key, k_in = jax.random.split(key)
    inputs = jax.random.normal(k_in, (SEQ, BATCH, SIZE), dtype=jnp.float32)
    params = init_lstm_params(key, SIZE, LAYERS)

    output, hn, cn = bidirectional_lstm_forward(inputs, params, LAYERS, SIZE)
    jax.block_until_ready((output, hn, cn))

    # sanity-check against pure-JAX reference
    ref_out, ref_hn, ref_cn = _ref_forward(inputs, params, LAYERS, SIZE)
    assert output.shape == (SEQ, BATCH, SIZE)
    assert hn.shape == (LAYERS * 2, BATCH, SIZE)
    assert cn.shape == (LAYERS * 2, BATCH, SIZE)
    assert jnp.allclose(output, ref_out, atol=1e-4, rtol=1e-4)
    assert jnp.allclose(hn, ref_hn, atol=1e-4, rtol=1e-4)
    assert jnp.allclose(cn, ref_cn, atol=1e-4, rtol=1e-4)

    print("KERNEL_OK")
</pallas_src>

<mosaic_0001>
module attributes {stable_mosaic.version = 11 : i64} {
  func.func @_bilstm_fused_kernel(%arg0: memref<64x32xf32, #tpu.memory_space<vmem>>, %arg1: memref<64x32xf32, #tpu.memory_space<vmem>>, %arg2: memref<32x256xf32, #tpu.memory_space<vmem>>, %arg3: memref<32x256xf32, #tpu.memory_space<vmem>>, %arg4: memref<64x256xf32, #tpu.memory_space<vmem>>, %arg5: memref<1x256xf32, #tpu.memory_space<vmem>>, %arg6: memref<64x256xf32, #tpu.memory_space<vmem>>, %arg7: memref<64x256xf32, #tpu.memory_space<vmem>>, %arg8: memref<64x256xf32, #tpu.memory_space<vmem>>, %arg9: memref<1x256xf32, #tpu.memory_space<vmem>>, %arg10: memref<64x32xf32, #tpu.memory_space<vmem>>, %arg11: memref<4x8x32xf32, #tpu.memory_space<vmem>>, %arg12: memref<4x8x32xf32, #tpu.memory_space<vmem>>, %arg13: memref<64x256xf32, #tpu.memory_space<vmem>>, %arg14: memref<64x64xf32, #tpu.memory_space<vmem>>, %arg15: memref<64x64xf32, #tpu.memory_space<vmem>>) attributes {dimension_semantics = [], scalar_prefetch = 0 : i64, scratch_operands = 3 : i64, tpu.core_type = #tpu.core_type<tc>} {
    %c0 = arith.constant 0 : index
    %c0_0 = arith.constant 0 : index
    %0 = vector.load %arg2[%c0, %c0_0] : memref<32x256xf32, #tpu.memory_space<vmem>>, vector<32x256xf32>
    %c0_1 = arith.constant 0 : index
    %c0_2 = arith.constant 0 : index
    %1 = vector.load %arg3[%c0_1, %c0_2] : memref<32x256xf32, #tpu.memory_space<vmem>>, vector<32x256xf32>
    %c0_3 = arith.constant 0 : index
    %c0_4 = arith.constant 0 : index
    %2 = vector.load %arg4[%c0_3, %c0_4] : memref<64x256xf32, #tpu.memory_space<vmem>>, vector<64x256xf32>
    %c0_5 = arith.constant 0 : index
    %c0_6 = arith.constant 0 : index
    %3 = vector.load %arg5[%c0_5, %c0_6] : memref<1x256xf32, #tpu.memory_space<vmem>>, vector<1x256xf32>
    %c0_7 = arith.constant 0 : index
    %c0_8 = arith.constant 0 : index
    %4 = vector.load %arg0[%c0_7, %c0_8] : memref<64x32xf32, #tpu.memory_space<vmem>>, vector<64x32xf32>
    %c0_9 = arith.constant 0 : index
    %c0_10 = arith.constant 0 : index
    %5 = vector.load %arg1[%c0_9, %c0_10] : memref<64x32xf32, #tpu.memory_space<vmem>>, vector<64x32xf32>
    %cst = arith.constant dense<0.000000e+00> : vector<64x256xf32>
    %6 = tpu.matmul %4, %0, %cst {dimension_numbers = #tpu.dot_dimension_numbers<[1], [0], [0], [1], [0, 0, 1, 1], [], []>} : vector<64x32xf32>, vector<32x256xf32>, vector<64x256xf32> -> vector<64x256xf32>
    %cst_11 = arith.constant dense<0.000000e+00> : vector<64x256xf32>
    %7 = tpu.matmul %5, %1, %cst_11 {dimension_numbers = #tpu.dot_dimension_numbers<[1], [0], [0], [1], [0, 0, 1, 1], [], []>} : vector<64x32xf32>, vector<32x256xf32>, vector<64x256xf32> -> vector<64x256xf32>
    %8 = arith.addf %6, %7 : vector<64x256xf32>
    %9 = vector.broadcast %3 : vector<1x256xf32> to vector<64x256xf32>
    %10 = arith.addf %8, %9 : vector<64x256xf32>
    %c0_12 = arith.constant 0 : index
    %c0_13 = arith.constant 0 : index
    %11 = vector.load %arg13[%c0_12, %c0_13] : memref<64x256xf32, #tpu.memory_space<vmem>>, vector<64x256xf32>
    tpu.vector_store %arg13[%c0_12, %c0_13], %10 {strides = array<i32>} : memref<64x256xf32, #tpu.memory_space<vmem>>, vector<64x256xf32>,
    %cst_14 = arith.constant 0.000000e+00 : f32
    %12 = vector.broadcast %cst_14 : f32 to vector<8x64xf32>
    %cst_15 = arith.constant 0.000000e+00 : f32
    %13 = vector.broadcast %cst_15 : f32 to vector<8x64xf32>
    %c0_16 = arith.constant 0 : index
    %c0_17 = arith.constant 0 : index
    %14 = vector.load %arg13[%c0_16, %c0_17] : memref<64x256xf32, #tpu.memory_space<vmem>>, vector<8x256xf32>
    %cst_18 = arith.constant dense<0.000000e+00> : vector<8x256xf32>
    %15 = tpu.matmul %12, %2, %cst_18 {dimension_numbers = #tpu.dot_dimension_numbers<[1], [0], [0], [1], [0, 0, 1, 1], [], []>} : vector<8x64xf32>, vector<64x256xf32>, vector<8x256xf32> -> vector<8x256xf32>
    %16 = arith.addf %14, %15 : vector<8x256xf32>
    %17 = vector.extract_strided_slice %16 {offsets = [0, 0], sizes = [8, 192], strides = [1, 1]} : vector<8x256xf32> to vector<8x192xf32>
    %18 = arith.negf %17 : vector<8x192xf32>
    %19 = math.exp %18 : vector<8x192xf32>
    %cst_19 = arith.constant 1.000000e+00 : f32
    %20 = vector.broadcast %cst_19 : f32 to vector<8x192xf32>
    %21 = arith.addf %20, %19 : vector<8x192xf32>
    %22 = arith.divf %20, %21 : vector<8x192xf32>
    %23 = vector.extract_strided_slice %16 {offsets = [0, 192], sizes = [8, 64], strides = [1, 1]} : vector<8x256xf32> to vector<8x64xf32>
    %24 = math.tanh %23 : vector<8x64xf32>
    %25 = vector.extract_strided_slice %22 {offsets = [0, 0], sizes = [8, 64], strides = [1, 1]} : vector<8x192xf32> to vector<8x64xf32>
    %26 = vector.extract_strided_slice %22 {offsets = [0, 64], sizes = [8, 64], strides = [1, 1]} : vector<8x192xf32> to vector<8x64xf32>
    %27 = vector.extract_strided_slice %22 {offsets = [0, 128], sizes = [8, 64], strides = [1, 1]} : vector<8x192xf32> to vector<8x64xf32>
    %28 = arith.mulf %26, %13 : vector<8x64xf32>
    %29 = arith.mulf %25, %24 : vector<8x64xf32>
    %30 = arith.addf %28, %29 : vector<8x64xf32>
    %31 = math.tanh %30 : vector<8x64xf32>
    %32 = arith.mulf %27, %31 : vector<8x64xf32>
    %33 = vector.extract_strided_slice %32 {offsets = [0, 0], sizes = [8, 32], strides = [1, 1]} : vector<8x64xf32> to vector<8x32xf32>
    %c0_20 = arith.constant 0 : index
    %c0_21 = arith.constant 0 : index
    %34 = vector.load %arg14[%c0_20, %c0_21] : memref<64x64xf32, #tpu.memory_space<vmem>>, vector<8x32xf32>
    tpu.vector_store %arg14[%c0_20, %c0_21], %33 {strides = array<i32>} : memref<64x64xf32, #tpu.memory_space<vmem>>, vector<8x32xf32>,
    %35 = vector.extract_strided_slice %32 {offsets = [0, 32], sizes = [8, 32], strides = [1, 1]} : vector<8x64xf32> to vector<8x32xf32>
    %c56 = arith.constant 56 : index
    %c32 = arith.constant 32 : index
    %36 = vector.load %arg14[%c56, %c32] : memref<64x64xf32, #tpu.memory_space<vmem>>, vector<8x32xf32>
    tpu.vector_store %arg14[%c56, %c32], %35 {strides = array<i32>} : memref<64x64xf32, #tpu.memory_space<vmem>>, vector<8x32xf32>,
    %37 = vector.extract_strided_slice %32 {offsets = [0, 0], sizes = [8, 32], strides = [1, 1]} : vector<8x64xf32> to vector<8x32xf32>
    %c56_22 = arith.constant 56 : index
    %c0_23 = arith.constant 0 : index
    %38 = vector.load %arg15[%c56_22, %c0_23] : memref<64x64xf32, #tpu.memory_space<vmem>>, vector<8x32xf32>
    tpu.vector_store %arg15[%c56_22, %c0_23], %37 {strides = array<i32>} : memref<64x64xf32, #tpu.memory_space<vmem>>, vector<8x32xf32>,
    %39 = vector.extract_strided_slice %32 {offsets = [0, 32], sizes = [8, 32], strides = [1, 1]} : vector<8x64xf32> to vector<8x32xf32>
    %c0_24 = arith.constant 0 : index
    %c32_25 = arith.constant 32 : index
    %40 = vector.load %arg15[%c0_24, %c32_25] : memref<64x64xf32, #tpu.memory_space<vmem>>, vector<8x32xf32>
    tpu.vector_store %arg15[%c0_24, %c32_25], %39 {strides = array<i32>} : memref<64x64xf32, #tpu.memory_space<vmem>>, vector<8x32xf32>,
    %c8 = arith.constant 8 : index
    %c0_26 = arith.constant 0 : index
    %41 = vector.load %arg13[%c8, %c0_26] : memref<64x256xf32, #tpu.memory_space<vmem>>, vector<8x256xf32>
    %cst_27 = arith.constant dense<0.000000e+00> : vector<8x256xf32>
    %42 = tpu.matmul %32, %2, %cst_27 {dimension_numbers = #tpu.dot_dimension_numbers<[1], [0], [0], [1], [0, 0, 1, 1], [], []>} : vector<8x64xf32>, vector<64x256xf32>, vector<8x256xf32> -> vector<8x256xf32>
    %43 = arith.addf %41, %42 : vector<8x256xf32>
    %44 = vector.extract_strided_slice %43 {offsets = [0, 0], sizes = [8, 192], strides = [1, 1]} : vector<8x256xf32> to vector<8x192xf32>
    %45 = arith.negf %44 : vector<8x192xf32>
    %46 = math.exp %45 : vector<8x192xf32>
    %cst_28 = arith.constant 1.000000e+00 : f32
    %47 = vector.broadcast %cst_28 : f32 to vector<8x192xf32>
    %48 = arith.addf %47, %46 : vector<8x192xf32>
    %49 = arith.divf %47, %48 : vector<8x192xf32>
    %50 = vector.extract_strided_slice %43 {offsets = [0, 192], sizes = [8, 64], strides = [1, 1]} : vector<8x256xf32> to vector<8x64xf32>
    %51 = math.tanh %50 : vector<8x64xf32>
    %52 = vector.extract_strided_slice %49 {offsets = [0, 0], sizes = [8, 64], strides = [1, 1]} : vector<8x192xf32> to vector<8x64xf32>
    %53 = vector.extract_strided_slice %49 {offsets = [0, 64], sizes = [8, 64], strides = [1, 1]} : vector<8x192xf32> to vector<8x64xf32>
    %54 = vector.extract_strided_slice %49 {offsets = [0, 128], sizes = [8, 64], strides = [1, 1]} : vector<8x192xf32> to vector<8x64xf32>
    %55 = arith.mulf %53, %30 : vector<8x64xf32>
    %56 = arith.mulf %52, %51 : vector<8x64xf32>
    %57 = arith.addf %55, %56 : vector<8x64xf32>
    %58 = math.tanh %57 : vector<8x64xf32>
    %59 = arith.mulf %54, %58 : vector<8x64xf32>
    %60 = vector.extract_strided_slice %59 {offsets = [0, 0], sizes = [8, 32], strides = [1, 1]} : vector<8x64xf32> to vector<8x32xf32>
    %c8_29 = arith.constant 8 : index
    %c0_30 = arith.constant 0 : index
    %61 = vector.load %arg14[%c8_29, %c0_30] : memref<64x64xf32, #tpu.memory_space<vmem>>, vector<8x32xf32>
    tpu.vector_store %arg14[%c8_29, %c0_30], %60 {strides = array<i32>} : memref<64x64xf32, #tpu.memory_space<vmem>>, vector<8x32xf32>,
    %62 = vector.extract_strided_slice %59 {offsets = [0, 32], sizes = [8, 32], strides = [1, 1]} : vector<8x64xf32> to vector<8x32xf32>
    %c48 = arith.constant 48 : index
    %c32_31 = arith.constant 32 : index
    %63 = vector.load %arg14[%c48, %c32_31] : memref<64x64xf32, #tpu.memory_space<vmem>>, vector<8x32xf32>
    tpu.vector_store %arg14[%c48, %c32_31], %62 {strides = array<i32>} : memref<64x64xf32, #tpu.memory_space<vmem>>, vector<8x32xf32>,
    %64 = vector.extract_strided_slice %59 {offsets = [0, 0], sizes = [8, 32], strides = [1, 1]} : vector<8x64xf32> to vector<8x32xf32>
    %c48_32 = arith.constant 48 : index
    %c0_33 = arith.constant 0 : index
    %65 = vector.load %arg15[%c48_32, %c0_33] : memref<64x64xf32, #tpu.memory_space<vmem>>, vector<8x32xf32>
    tpu.vector_store %arg15[%c48_32, %c0_33], %64 {strides = array<i32>} : memref<64x64xf32, #tpu.memory_space<vmem>>, vector<8x32xf32>,
    %66 = vector.extract_strided_slice %59 {offsets = [0, 32], sizes = [8, 32], strides = [1, 1]} : vector<8x64xf32> to vector<8x32xf32>
    %c8_34 = arith.constant 8 : index
    %c32_35 = arith.constant 32 : index
    %67 = vector.load %arg15[%c8_34, %c32_35] : memref<64x64xf32, #tpu.memory_space<vmem>>, vector<8x32xf32>
    tpu.vector_store %arg15[%c8_34, %c32_35], %66 {strides = array<i32>} : memref<64x64xf32, #tpu.memory_space<vmem>>, vector<8x32xf32>,
    %c16 = arith.constant 16 : index
    %c0_36 = arith.constant 0 : index
    %68 = vector.load %arg13[%c16, %c0_36] : memref<64x256xf32, #tpu.memory_space<vmem>>, vector<8x256xf32>
    %cst_37 = arith.constant dense<0.000000e+00> : vector<8x256xf32>
    %69 = tpu.matmul %59, %2, %cst_37 {dimension_numbers = #tpu.dot_dimension_numbers<[1], [0], [0], [1], [0, 0, 1, 1], [], []>} : vector<8x64xf32>, vector<64x256xf32>, vector<8x256xf32> -> vector<8x256xf32>
    %70 = arith.addf %68, %69 : vector<8x256xf32>
    %71 = vector.extract_strided_slice %70 {offsets = [0, 0], sizes = [8, 192], strides = [1, 1]} : vector<8x256xf32> to vector<8x192xf32>
    %72 = arith.negf %71 : vector<8x192xf32>
    %73 = math.exp %72 : vector<8x192xf32>
    %cst_38 = arith.constant 1.000000e+00 : f32
    %74 = vector.broadcast %cst_38 : f32 to vector<8x192xf32>
    %75 = arith.addf %74, %73 : vector<8x192xf32>
    %76 = arith.divf %74, %75 : vector<8x192xf32>
    %77 = vector.extract_strided_slice %70 {offsets = [0, 192], sizes = [8, 64], strides = [1, 1]} : vector<8x256xf32> to vector<8x64xf32>
    %78 = math.tanh %77 : vector<8x64xf32>
    %79 = vector.extract_strided_slice %76 {offsets = [0, 0], sizes = [8, 64], strides = [1, 1]} : vector<8x192xf32> to vector<8x64xf32>
    %80 = vector.extract_strided_slice %76 {offsets = [0, 64], sizes = [8, 64], strides = [1, 1]} : vector<8x192xf32> to vector<8x64xf32>
    %81 = vector.extract_strided_slice %76 {offsets = [0, 128], sizes = [8, 64], strides = [1, 1]} : vector<8x192xf32> to vector<8x64xf32>
    %82 = arith.mulf %80, %57 : vector<8x64xf32>
    %83 = arith.mulf %79, %78 : vector<8x64xf32>
    %84 = arith.addf %82, %83 : vector<8x64xf32>
    %85 = math.tanh %84 : vector<8x64xf32>
    %86 = arith.mulf %81, %85 : vector<8x64xf32>
    %87 = vector.extract_strided_slice %86 {offsets = [0, 0], sizes = [8, 32], strides = [1, 1]} : vector<8x64xf32> to vector<8x32xf32>
    %c16_39 = arith.constant 16 : index
    %c0_40 = arith.constant 0 : index
    %88 = vector.load %arg14[%c16_39, %c0_40] : memref<64x64xf32, #tpu.memory_space<vmem>>, vector<8x32xf32>
    tpu.vector_store %arg14[%c16_39, %c0_40], %87 {strides = array<i32>} : memref<64x64xf32, #tpu.memory_space<vmem>>, vector<8x32xf32>,
    %89 = vector.extract_strided_slice %86 {offsets = [0, 32], sizes = [8, 32], strides = [1, 1]} : vector<8x64xf32> to vector<8x32xf32>
    %c40 = arith.constant 40 : index
    %c32_41 = arith.constant 32 : index
    %90 = vector.load %arg14[%c40, %c32_41] : memref<64x64xf32, #tpu.memory_space<vmem>>, vector<8x32xf32>
    tpu.vector_store %arg14[%c40, %c32_41], %89 {strides = array<i32>} : memref<64x64xf32, #tpu.memory_space<vmem>>, vector<8x32xf32>,
    %91 = vector.extract_strided_slice %86 {offsets = [0, 0], sizes = [8, 32], strides = [1, 1]} : vector<8x64xf32> to vector<8x32xf32>
    %c40_42 = arith.constant 40 : index
    %c0_43 = arith.constant 0 : index
    %92 = vector.load %arg15[%c40_42, %c0_43] : memref<64x64xf32, #tpu.memory_space<vmem>>, vector<8x32xf32>
    tpu.vector_store %arg15[%c40_42, %c0_43], %91 {strides = array<i32>} : memref<64x64xf32, #tpu.memory_space<vmem>>, vector<8x32xf32>,
    %93 = vector.extract_strided_slice %86 {offsets = [0, 32], sizes = [8, 32], strides = [1, 1]} : vector<8x64xf32> to vector<8x32xf32>
    %c16_44 = arith.constant 16 : index
    %c32_45 = arith.constant 32 : index
    %94 = vector.load %arg15[%c16_44, %c32_45] : memref<64x64xf32, #tpu.memory_space<vmem>>, vector<8x32xf32>
    tpu.vector_store %arg15[%c16_44, %c32_45], %93 {strides = array<i32>} : memref<64x64xf32, #tpu.memory_space<vmem>>, vector<8x32xf32>,
    %c24 = arith.constant 24 : index
    %c0_46 = arith.constant 0 : index
    %95 = vector.load %arg13[%c24, %c0_46] : memref<64x256xf32, #tpu.memory_space<vmem>>, vector<8x256xf32>
    %cst_47 = arith.constant dense<0.000000e+00> : vector<8x256xf32>
    %96 = tpu.matmul %86, %2, %cst_47 {dimension_numbers = #tpu.dot_dimension_numbers<[1], [0], [0], [1], [0, 0, 1, 1], [], []>} : vector<8x64xf32>, vector<64x256xf32>, vector<8x256xf32> -> vector<8x256xf32>
    %97 = arith.addf %95, %96 : vector<8x256xf32>
    %98 = vector.extract_strided_slice %97 {offsets = [0, 0], sizes = [8, 192], strides = [1, 1]} : vector<8x256xf32> to vector<8x192xf32>
    %99 = arith.negf %98 : vector<8x192xf32>
    %100 = math.exp %99 : vector<8x192xf32>
    %cst_48 = arith.constant 1.000000e+00 : f32
    %101 = vector.broadcast %cst_48 : f32 to vector<8x192xf32>
    %102 = arith.addf %101, %100 : vector<8x192xf32>
    %103 = arith.divf %101, %102 : vector<8x192xf32>
    %104 = vector.extract_strided_slice %97 {offsets = [0, 192], sizes = [8, 64], strides = [1, 1]} : vector<8x256xf32> to vector<8x64xf32>
    %105 = math.tanh %104 : vector<8x64xf32>
    %106 = vector.extract_strided_slice %103 {offsets = [0, 0], sizes = [8, 64], strides = [1, 1]} : vector<8x192xf32> to vector<8x64xf32>
    %107 = vector.extract_strided_slice %103 {offsets = [0, 64], sizes = [8, 64], strides = [1, 1]} : vector<8x192xf32> to vector<8x64xf32>
    %108 = vector.extract_strided_slice %103 {offsets = [0, 128], sizes = [8, 64], strides = [1, 1]} : vector<8x192xf32> to vector<8x64xf32>
    %109 = arith.mulf %107, %84 : vector<8x64xf32>
    %110 = arith.mulf %106, %105 : vector<8x64xf32>
    %111 = arith.addf %109, %110 : vector<8x64xf32>
    %112 = math.tanh %111 : vector<8x64xf32>
    %113 = arith.mulf %108, %112 : vector<8x64xf32>
    %114 = vector.extract_strided_slice %113 {offsets = [0, 0], sizes = [8, 32], strides = [1, 1]} : vector<8x64xf32> to vector<8x32xf32>
    %c24_49 = arith.constant 24 : index
    %c0_50 = arith.constant 0 : index
    %115 = vector.load %arg14[%c24_49, %c0_50] : memref<64x64xf32, #tpu.memory_space<vmem>>, vector<8x32xf32>
    tpu.vector_store %arg14[%c24_49, %c0_50], %114 {strides = array<i32>} : memref<64x64xf32, #tpu.memory_space<vmem>>, vector<8x32xf32>,
    %116 = vector.extract_strided_slice %113 {offsets = [0, 32], sizes = [8, 32], strides = [1, 1]} : vector<8x64xf32> to vector<8x32xf32>
    %c32_51 = arith.constant 32 : index
    %c32_52 = arith.constant 32 : index
    %117 = vector.load %arg14[%c32_51, %c32_52] : memref<64x64xf32, #tpu.memory_space<vmem>>, vector<8x32xf32>
    tpu.vector_store %arg14[%c32_51, %c32_52], %116 {strides = array<i32>} : memref<64x64xf32, #tpu.memory_space<vmem>>, vector<8x32xf32>,
    %118 = vector.extract_strided_slice %113 {offsets = [0, 0], sizes = [8, 32], strides = [1, 1]} : vector<8x64xf32> to vector<8x32xf32>
    %c32_53 = arith.constant 32 : index
    %c0_54 = arith.constant 0 : index
    %119 = vector.load %arg15[%c32_53, %c0_54] : memref<64x64xf32, #tpu.memory_space<vmem>>, vector<8x32xf32>
    tpu.vector_store %arg15[%c32_53, %c0_54], %118 {strides = array<i32>} : memref<64x64xf32, #tpu.memory_space<vmem>>, vector<8x32xf32>,
    %120 = vector.extract_strided_slice %113 {offsets = [0, 32], sizes = [8, 32], strides = [1, 1]} : vector<8x64xf32> to vector<8x32xf32>
    %c24_55 = arith.constant 24 : index
    %c32_56 = arith.constant 32 : index
    %121 = vector.load %arg15[%c24_55, %c32_56] : memref<64x64xf32, #tpu.memory_space<vmem>>, vector<8x32xf32>
    tpu.vector_store %arg15[%c24_55, %c32_56], %120 {strides = array<i32>} : memref<64x64xf32, #tpu.memory_space<vmem>>, vector<8x32xf32>,
    %c32_57 = arith.constant 32 : index
    %c0_58 = arith.constant 0 : index
    %122 = vector.load %arg13[%c32_57, %c0_58] : memref<64x256xf32, #tpu.memory_space<vmem>>, vector<8x256xf32>
    %cst_59 = arith.constant dense<0.000000e+00> : vector<8x256xf32>
    %123 = tpu.matmul %113, %2, %cst_59 {dimension_numbers = #tpu.dot_dimension_numbers<[1], [0], [0], [1], [0, 0, 1, 1], [], []>} : vector<8x64xf32>, vector<64x256xf32>, vector<8x256xf32> -> vector<8x256xf32>
    %124 = arith.addf %122, %123 : vector<8x256xf32>
    %125 = vector.extract_strided_slice %124 {offsets = [0, 0], sizes = [8, 192], strides = [1, 1]} : vector<8x256xf32> to vector<8x192xf32>
    %126 = arith.negf %125 : vector<8x192xf32>
    %127 = math.exp %126 : vector<8x192xf32>
    %cst_60 = arith.constant 1.000000e+00 : f32
    %128 = vector.broadcast %cst_60 : f32 to vector<8x192xf32>
    %129 = arith.addf %128, %127 : vector<8x192xf32>
    %130 = arith.divf %128, %129 : vector<8x192xf32>
    %131 = vector.extract_strided_slice %124 {offsets = [0, 192], sizes = [8, 64], strides = [1, 1]} : vector<8x256xf32> to vector<8x64xf32>
    %132 = math.tanh %131 : vector<8x64xf32>
    %133 = vector.extract_strided_slice %130 {offsets = [0, 0], sizes = [8, 64], strides = [1, 1]} : vector<8x192xf32> to vector<8x64xf32>
    %134 = vector.extract_strided_slice %130 {offsets = [0, 64], sizes = [8, 64], strides = [1, 1]} : vector<8x192xf32> to vector<8x64xf32>
    %135 = vector.extract_strided_slice %130 {offsets = [0, 128], sizes = [8, 64], strides = [1, 1]} : vector<8x192xf32> to vector<8x64xf32>
    %136 = arith.mulf %134, %111 : vector<8x64xf32>
    %137 = arith.mulf %133, %132 : vector<8x64xf32>
    %138 = arith.addf %136, %137 : vector<8x64xf32>
    %139 = math.tanh %138 : vector<8x64xf32>
    %140 = arith.mulf %135, %139 : vector<8x64xf32>
    %141 = vector.extract_strided_slice %140 {offsets = [0, 0], sizes = [8, 32], strides = [1, 1]} : vector<8x64xf32> to vector<8x32xf32>
    %c32_61 = arith.constant 32 : index
    %c0_62 = arith.constant 0 : index
    %142 = vector.load %arg14[%c32_61, %c0_62] : memref<64x64xf32, #tpu.memory_space<vmem>>, vector<8x32xf32>
    tpu.vector_store %arg14[%c32_61, %c0_62], %141 {strides = array<i32>} : memref<64x64xf32, #tpu.memory_space<vmem>>, vector<8x32xf32>,
    %143 = vector.extract_strided_slice %140 {offsets = [0, 32], sizes = [8, 32], strides = [1, 1]} : vector<8x64xf32> to vector<8x32xf32>
    %c24_63 = arith.constant 24 : index
    %c32_64 = arith.constant 32 : index
    %144 = vector.load %arg14[%c24_63, %c32_64] : memref<64x64xf32, #tpu.memory_space<vmem>>, vector<8x32xf32>
    tpu.vector_store %arg14[%c24_63, %c32_64], %143 {strides = array<i32>} : memref<64x64xf32, #tpu.memory_space<vmem>>, vector<8x32xf32>,
    %145 = vector.extract_strided_slice %140 {offsets = [0, 0], sizes = [8, 32], strides = [1, 1]} : vector<8x64xf32> to vector<8x32xf32>
    %c24_65 = arith.constant 24 : index
    %c0_66 = arith.constant 0 : index
    %146 = vector.load %arg15[%c24_65, %c0_66] : memref<64x64xf32, #tpu.memory_space<vmem>>, vector<8x32xf32>
    tpu.vector_store %arg15[%c24_65, %c0_66], %145 {strides = array<i32>} : memref<64x64xf32, #tpu.memory_space<vmem>>, vector<8x32xf32>,
    %147 = vector.extract_strided_slice %140 {offsets = [0, 32], sizes = [8, 32], strides = [1, 1]} : vector<8x64xf32> to vector<8x32xf32>
    %c32_67 = arith.constant 32 : index
    %c32_68 = arith.constant 32 : index
    %148 = vector.load %arg15[%c32_67, %c32_68] : memref<64x64xf32, #tpu.memory_space<vmem>>, vector<8x32xf32>
    tpu.vector_store %arg15[%c32_67, %c32_68], %147 {strides = array<i32>} : memref<64x64xf32, #tpu.memory_space<vmem>>, vector<8x32xf32>,
    %c40_69 = arith.constant 40 : index
    %c0_70 = arith.constant 0 : index
    %149 = vector.load %arg13[%c40_69, %c0_70] : memref<64x256xf32, #tpu.memory_space<vmem>>, vector<8x256xf32>
    %cst_71 = arith.constant dense<0.000000e+00> : vector<8x256xf32>
    %150 = tpu.matmul %140, %2, %cst_71 {dimension_numbers = #tpu.dot_dimension_numbers<[1], [0], [0], [1], [0, 0, 1, 1], [], []>} : vector<8x64xf32>, vector<64x256xf32>, vector<8x256xf32> -> vector<8x256xf32>
    %151 = arith.addf %149, %150 : vector<8x256xf32>
    %152 = vector.extract_strided_slice %151 {offsets = [0, 0], sizes = [8, 192], strides = [1, 1]} : vector<8x256xf32> to vector<8x192xf32>
    %153 = arith.negf %152 : vector<8x192xf32>
    %154 = math.exp %153 : vector<8x192xf32>
    %cst_72 = arith.constant 1.000000e+00 : f32
    %155 = vector.broadcast %cst_72 : f32 to vector<8x192xf32>
    %156 = arith.addf %155, %154 : vector<8x192xf32>
    %157 = arith.divf %155, %156 : vector<8x192xf32>
    %158 = vector.extract_strided_slice %151 {offsets = [0, 192], sizes = [8, 64], strides = [1, 1]} : vector<8x256xf32> to vector<8x64xf32>
    %159 = math.tanh %158 : vector<8x64xf32>
    %160 = vector.extract_strided_slice %157 {offsets = [0, 0], sizes = [8, 64], strides = [1, 1]} : vector<8x192xf32> to vector<8x64xf32>
    %161 = vector.extract_strided_slice %157 {offsets = [0, 64], sizes = [8, 64], strides = [1, 1]} : vector<8x192xf32> to vector<8x64xf32>
    %162 = vector.extract_strided_slice %157 {offsets = [0, 128], sizes = [8, 64], strides = [1, 1]} : vector<8x192xf32> to vector<8x64xf32>
    %163 = arith.mulf %161, %138 : vector<8x64xf32>
    %164 = arith.mulf %160, %159 : vector<8x64xf32>
    %165 = arith.addf %163, %164 : vector<8x64xf32>
    %166 = math.tanh %165 : vector<8x64xf32>
    %167 = arith.mulf %162, %166 : vector<8x64xf32>
    %168 = vector.extract_strided_slice %167 {offsets = [0, 0], sizes = [8, 32], strides = [1, 1]} : vector<8x64xf32> to vector<8x32xf32>
    %c40_73 = arith.constant 40 : index
    %c0_74 = arith.constant 0 : index
    %169 = vector.load %arg14[%c40_73, %c0_74] : memref<64x64xf32, #tpu.memory_space<vmem>>, vector<8x32xf32>
    tpu.vector_store %arg14[%c40_73, %c0_74], %168 {strides = array<i32>} : memref<64x64xf32, #tpu.memory_space<vmem>>, vector<8x32xf32>,
    %170 = vector.extract_strided_slice %167 {offsets = [0, 32], sizes = [8, 32], strides = [1, 1]} : vector<8x64xf32> to vector<8x32xf32>
    %c16_75 = arith.constant 16 : index
    %c32_76 = arith.constant 32 : index
    %171 = vector.load %arg14[%c16_75, %c32_76] : memref<64x64xf32, #tpu.memory_space<vmem>>, vector<8x32xf32>
    tpu.vector_store %arg14[%c16_75, %c32_76], %170 {strides = array<i32>} : memref<64x64xf32, #tpu.memory_space<vmem>>, vector<8x32xf32>,
    %172 = vector.extract_strided_slice %167 {offsets = [0, 0], sizes = [8, 32], strides = [1, 1]} : vector<8x64xf32> to vector<8x32xf32>
    %c16_77 = arith.constant 16 : index
    %c0_78 = arith.constant 0 : index
    %173 = vector.load %arg15[%c16_77, %c0_78] : memref<64x64xf32, #tpu.memory_space<vmem>>, vector<8x32xf32>
    tpu.vector_store %arg15[%c16_77, %c0_78], %172 {strides = array<i32>} : memref<64x64xf32, #tpu.memory_space<vmem>>, vector<8x32xf32>,
    %174 = vector.extract_strided_slice %167 {offsets = [0, 32], sizes = [8, 32], strides = [1, 1]} : vector<8x64xf32> to vector<8x32xf32>
    %c40_79 = arith.constant 40 : index
    %c32_80 = arith.constant 32 : index
    %175 = vector.load %arg15[%c40_79, %c32_80] : memref<64x64xf32, #tpu.memory_space<vmem>>, vector<8x32xf32>
    tpu.vector_store %arg15[%c40_79, %c32_80], %174 {strides = array<i32>} : memref<64x64xf32, #tpu.memory_space<vmem>>, vector<8x32xf32>,
    %c48_81 = arith.constant 48 : index
    %c0_82 = arith.constant 0 : index
    %176 = vector.load %arg13[%c48_81, %c0_82] : memref<64x256xf32, #tpu.memory_space<vmem>>, vector<8x256xf32>
    %cst_83 = arith.constant dense<0.000000e+00> : vector<8x256xf32>
    %177 = tpu.matmul %167, %2, %cst_83 {dimension_numbers = #tpu.dot_dimension_numbers<[1], [0], [0], [1], [0, 0, 1, 1], [], []>} : vector<8x64xf32>, vector<64x256xf32>, vector<8x256xf32> -> vector<8x256xf32>
    %178 = arith.addf %176, %177 : vector<8x256xf32>
    %179 = vector.extract_strided_slice %178 {offsets = [0, 0], sizes = [8, 192], strides = [1, 1]} : vector<8x256xf32> to vector<8x192xf32>
    %180 = arith.negf %179 : vector<8x192xf32>
    %181 = math.exp %180 : vector<8x192xf32>
    %cst_84 = arith.constant 1.000000e+00 : f32
    %182 = vector.broadcast %cst_84 : f32 to vector<8x192xf32>
    %183 = arith.addf %182, %181 : vector<8x192xf32>
    %184 = arith.divf %182, %183 : vector<8x192xf32>
    %185 = vector.extract_strided_slice %178 {offsets = [0, 192], sizes = [8, 64], strides = [1, 1]} : vector<8x256xf32> to vector<8x64xf32>
    %186 = math.tanh %185 : vector<8x64xf32>
    %187 = vector.extract_strided_slice %184 {offsets = [0, 0], sizes = [8, 64], strides = [1, 1]} : vector<8x192xf32> to vector<8x64xf32>
    %188 = vector.extract_strided_slice %184 {offsets = [0, 64], sizes = [8, 64], strides = [1, 1]} : vector<8x192xf32> to vector<8x64xf32>
    %189 = vector.extract_strided_slice %184 {offsets = [0, 128], sizes = [8, 64], strides = [1, 1]} : vector<8x192xf32> to vector<8x64xf32>
    %190 = arith.mulf %188, %165 : vector<8x64xf32>
    %191 = arith.mulf %187, %186 : vector<8x64xf32>
    %192 = arith.addf %190, %191 : vector<8x64xf32>
    %193 = math.tanh %192 : vector<8x64xf32>
    %194 = arith.mulf %189, %193 : vector<8x64xf32>
    %195 = vector.extract_strided_slice %194 {offsets = [0, 0], sizes = [8, 32], strides = [1, 1]} : vector<8x64xf32> to vector<8x32xf32>
    %c48_85 = arith.constant 48 : index
    %c0_86 = arith.constant 0 : index
    %196 = vector.load %arg14[%c48_85, %c0_86] : memref<64x64xf32, #tpu.memory_space<vmem>>, vector<8x32xf32>
    tpu.vector_store %arg14[%c48_85, %c0_86], %195 {strides = array<i32>} : memref<64x64xf32, #tpu.memory_space<vmem>>, vector<8x32xf32>,
    %197 = vector.extract_strided_slice %194 {offsets = [0, 32], sizes = [8, 32], strides = [1, 1]} : vector<8x64xf32> to vector<8x32xf32>
    %c8_87 = arith.constant 8 : index
    %c32_88 = arith.constant 32 : index
    %198 = vector.load %arg14[%c8_87, %c32_88] : memref<64x64xf32, #tpu.memory_space<vmem>>, vector<8x32xf32>
    tpu.vector_store %arg14[%c8_87, %c32_88], %197 {strides = array<i32>} : memref<64x64xf32, #tpu.memory_space<vmem>>, vector<8x32xf32>,
    %199 = vector.extract_strided_slice %194 {offsets = [0, 0], sizes = [8, 32], strides = [1, 1]} : vector<8x64xf32> to vector<8x32xf32>
    %c8_89 = arith.constant 8 : index
    %c0_90 = arith.constant 0 : index
    %200 = vector.load %arg15[%c8_89, %c0_90] : memref<64x64xf32, #tpu.memory_space<vmem>>, vector<8x32xf32>
    tpu.vector_store %arg15[%c8_89, %c0_90], %199 {strides = array<i32>} : memref<64x64xf32, #tpu.memory_space<vmem>>, vector<8x32xf32>,
    %201 = vector.extract_strided_slice %194 {offsets = [0, 32], sizes = [8, 32], strides = [1, 1]} : vector<8x64xf32> to vector<8x32xf32>
    %c48_91 = arith.constant 48 : index
    %c32_92 = arith.constant 32 : index
    %202 = vector.load %arg15[%c48_91, %c32_92] : memref<64x64xf32, #tpu.memory_space<vmem>>, vector<8x32xf32>
    tpu.vector_store %arg15[%c48_91, %c32_92], %201 {strides = array<i32>} : memref<64x64xf32, #tpu.memory_space<vmem>>, vector<8x32xf32>,
    %c56_93 = arith.constant 56 : index
    %c0_94 = arith.constant 0 : index
    %203 = vector.load %arg13[%c56_93, %c0_94] : memref<64x256xf32, #tpu.memory_space<vmem>>, vector<8x256xf32>
    %cst_95 = arith.constant dense<0.000000e+00> : vector<8x256xf32>
    %204 = tpu.matmul %194, %2, %cst_95 {dimension_numbers = #tpu.dot_dimension_numbers<[1], [0], [0], [1], [0, 0, 1, 1], [], []>} : vector<8x64xf32>, vector<64x256xf32>, vector<8x256xf32> -> vector<8x256xf32>
    %205 = arith.addf %203, %204 : vector<8x256xf32>
    %206 = vector.extract_strided_slice %205 {offsets = [0, 0], sizes = [8, 192], strides = [1, 1]} : vector<8x256xf32> to vector<8x192xf32>
    %207 = arith.negf %206 : vector<8x192xf32>
    %208 = math.exp %207 : vector<8x192xf32>
    %cst_96 = arith.constant 1.000000e+00 : f32
    %209 = vector.broadcast %cst_96 : f32 to vector<8x192xf32>
    %210 = arith.addf %209, %208 : vector<8x192xf32>
    %211 = arith.divf %209, %210 : vector<8x192xf32>
    %212 = vector.extract_strided_slice %205 {offsets = [0, 192], sizes = [8, 64], strides = [1, 1]} : vector<8x256xf32> to vector<8x64xf32>
    %213 = math.tanh %212 : vector<8x64xf32>
    %214 = vector.extract_strided_slice %211 {offsets = [0, 0], sizes = [8, 64], strides = [1, 1]} : vector<8x192xf32> to vector<8x64xf32>
    %215 = vector.extract_strided_slice %211 {offsets = [0, 64], sizes = [8, 64], strides = [1, 1]} : vector<8x192xf32> to vector<8x64xf32>
    %216 = vector.extract_strided_slice %211 {offsets = [0, 128], sizes = [8, 64], strides = [1, 1]} : vector<8x192xf32> to vector<8x64xf32>
    %217 = arith.mulf %215, %192 : vector<8x64xf32>
    %218 = arith.mulf %214, %213 : vector<8x64xf32>
    %219 = arith.addf %217, %218 : vector<8x64xf32>
    %220 = math.tanh %219 : vector<8x64xf32>
    %221 = arith.mulf %216, %220 : vector<8x64xf32>
    %222 = vector.extract_strided_slice %221 {offsets = [0, 0], sizes = [8, 32], strides = [1, 1]} : vector<8x64xf32> to vector<8x32xf32>
    %c56_97 = arith.constant 56 : index
    %c0_98 = arith.constant 0 : index
    %223 = vector.load %arg14[%c56_97, %c0_98] : memref<64x64xf32, #tpu.memory_space<vmem>>, vector<8x32xf32>
    tpu.vector_store %arg14[%c56_97, %c0_98], %222 {strides = array<i32>} : memref<64x64xf32, #tpu.memory_space<vmem>>, vector<8x32xf32>,
    %224 = vector.extract_strided_slice %221 {offsets = [0, 32], sizes = [8, 32], strides = [1, 1]} : vector<8x64xf32> to vector<8x32xf32>
    %c0_99 = arith.constant 0 : index
    %c32_100 = arith.constant 32 : index
    %225 = vector.load %arg14[%c0_99, %c32_100] : memref<64x64xf32, #tpu.memory_space<vmem>>, vector<8x32xf32>
    tpu.vector_store %arg14[%c0_99, %c32_100], %224 {strides = array<i32>} : memref<64x64xf32, #tpu.memory_space<vmem>>, vector<8x32xf32>,
    %226 = vector.extract_strided_slice %221 {offsets = [0, 0], sizes = [8, 32], strides = [1, 1]} : vector<8x64xf32> to vector<8x32xf32>
    %c0_101 = arith.constant 0 : index
    %c0_102 = arith.constant 0 : index
    %227 = vector.load %arg15[%c0_101, %c0_102] : memref<64x64xf32, #tpu.memory_space<vmem>>, vector<8x32xf32>
    tpu.vector_store %arg15[%c0_101, %c0_102], %226 {strides = array<i32>} : memref<64x64xf32, #tpu.memory_space<vmem>>, vector<8x32xf32>,
    %228 = vector.extract_strided_slice %221 {offsets = [0, 32], sizes = [8, 32], strides = [1, 1]} : vector<8x64xf32> to vector<8x32xf32>
    %c56_103 = arith.constant 56 : index
    %c32_104 = arith.constant 32 : index
    %229 = vector.load %arg15[%c56_103, %c32_104] : memref<64x64xf32, #tpu.memory_space<vmem>>, vector<8x32xf32>
    tpu.vector_store %arg15[%c56_103, %c32_104], %228 {strides = array<i32>} : memref<64x64xf32, #tpu.memory_space<vmem>>, vector<8x32xf32>,
    %230 = vector.extract_strided_slice %221 {offsets = [0, 0], sizes = [8, 32], strides = [1, 1]} : vector<8x64xf32> to vector<8x32xf32>
    %c0_105 = arith.constant 0 : index
    %c0_106 = arith.constant 0 : index
    %c0_107 = arith.constant 0 : index
    %231 = vector.load %arg11[%c0_105, %c0_106, %c0_107] : memref<4x8x32xf32, #tpu.memory_space<vmem>>, vector<1x8x32xf32>
    %232 = vector.shape_cast %231 : vector<1x8x32xf32> to vector<8x32xf32>
    %233 = vector.shape_cast %230 : vector<8x32xf32> to vector<1x8x32xf32>
    tpu.vector_store %arg11[%c0_105, %c0_106, %c0_107], %233 {strides = array<i32>} : memref<4x8x32xf32, #tpu.memory_space<vmem>>, vector<1x8x32xf32>,
    %234 = vector.extract_strided_slice %221 {offsets = [0, 32], sizes = [8, 32], strides = [1, 1]} : vector<8x64xf32> to vector<8x32xf32>
    %c1 = arith.constant 1 : index
    %c0_108 = arith.constant 0 : index
    %c0_109 = arith.constant 0 : index
    %235 = vector.load %arg11[%c1, %c0_108, %c0_109] : memref<4x8x32xf32, #tpu.memory_space<vmem>>, vector<1x8x32xf32>
    %236 = vector.shape_cast %235 : vector<1x8x32xf32> to vector<8x32xf32>
    %237 = vector.shape_cast %234 : vector<8x32xf32> to vector<1x8x32xf32>
    tpu.vector_store %arg11[%c1, %c0_108, %c0_109], %237 {strides = array<i32>} : memref<4x8x32xf32, #tpu.memory_space<vmem>>, vector<1x8x32xf32>,
    %238 = vector.extract_strided_slice %219 {offsets = [0, 0], sizes = [8, 32], strides = [1, 1]} : vector<8x64xf32> to vector<8x32xf32>
    %c0_110 = arith.constant 0 : index
    %c0_111 = arith.constant 0 : index
    %c0_112 = arith.constant 0 : index
    %239 = vector.load %arg12[%c0_110, %c0_111, %c0_112] : memref<4x8x32xf32, #tpu.memory_space<vmem>>, vector<1x8x32xf32>
    %240 = vector.shape_cast %239 : vector<1x8x32xf32> to vector<8x32xf32>
    %241 = vector.shape_cast %238 : vector<8x32xf32> to vector<1x8x32xf32>
    tpu.vector_store %arg12[%c0_110, %c0_111, %c0_112], %241 {strides = array<i32>} : memref<4x8x32xf32, #tpu.memory_space<vmem>>, vector<1x8x32xf32>,
    %242 = vector.extract_strided_slice %219 {offsets = [0, 32], sizes = [8, 32], strides = [1, 1]} : vector<8x64xf32> to vector<8x32xf32>
    %c1_113 = arith.constant 1 : index
    %c0_114 = arith.constant 0 : index
    %c0_115 = arith.constant 0 : index
    %243 = vector.load %arg12[%c1_113, %c0_114, %c0_115] : memref<4x8x32xf32, #tpu.memory_space<vmem>>, vector<1x8x32xf32>
    %244 = vector.shape_cast %243 : vector<1x8x32xf32> to vector<8x32xf32>
    %245 = vector.shape_cast %242 : vector<8x32xf32> to vector<1x8x32xf32>
    tpu.vector_store %arg12[%c1_113, %c0_114, %c0_115], %245 {strides = array<i32>} : memref<4x8x32xf32, #tpu.memory_space<vmem>>, vector<1x8x32xf32>,
    %c0_116 = arith.constant 0 : index
    %c0_117 = arith.constant 0 : index
    %246 = vector.load %arg6[%c0_116, %c0_117] : memref<64x256xf32, #tpu.memory_space<vmem>>, vector<64x256xf32>
    %c0_118 = arith.constant 0 : index
    %c0_119 = arith.constant 0 : index
    %247 = vector.load %arg7[%c0_118, %c0_119] : memref<64x256xf32, #tpu.memory_space<vmem>>, vector<64x256xf32>
    %c0_120 = arith.constant 0 : index
    %c0_121 = arith.constant 0 : index
    %248 = vector.load %arg8[%c0_120, %c0_121] : memref<64x256xf32, #tpu.memory_space<vmem>>, vector<64x256xf32>
    %c0_122 = arith.constant 0 : index
    %c0_123 = arith.constant 0 : index
    %249 = vector.load %arg9[%c0_122, %c0_123] : memref<1x256xf32, #tpu.memory_space<vmem>>, vector<1x256xf32>
    %c0_124 = arith.constant 0 : index
    %c0_125 = arith.constant 0 : index
    %250 = vector.load %arg14[%c0_124, %c0_125] : memref<64x64xf32, #tpu.memory_space<vmem>>, vector<64x64xf32>
    %c0_126 = arith.constant 0 : index
    %c0_127 = arith.constant 0 : index
    %251 = vector.load %arg15[%c0_126, %c0_127] : memref<64x64xf32, #tpu.memory_space<vmem>>, vector<64x64xf32>
    %cst_128 = arith.constant dense<0.000000e+00> : vector<64x256xf32>
    %252 = tpu.matmul %250, %246, %cst_128 {dimension_numbers = #tpu.dot_dimension_numbers<[1], [0], [0], [1], [0, 0, 1, 1], [], []>} : vector<64x64xf32>, vector<64x256xf32>, vector<64x256xf32> -> vector<64x256xf32>
    %cst_129 = arith.constant dense<0.000000e+00> : vector<64x256xf32>
    %253 = tpu.matmul %251, %247, %cst_129 {dimension_numbers = #tpu.dot_dimension_numbers<[1], [0], [0], [1], [0, 0, 1, 1], [], []>} : vector<64x64xf32>, vector<64x256xf32>, vector<64x256xf32> -> vector<64x256xf32>
    %254 = arith.addf %252, %253 : vector<64x256xf32>
    %255 = vector.broadcast %249 : vector<1x256xf32> to vector<64x256xf32>
    %256 = arith.addf %254, %255 : vector<64x256xf32>
    %c0_130 = arith.constant 0 : index
    %c0_131 = arith.constant 0 : index
    %257 = vector.load %arg13[%c0_130, %c0_131] : memref<64x256xf32, #tpu.memory_space<vmem>>, vector<64x256xf32>
    tpu.vector_store %arg13[%c0_130, %c0_131], %256 {strides = array<i32>} : memref<64x256xf32, #tpu.memory_space<vmem>>, vector<64x256xf32>,
    %cst_132 = arith.constant 0.000000e+00 : f32
    %258 = vector.broadcast %cst_132 : f32 to vector<8x64xf32>
    %cst_133 = arith.constant 0.000000e+00 : f32
    %259 = vector.broadcast %cst_133 : f32 to vector<8x64xf32>
    %c0_134 = arith.constant 0 : index
    %c0_135 = arith.constant 0 : index
    %260 = vector.load %arg13[%c0_134, %c0_135] : memref<64x256xf32, #tpu.memory_space<vmem>>, vector<8x256xf32>
    %cst_136 = arith.constant dense<0.000000e+00> : vector<8x256xf32>
    %261 = tpu.matmul %258, %248, %cst_136 {dimension_numbers = #tpu.dot_dimension_numbers<[1], [0], [0], [1], [0, 0, 1, 1], [], []>} : vector<8x64xf32>, vector<64x256xf32>, vector<8x256xf32> -> vector<8x256xf32>
    %262 = arith.addf %260, %261 : vector<8x256xf32>
    %263 = vector.extract_strided_slice %262 {offsets = [0, 0], sizes = [8, 192], strides = [1, 1]} : vector<8x256xf32> to vector<8x192xf32>
    %264 = arith.negf %263 : vector<8x192xf32>
    %265 = math.exp %264 : vector<8x192xf32>
    %cst_137 = arith.constant 1.000000e+00 : f32
    %266 = vector.broadcast %cst_137 : f32 to vector<8x192xf32>
    %267 = arith.addf %266, %265 : vector<8x192xf32>
    %268 = arith.divf %266, %267 : vector<8x192xf32>
    %269 = vector.extract_strided_slice %262 {offsets = [0, 192], sizes = [8, 64], strides = [1, 1]} : vector<8x256xf32> to vector<8x64xf32>
    %270 = math.tanh %269 : vector<8x64xf32>
    %271 = vector.extract_strided_slice %268 {offsets = [0, 0], sizes = [8, 64], strides = [1, 1]} : vector<8x192xf32> to vector<8x64xf32>
    %272 = vector.extract_strided_slice %268 {offsets = [0, 64], sizes = [8, 64], strides = [1, 1]} : vector<8x192xf32> to vector<8x64xf32>
    %273 = vector.extract_strided_slice %268 {offsets = [0, 128], sizes = [8, 64], strides = [1, 1]} : vector<8x192xf32> to vector<8x64xf32>
    %274 = arith.mulf %272, %259 : vector<8x64xf32>
    %275 = arith.mulf %271, %270 : vector<8x64xf32>
    %276 = arith.addf %274, %275 : vector<8x64xf32>
    %277 = math.tanh %276 : vector<8x64xf32>
    %278 = arith.mulf %273, %277 : vector<8x64xf32>
    %279 = vector.extract_strided_slice %278 {offsets = [0, 0], sizes = [8, 32], strides = [1, 1]} : vector<8x64xf32> to vector<8x32xf32>
    %c0_138 = arith.constant 0 : index
    %c0_139 = arith.constant 0 : index
    %280 = vector.load %arg14[%c0_138, %c0_139] : memref<64x64xf32, #tpu.memory_space<vmem>>, vector<8x32xf32>
    tpu.vector_store %arg14[%c0_138, %c0_139], %279 {strides = array<i32>} : memref<64x64xf32, #tpu.memory_space<vmem>>, vector<8x32xf32>,
    %281 = vector.extract_strided_slice %278 {offsets = [0, 32], sizes = [8, 32], strides = [1, 1]} : vector<8x64xf32> to vector<8x32xf32>
    %c56_140 = arith.constant 56 : index
    %c32_141 = arith.constant 32 : index
    %282 = vector.load %arg14[%c56_140, %c32_141] : memref<64x64xf32, #tpu.memory_space<vmem>>, vector<8x32xf32>
    tpu.vector_store %arg14[%c56_140, %c32_141], %281 {strides = array<i32>} : memref<64x64xf32, #tpu.memory_space<vmem>>, vector<8x32xf32>,
    %c8_142 = arith.constant 8 : index
    %c0_143 = arith.constant 0 : index
    %283 = vector.load %arg13[%c8_142, %c0_143] : memref<64x256xf32, #tpu.memory_space<vmem>>, vector<8x256xf32>
    %cst_144 = arith.constant dense<0.000000e+00> : vector<8x256xf32>
    %284 = tpu.matmul %278, %248, %cst_144 {dimension_numbers = #tpu.dot_dimension_numbers<[1], [0], [0], [1], [0, 0, 1, 1], [], []>} : vector<8x64xf32>, vector<64x256xf32>, vector<8x256xf32> -> vector<8x256xf32>
    %285 = arith.addf %283, %284 : vector<8x256xf32>
    %286 = vector.extract_strided_slice %285 {offsets = [0, 0], sizes = [8, 192], strides = [1, 1]} : vector<8x256xf32> to vector<8x192xf32>
    %287 = arith.negf %286 : vector<8x192xf32>
    %288 = math.exp %287 : vector<8x192xf32>
    %cst_145 = arith.constant 1.000000e+00 : f32
    %289 = vector.broadcast %cst_145 : f32 to vector<8x192xf32>
    %290 = arith.addf %289, %288 : vector<8x192xf32>
    %291 = arith.divf %289, %290 : vector<8x192xf32>
    %292 = vector.extract_strided_slice %285 {offsets = [0, 192], sizes = [8, 64], strides = [1, 1]} : vector<8x256xf32> to vector<8x64xf32>
    %293 = math.tanh %292 : vector<8x64xf32>
    %294 = vector.extract_strided_slice %291 {offsets = [0, 0], sizes = [8, 64], strides = [1, 1]} : vector<8x192xf32> to vector<8x64xf32>
    %295 = vector.extract_strided_slice %291 {offsets = [0, 64], sizes = [8, 64], strides = [1, 1]} : vector<8x192xf32> to vector<8x64xf32>
    %296 = vector.extract_strided_slice %291 {offsets = [0, 128], sizes = [8, 64], strides = [1, 1]} : vector<8x192xf32> to vector<8x64xf32>
    %297 = arith.mulf %295, %276 : vector<8x64xf32>
    %298 = arith.mulf %294, %293 : vector<8x64xf32>
    %299 = arith.addf %297, %298 : vector<8x64xf32>
    %300 = math.tanh %299 : vector<8x64xf32>
    %301 = arith.mulf %296, %300 : vector<8x64xf32>
    %302 = vector.extract_strided_slice %301 {offsets = [0, 0], sizes = [8, 32], strides = [1, 1]} : vector<8x64xf32> to vector<8x32xf32>
    %c8_146 = arith.constant 8 : index
    %c0_147 = arith.constant 0 : index
    %303 = vector.load %arg14[%c8_146, %c0_147] : memref<64x64xf32, #tpu.memory_space<vmem>>, vector<8x32xf32>
    tpu.vector_store %arg14[%c8_146, %c0_147], %302 {strides = array<i32>} : memref<64x64xf32, #tpu.memory_space<vmem>>, vector<8x32xf32>,
    %304 = vector.extract_strided_slice %301 {offsets = [0, 32], sizes = [8, 32], strides = [1, 1]} : vector<8x64xf32> to vector<8x32xf32>
    %c48_148 = arith.constant 48 : index
    %c32_149 = arith.constant 32 : index
    %305 = vector.load %arg14[%c48_148, %c32_149] : memref<64x64xf32, #tpu.memory_space<vmem>>, vector<8x32xf32>
    tpu.vector_store %arg14[%c48_148, %c32_149], %304 {strides = array<i32>} : memref<64x64xf32, #tpu.memory_space<vmem>>, vector<8x32xf32>,
    %c16_150 = arith.constant 16 : index
    %c0_151 = arith.constant 0 : index
    %306 = vector.load %arg13[%c16_150, %c0_151] : memref<64x256xf32, #tpu.memory_space<vmem>>, vector<8x256xf32>
    %cst_152 = arith.constant dense<0.000000e+00> : vector<8x256xf32>
    %307 = tpu.matmul %301, %248, %cst_152 {dimension_numbers = #tpu.dot_dimension_numbers<[1], [0], [0], [1], [0, 0, 1, 1], [], []>} : vector<8x64xf32>, vector<64x256xf32>, vector<8x256xf32> -> vector<8x256xf32>
    %308 = arith.addf %306, %307 : vector<8x256xf32>
    %309 = vector.extract_strided_slice %308 {offsets = [0, 0], sizes = [8, 192], strides = [1, 1]} : vector<8x256xf32> to vector<8x192xf32>
    %310 = arith.negf %309 : vector<8x192xf32>
    %311 = math.exp %310 : vector<8x192xf32>
    %cst_153 = arith.constant 1.000000e+00 : f32
    %312 = vector.broadcast %cst_153 : f32 to vector<8x192xf32>
    %313 = arith.addf %312, %311 : vector<8x192xf32>
    %314 = arith.divf %312, %313 : vector<8x192xf32>
    %315 = vector.extract_strided_slice %308 {offsets = [0, 192], sizes = [8, 64], strides = [1, 1]} : vector<8x256xf32> to vector<8x64xf32>
    %316 = math.tanh %315 : vector<8x64xf32>
    %317 = vector.extract_strided_slice %314 {offsets = [0, 0], sizes = [8, 64], strides = [1, 1]} : vector<8x192xf32> to vector<8x64xf32>
    %318 = vector.extract_strided_slice %314 {offsets = [0, 64], sizes = [8, 64], strides = [1, 1]} : vector<8x192xf32> to vector<8x64xf32>
    %319 = vector.extract_strided_slice %314 {offsets = [0, 128], sizes = [8, 64], strides = [1, 1]} : vector<8x192xf32> to vector<8x64xf32>
    %320 = arith.mulf %318, %299 : vector<8x64xf32>
    %321 = arith.mulf %317, %316 : vector<8x64xf32>
    %322 = arith.addf %320, %321 : vector<8x64xf32>
    %323 = math.tanh %322 : vector<8x64xf32>
    %324 = arith.mulf %319, %323 : vector<8x64xf32>
    %325 = vector.extract_strided_slice %324 {offsets = [0, 0], sizes = [8, 32], strides = [1, 1]} : vector<8x64xf32> to vector<8x32xf32>
    %c16_154 = arith.constant 16 : index
    %c0_155 = arith.constant 0 : index
    %326 = vector.load %arg14[%c16_154, %c0_155] : memref<64x64xf32, #tpu.memory_space<vmem>>, vector<8x32xf32>
    tpu.vector_store %arg14[%c16_154, %c0_155], %325 {strides = array<i32>} : memref<64x64xf32, #tpu.memory_space<vmem>>, vector<8x32xf32>,
    %327 = vector.extract_strided_slice %324 {offsets = [0, 32], sizes = [8, 32], strides = [1, 1]} : vector<8x64xf32> to vector<8x32xf32>
    %c40_156 = arith.constant 40 : index
    %c32_157 = arith.constant 32 : index
    %328 = vector.load %arg14[%c40_156, %c32_157] : memref<64x64xf32, #tpu.memory_space<vmem>>, vector<8x32xf32>
    tpu.vector_store %arg14[%c40_156, %c32_157], %327 {strides = array<i32>} : memref<64x64xf32, #tpu.memory_space<vmem>>, vector<8x32xf32>,
    %c24_158 = arith.constant 24 : index
    %c0_159 = arith.constant 0 : index
    %329 = vector.load %arg13[%c24_158, %c0_159] : memref<64x256xf32, #tpu.memory_space<vmem>>, vector<8x256xf32>
    %cst_160 = arith.constant dense<0.000000e+00> : vector<8x256xf32>
    %330 = tpu.matmul %324, %248, %cst_160 {dimension_numbers = #tpu.dot_dimension_numbers<[1], [0], [0], [1], [0, 0, 1, 1], [], []>} : vector<8x64xf32>, vector<64x256xf32>, vector<8x256xf32> -> vector<8x256xf32>
    %331 = arith.addf %329, %330 : vector<8x256xf32>
    %332 = vector.extract_strided_slice %331 {offsets = [0, 0], sizes = [8, 192], strides = [1, 1]} : vector<8x256xf32> to vector<8x192xf32>
    %333 = arith.negf %332 : vector<8x192xf32>
    %334 = math.exp %333 : vector<8x192xf32>
    %cst_161 = arith.constant 1.000000e+00 : f32
    %335 = vector.broadcast %cst_161 : f32 to vector<8x192xf32>
    %336 = arith.addf %335, %334 : vector<8x192xf32>
    %337 = arith.divf %335, %336 : vector<8x192xf32>
    %338 = vector.extract_strided_slice %331 {offsets = [0, 192], sizes = [8, 64], strides = [1, 1]} : vector<8x256xf32> to vector<8x64xf32>
    %339 = math.tanh %338 : vector<8x64xf32>
    %340 = vector.extract_strided_slice %337 {offsets = [0, 0], sizes = [8, 64], strides = [1, 1]} : vector<8x192xf32> to vector<8x64xf32>
    %341 = vector.extract_strided_slice %337 {offsets = [0, 64], sizes = [8, 64], strides = [1, 1]} : vector<8x192xf32> to vector<8x64xf32>
    %342 = vector.extract_strided_slice %337 {offsets = [0, 128], sizes = [8, 64], strides = [1, 1]} : vector<8x192xf32> to vector<8x64xf32>
    %343 = arith.mulf %341, %322 : vector<8x64xf32>
    %344 = arith.mulf %340, %339 : vector<8x64xf32>
    %345 = arith.addf %343, %344 : vector<8x64xf32>
    %346 = math.tanh %345 : vector<8x64xf32>
    %347 = arith.mulf %342, %346 : vector<8x64xf32>
    %348 = vector.extract_strided_slice %347 {offsets = [0, 0], sizes = [8, 32], strides = [1, 1]} : vector<8x64xf32> to vector<8x32xf32>
    %c24_162 = arith.constant 24 : index
    %c0_163 = arith.constant 0 : index
    %349 = vector.load %arg14[%c24_162, %c0_163] : memref<64x64xf32, #tpu.memory_space<vmem>>, vector<8x32xf32>
    tpu.vector_store %arg14[%c24_162, %c0_163], %348 {strides = array<i32>} : memref<64x64xf32, #tpu.memory_space<vmem>>, vector<8x32xf32>,
    %350 = vector.extract_strided_slice %347 {offsets = [0, 32], sizes = [8, 32], strides = [1, 1]} : vector<8x64xf32> to vector<8x32xf32>
    %c32_164 = arith.constant 32 : index
    %c32_165 = arith.constant 32 : index
    %351 = vector.load %arg14[%c32_164, %c32_165] : memref<64x64xf32, #tpu.memory_space<vmem>>, vector<8x32xf32>
    tpu.vector_store %arg14[%c32_164, %c32_165], %350 {strides = array<i32>} : memref<64x64xf32, #tpu.memory_space<vmem>>, vector<8x32xf32>,
    %c32_166 = arith.constant 32 : index
    %c0_167 = arith.constant 0 : index
    %352 = vector.load %arg13[%c32_166, %c0_167] : memref<64x256xf32, #tpu.memory_space<vmem>>, vector<8x256xf32>
    %cst_168 = arith.constant dense<0.000000e+00> : vector<8x256xf32>
    %353 = tpu.matmul %347, %248, %cst_168 {dimension_numbers = #tpu.dot_dimension_numbers<[1], [0], [0], [1], [0, 0, 1, 1], [], []>} : vector<8x64xf32>, vector<64x256xf32>, vector<8x256xf32> -> vector<8x256xf32>
    %354 = arith.addf %352, %353 : vector<8x256xf32>
    %355 = vector.extract_strided_slice %354 {offsets = [0, 0], sizes = [8, 192], strides = [1, 1]} : vector<8x256xf32> to vector<8x192xf32>
    %356 = arith.negf %355 : vector<8x192xf32>
    %357 = math.exp %356 : vector<8x192xf32>
    %cst_169 = arith.constant 1.000000e+00 : f32
    %358 = vector.broadcast %cst_169 : f32 to vector<8x192xf32>
    %359 = arith.addf %358, %357 : vector<8x192xf32>
    %360 = arith.divf %358, %359 : vector<8x192xf32>
    %361 = vector.extract_strided_slice %354 {offsets = [0, 192], sizes = [8, 64], strides = [1, 1]} : vector<8x256xf32> to vector<8x64xf32>
    %362 = math.tanh %361 : vector<8x64xf32>
    %363 = vector.extract_strided_slice %360 {offsets = [0, 0], sizes = [8, 64], strides = [1, 1]} : vector<8x192xf32> to vector<8x64xf32>
    %364 = vector.extract_strided_slice %360 {offsets = [0, 64], sizes = [8, 64], strides = [1, 1]} : vector<8x192xf32> to vector<8x64xf32>
    %365 = vector.extract_strided_slice %360 {offsets = [0, 128], sizes = [8, 64], strides = [1, 1]} : vector<8x192xf32> to vector<8x64xf32>
    %366 = arith.mulf %364, %345 : vector<8x64xf32>
    %367 = arith.mulf %363, %362 : vector<8x64xf32>
    %368 = arith.addf %366, %367 : vector<8x64xf32>
    %369 = math.tanh %368 : vector<8x64xf32>
    %370 = arith.mulf %365, %369 : vector<8x64xf32>
    %371 = vector.extract_strided_slice %370 {offsets = [0, 0], sizes = [8, 32], strides = [1, 1]} : vector<8x64xf32> to vector<8x32xf32>
    %c32_170 = arith.constant 32 : index
    %c0_171 = arith.constant 0 : index
    %372 = vector.load %arg14[%c32_170, %c0_171] : memref<64x64xf32, #tpu.memory_space<vmem>>, vector<8x32xf32>
    tpu.vector_store %arg14[%c32_170, %c0_171], %371 {strides = array<i32>} : memref<64x64xf32, #tpu.memory_space<vmem>>, vector<8x32xf32>,
    %373 = vector.extract_strided_slice %370 {offsets = [0, 32], sizes = [8, 32], strides = [1, 1]} : vector<8x64xf32> to vector<8x32xf32>
    %c24_172 = arith.constant 24 : index
    %c32_173 = arith.constant 32 : index
    %374 = vector.load %arg14[%c24_172, %c32_173] : memref<64x64xf32, #tpu.memory_space<vmem>>, vector<8x32xf32>
    tpu.vector_store %arg14[%c24_172, %c32_173], %373 {strides = array<i32>} : memref<64x64xf32, #tpu.memory_space<vmem>>, vector<8x32xf32>,
    %c40_174 = arith.constant 40 : index
    %c0_175 = arith.constant 0 : index
    %375 = vector.load %arg13[%c40_174, %c0_175] : memref<64x256xf32, #tpu.memory_space<vmem>>, vector<8x256xf32>
    %cst_176 = arith.constant dense<0.000000e+00> : vector<8x256xf32>
    %376 = tpu.matmul %370, %248, %cst_176 {dimension_numbers = #tpu.dot_dimension_numbers<[1], [0], [0], [1], [0, 0, 1, 1], [], []>} : vector<8x64xf32>, vector<64x256xf32>, vector<8x256xf32> -> vector<8x256xf32>
    %377 = arith.addf %375, %376 : vector<8x256xf32>
    %378 = vector.extract_strided_slice %377 {offsets = [0, 0], sizes = [8, 192], strides = [1, 1]} : vector<8x256xf32> to vector<8x192xf32>
    %379 = arith.negf %378 : vector<8x192xf32>
    %380 = math.exp %379 : vector<8x192xf32>
    %cst_177 = arith.constant 1.000000e+00 : f32
    %381 = vector.broadcast %cst_177 : f32 to vector<8x192xf32>
    %382 = arith.addf %381, %380 : vector<8x192xf32>
    %383 = arith.divf %381, %382 : vector<8x192xf32>
    %384 = vector.extract_strided_slice %377 {offsets = [0, 192], sizes = [8, 64], strides = [1, 1]} : vector<8x256xf32> to vector<8x64xf32>
    %385 = math.tanh %384 : vector<8x64xf32>
    %386 = vector.extract_strided_slice %383 {offsets = [0, 0], sizes = [8, 64], strides = [1, 1]} : vector<8x192xf32> to vector<8x64xf32>
    %387 = vector.extract_strided_slice %383 {offsets = [0, 64], sizes = [8, 64], strides = [1, 1]} : vector<8x192xf32> to vector<8x64xf32>
    %388 = vector.extract_strided_slice %383 {offsets = [0, 128], sizes = [8, 64], strides = [1, 1]} : vector<8x192xf32> to vector<8x64xf32>
    %389 = arith.mulf %387, %368 : vector<8x64xf32>
    %390 = arith.mulf %386, %385 : vector<8x64xf32>
    %391 = arith.addf %389, %390 : vector<8x64xf32>
    %392 = math.tanh %391 : vector<8x64xf32>
    %393 = arith.mulf %388, %392 : vector<8x64xf32>
    %394 = vector.extract_strided_slice %393 {offsets = [0, 0], sizes = [8, 32], strides = [1, 1]} : vector<8x64xf32> to vector<8x32xf32>
    %c40_178 = arith.constant 40 : index
    %c0_179 = arith.constant 0 : index
    %395 = vector.load %arg14[%c40_178, %c0_179] : memref<64x64xf32, #tpu.memory_space<vmem>>, vector<8x32xf32>
    tpu.vector_store %arg14[%c40_178, %c0_179], %394 {strides = array<i32>} : memref<64x64xf32, #tpu.memory_space<vmem>>, vector<8x32xf32>,
    %396 = vector.extract_strided_slice %393 {offsets = [0, 32], sizes = [8, 32], strides = [1, 1]} : vector<8x64xf32> to vector<8x32xf32>
    %c16_180 = arith.constant 16 : index
    %c32_181 = arith.constant 32 : index
    %397 = vector.load %arg14[%c16_180, %c32_181] : memref<64x64xf32, #tpu.memory_space<vmem>>, vector<8x32xf32>
    tpu.vector_store %arg14[%c16_180, %c32_181], %396 {strides = array<i32>} : memref<64x64xf32, #tpu.memory_space<vmem>>, vector<8x32xf32>,
    %c48_182 = arith.constant 48 : index
    %c0_183 = arith.constant 0 : index
    %398 = vector.load %arg13[%c48_182, %c0_183] : memref<64x256xf32, #tpu.memory_space<vmem>>, vector<8x256xf32>
    %cst_184 = arith.constant dense<0.000000e+00> : vector<8x256xf32>
    %399 = tpu.matmul %393, %248, %cst_184 {dimension_numbers = #tpu.dot_dimension_numbers<[1], [0], [0], [1], [0, 0, 1, 1], [], []>} : vector<8x64xf32>, vector<64x256xf32>, vector<8x256xf32> -> vector<8x256xf32>
    %400 = arith.addf %398, %399 : vector<8x256xf32>
    %401 = vector.extract_strided_slice %400 {offsets = [0, 0], sizes = [8, 192], strides = [1, 1]} : vector<8x256xf32> to vector<8x192xf32>
    %402 = arith.negf %401 : vector<8x192xf32>
    %403 = math.exp %402 : vector<8x192xf32>
    %cst_185 = arith.constant 1.000000e+00 : f32
    %404 = vector.broadcast %cst_185 : f32 to vector<8x192xf32>
    %405 = arith.addf %404, %403 : vector<8x192xf32>
    %406 = arith.divf %404, %405 : vector<8x192xf32>
    %407 = vector.extract_strided_slice %400 {offsets = [0, 192], sizes = [8, 64], strides = [1, 1]} : vector<8x256xf32> to vector<8x64xf32>
    %408 = math.tanh %407 : vector<8x64xf32>
    %409 = vector.extract_strided_slice %406 {offsets = [0, 0], sizes = [8, 64], strides = [1, 1]} : vector<8x192xf32> to vector<8x64xf32>
    %410 = vector.extract_strided_slice %406 {offsets = [0, 64], sizes = [8, 64], strides = [1, 1]} : vector<8x192xf32> to vector<8x64xf32>
    %411 = vector.extract_strided_slice %406 {offsets = [0, 128], sizes = [8, 64], strides = [1, 1]} : vector<8x192xf32> to vector<8x64xf32>
    %412 = arith.mulf %410, %391 : vector<8x64xf32>
    %413 = arith.mulf %409, %408 : vector<8x64xf32>
    %414 = arith.addf %412, %413 : vector<8x64xf32>
    %415 = math.tanh %414 : vector<8x64xf32>
    %416 = arith.mulf %411, %415 : vector<8x64xf32>
    %417 = vector.extract_strided_slice %416 {offsets = [0, 0], sizes = [8, 32], strides = [1, 1]} : vector<8x64xf32> to vector<8x32xf32>
    %c48_186 = arith.constant 48 : index
    %c0_187 = arith.constant 0 : index
    %418 = vector.load %arg14[%c48_186, %c0_187] : memref<64x64xf32, #tpu.memory_space<vmem>>, vector<8x32xf32>
    tpu.vector_store %arg14[%c48_186, %c0_187], %417 {strides = array<i32>} : memref<64x64xf32, #tpu.memory_space<vmem>>, vector<8x32xf32>,
    %419 = vector.extract_strided_slice %416 {offsets = [0, 32], sizes = [8, 32], strides = [1, 1]} : vector<8x64xf32> to vector<8x32xf32>
    %c8_188 = arith.constant 8 : index
    %c32_189 = arith.constant 32 : index
    %420 = vector.load %arg14[%c8_188, %c32_189] : memref<64x64xf32, #tpu.memory_space<vmem>>, vector<8x32xf32>
    tpu.vector_store %arg14[%c8_188, %c32_189], %419 {strides = array<i32>} : memref<64x64xf32, #tpu.memory_space<vmem>>, vector<8x32xf32>,
    %c56_190 = arith.constant 56 : index
    %c0_191 = arith.constant 0 : index
    %421 = vector.load %arg13[%c56_190, %c0_191] : memref<64x256xf32, #tpu.memory_space<vmem>>, vector<8x256xf32>
    %cst_192 = arith.constant dense<0.000000e+00> : vector<8x256xf32>
    %422 = tpu.matmul %416, %248, %cst_192 {dimension_numbers = #tpu.dot_dimension_numbers<[1], [0], [0], [1], [0, 0, 1, 1], [], []>} : vector<8x64xf32>, vector<64x256xf32>, vector<8x256xf32> -> vector<8x256xf32>
    %423 = arith.addf %421, %422 : vector<8x256xf32>
    %424 = vector.extract_strided_slice %423 {offsets = [0, 0], sizes = [8, 192], strides = [1, 1]} : vector<8x256xf32> to vector<8x192xf32>
    %425 = arith.negf %424 : vector<8x192xf32>
    %426 = math.exp %425 : vector<8x192xf32>
    %cst_193 = arith.constant 1.000000e+00 : f32
    %427 = vector.broadcast %cst_193 : f32 to vector<8x192xf32>
    %428 = arith.addf %427, %426 : vector<8x192xf32>
    %429 = arith.divf %427, %428 : vector<8x192xf32>
    %430 = vector.extract_strided_slice %423 {offsets = [0, 192], sizes = [8, 64], strides = [1, 1]} : vector<8x256xf32> to vector<8x64xf32>
    %431 = math.tanh %430 : vector<8x64xf32>
    %432 = vector.extract_strided_slice %429 {offsets = [0, 0], sizes = [8, 64], strides = [1, 1]} : vector<8x192xf32> to vector<8x64xf32>
    %433 = vector.extract_strided_slice %429 {offsets = [0, 64], sizes = [8, 64], strides = [1, 1]} : vector<8x192xf32> to vector<8x64xf32>
    %434 = vector.extract_strided_slice %429 {offsets = [0, 128], sizes = [8, 64], strides = [1, 1]} : vector<8x192xf32> to vector<8x64xf32>
    %435 = arith.mulf %433, %414 : vector<8x64xf32>
    %436 = arith.mulf %432, %431 : vector<8x64xf32>
    %437 = arith.addf %435, %436 : vector<8x64xf32>
    %438 = math.tanh %437 : vector<8x64xf32>
    %439 = arith.mulf %434, %438 : vector<8x64xf32>
    %440 = vector.extract_strided_slice %439 {offsets = [0, 0], sizes = [8, 32], strides = [1, 1]} : vector<8x64xf32> to vector<8x32xf32>
    %c56_194 = arith.constant 56 : index
    %c0_195 = arith.constant 0 : index
    %441 = vector.load %arg14[%c56_194, %c0_195] : memref<64x64xf32, #tpu.memory_space<vmem>>, vector<8x32xf32>
    tpu.vector_store %arg14[%c56_194, %c0_195], %440 {strides = array<i32>} : memref<64x64xf32, #tpu.memory_space<vmem>>, vector<8x32xf32>,
    %442 = vector.extract_strided_slice %439 {offsets = [0, 32], sizes = [8, 32], strides = [1, 1]} : vector<8x64xf32> to vector<8x32xf32>
    %c0_196 = arith.constant 0 : index
    %c32_197 = arith.constant 32 : index
    %443 = vector.load %arg14[%c0_196, %c32_197] : memref<64x64xf32, #tpu.memory_space<vmem>>, vector<8x32xf32>
    tpu.vector_store %arg14[%c0_196, %c32_197], %442 {strides = array<i32>} : memref<64x64xf32, #tpu.memory_space<vmem>>, vector<8x32xf32>,
    %444 = vector.extract_strided_slice %439 {offsets = [0, 0], sizes = [8, 32], strides = [1, 1]} : vector<8x64xf32> to vector<8x32xf32>
    %c2 = arith.constant 2 : index
    %c0_198 = arith.constant 0 : index
    %c0_199 = arith.constant 0 : index
    %445 = vector.load %arg11[%c2, %c0_198, %c0_199] : memref<4x8x32xf32, #tpu.memory_space<vmem>>, vector<1x8x32xf32>
    %446 = vector.shape_cast %445 : vector<1x8x32xf32> to vector<8x32xf32>
    %447 = vector.shape_cast %444 : vector<8x32xf32> to vector<1x8x32xf32>
    tpu.vector_store %arg11[%c2, %c0_198, %c0_199], %447 {strides = array<i32>} : memref<4x8x32xf32, #tpu.memory_space<vmem>>, vector<1x8x32xf32>,
    %448 = vector.extract_strided_slice %439 {offsets = [0, 32], sizes = [8, 32], strides = [1, 1]} : vector<8x64xf32> to vector<8x32xf32>
    %c3 = arith.constant 3 : index
    %c0_200 = arith.constant 0 : index
    %c0_201 = arith.constant 0 : index
    %449 = vector.load %arg11[%c3, %c0_200, %c0_201] : memref<4x8x32xf32, #tpu.memory_space<vmem>>, vector<1x8x32xf32>
    %450 = vector.shape_cast %449 : vector<1x8x32xf32> to vector<8x32xf32>
    %451 = vector.shape_cast %448 : vector<8x32xf32> to vector<1x8x32xf32>
    tpu.vector_store %arg11[%c3, %c0_200, %c0_201], %451 {strides = array<i32>} : memref<4x8x32xf32, #tpu.memory_space<vmem>>, vector<1x8x32xf32>,
    %452 = vector.extract_strided_slice %437 {offsets = [0, 0], sizes = [8, 32], strides = [1, 1]} : vector<8x64xf32> to vector<8x32xf32>
    %c2_202 = arith.constant 2 : index
    %c0_203 = arith.constant 0 : index
    %c0_204 = arith.constant 0 : index
    %453 = vector.load %arg12[%c2_202, %c0_203, %c0_204] : memref<4x8x32xf32, #tpu.memory_space<vmem>>, vector<1x8x32xf32>
    %454 = vector.shape_cast %453 : vector<1x8x32xf32> to vector<8x32xf32>
    %455 = vector.shape_cast %452 : vector<8x32xf32> to vector<1x8x32xf32>
    tpu.vector_store %arg12[%c2_202, %c0_203, %c0_204], %455 {strides = array<i32>} : memref<4x8x32xf32, #tpu.memory_space<vmem>>, vector<1x8x32xf32>,
    %456 = vector.extract_strided_slice %437 {offsets = [0, 32], sizes = [8, 32], strides = [1, 1]} : vector<8x64xf32> to vector<8x32xf32>
    %c3_205 = arith.constant 3 : index
    %c0_206 = arith.constant 0 : index
    %c0_207 = arith.constant 0 : index
    %457 = vector.load %arg12[%c3_205, %c0_206, %c0_207] : memref<4x8x32xf32, #tpu.memory_space<vmem>>, vector<1x8x32xf32>
    %458 = vector.shape_cast %457 : vector<1x8x32xf32> to vector<8x32xf32>
    %459 = vector.shape_cast %456 : vector<8x32xf32> to vector<1x8x32xf32>
    tpu.vector_store %arg12[%c3_205, %c0_206, %c0_207], %459 {strides = array<i32>} : memref<4x8x32xf32, #tpu.memory_space<vmem>>, vector<1x8x32xf32>,
    %c0_208 = arith.constant 0 : index
    %c0_209 = arith.constant 0 : index
    %460 = vector.load %arg14[%c0_208, %c0_209] : memref<64x64xf32, #tpu.memory_space<vmem>>, vector<64x32xf32>
    %c0_210 = arith.constant 0 : index
    %c32_211 = arith.constant 32 : index
    %461 = vector.load %arg14[%c0_210, %c32_211] : memref<64x64xf32, #tpu.memory_space<vmem>>, vector<64x32xf32>
    %462 = arith.addf %460, %461 : vector<64x32xf32>
    %c0_212 = arith.constant 0 : index
    %c0_213 = arith.constant 0 : index
    %463 = vector.load %arg0[%c0_212, %c0_213] : memref<64x32xf32, #tpu.memory_space<vmem>>, vector<64x32xf32>
    %464 = arith.addf %462, %463 : vector<64x32xf32>
    %c0_214 = arith.constant 0 : index
    %c0_215 = arith.constant 0 : index
    %465 = vector.load %arg10[%c0_214, %c0_215] : memref<64x32xf32, #tpu.memory_space<vmem>>, vector<64x32xf32>
    tpu.vector_store %arg10[%c0_214, %c0_215], %464 {strides = array<i32>} : memref<64x32xf32, #tpu.memory_space<vmem>>, vector<64x32xf32>,
    return
  }
}

</mosaic_0001>

<llo_original>
// kernel: tpu_custom_call.1
$region0: #{tpu_custom_call.1}
  #allocation0 [shape = 'u32[]', space=smem, size = 0x4, offset = 0x4, fixed_abs, tag = 'smem constant byte address 0x4 - core index']
  #allocation1 [shape = 'u32[144,128]{1,0:T(1,128)}', space=vmem, size = 0x12000, scoped, tag = 'internal scratch']
  #allocation2 [shape = 'f32[64,256]{1,0:T(8,128)}', space=vmem, size = 0x10000, scoped, tag = 'scratch operand']
  #allocation3 [shape = 'f32[64,64]{1,0:T(8,128)}', space=vmem, size = 0x8000, scoped, tag = 'scratch operand']
  #allocation4 [shape = 'f32[64,64]{1,0:T(8,128)}', space=vmem, size = 0x8000, scoped, tag = 'scratch operand']
  %s0 = inlined_call_operand.vmem [shape: f32[64,32], index: 0, kind: input, shape index: {}]
  %s1 = inlined_call_operand.vmem [shape: f32[64,32], index: 1, kind: input, shape index: {}]
  %s2 = inlined_call_operand.vmem [shape: f32[32,256], index: 2, kind: input, shape index: {}]
  %s3 = inlined_call_operand.hbm [shape: f32[32,256], index: 3, kind: input, shape index: {}]
  %s4 = inlined_call_operand.vmem [shape: f32[64,256], index: 4, kind: input, shape index: {}]
  %s5 = inlined_call_operand.vmem [shape: f32[1,256], index: 5, kind: input, shape index: {}]
  %s6 = inlined_call_operand.hbm [shape: f32[64,256], index: 6, kind: input, shape index: {}]
  %s7 = inlined_call_operand.hbm [shape: f32[64,256], index: 7, kind: input, shape index: {}]
  %s8 = inlined_call_operand.hbm [shape: f32[64,256], index: 8, kind: input, shape index: {}]
  %s9 = inlined_call_operand.vmem [shape: f32[1,256], index: 9, kind: input, shape index: {}]
  %s10 = inlined_call_operand.vmem [shape: f32[64,32], index: 10, kind: output, shape index: {0}]
  %s11 = inlined_call_operand.hbm [shape: f32[4,8,32], index: 11, kind: output, shape index: {1}]
  %s12 = inlined_call_operand.hbm [shape: f32[4,8,32], index: 12, kind: output, shape index: {2}]
  %13 = xla_tuple %s10, %s11, %s12
  %s14 = sld [smem:[#allocation0]]
  $region82: #{tpu_custom_call.1} parent=0
    _
  %s16 = ssub.s32 1, %s14
  %s17 = scalar_select 0, %s16, %s14
  $region1: #{tpu_custom_call.1} parent=0
    #allocation5 [shape = 'u8[32768]{0}', space=vmem, size = 0x8000, scoped, tag = 'input window, operand 3, single buffered']
    #allocation6 [shape = 's32[1]{0}', space=sflag, size = 0x4, scoped, tag = 'scoped memory for tpu_custom_call.1']
    #allocation7 [shape = 's32[1]{0}', space=sflag, size = 0x4, scoped, tag = 'scoped memory for tpu_custom_call.1']
    #allocation8 [shape = 'u8[65536]{0}', space=vmem, size = 0x10000, scoped, tag = 'input window, operand 6, single buffered']
    #allocation9 [shape = 's32[1]{0}', space=sflag, size = 0x4, scoped, tag = 'scoped memory for tpu_custom_call.1']
    #allocation10 [shape = 'u8[65536]{0}', space=vmem, size = 0x10000, scoped, tag = 'input window, operand 7, single buffered']
    #allocation11 [shape = 'u8[65536]{0}', space=vmem, size = 0x10000, scoped, tag = 'input window, operand 8, single buffered']
    #allocation12 [shape = 's32[1]{0}', space=sflag, size = 0x4, scoped, tag = 'scoped memory for tpu_custom_call.1']
    #allocation13 [shape = 'u8[16384]{0}', space=vmem, size = 0x4000, scoped, tag = 'output window, operand 1, single buffered']
    #allocation14 [shape = 'u8[16384]{0}', space=vmem, size = 0x4000, scoped, tag = 'output window, operand 2, single buffered']
    #allocation15 [shape = 's32[1]{0}', space=sflag, size = 0x4, scoped, tag = 'scoped memory for tpu_custom_call.1']
    %18 = vsyncpa [#allocation6], 0
    %19 = vsyncpa [#allocation9], 0
    %20 = vsyncpa [#allocation12], 0
    %21 = vsyncpa [#allocation7], 0
    %22 = vsyncpa [#allocation15], 0
    // Predicated region
    $region2: #{tpu_custom_call.1} parent=1 // pred_check
      _
    $region3: #{tpu_custom_call.1} parent=1 // pred_check_branch
      %24 = sbr.rel (0) target = $region5
    $region4: #{tpu_custom_call.1} parent=1 // pred_region
      _
    $region5: #{tpu_custom_call.1} parent=1 // pred_fallthru
      _
    // Predicated region
    $region6: #{tpu_custom_call.1} parent=1 // pred_check
      _
    $region7: #{tpu_custom_call.1} parent=1 // pred_check_branch
      %26 = sbr.rel (0) target = $region9
    $region8: #{tpu_custom_call.1} parent=1 // pred_region
      _
    $region9: #{tpu_custom_call.1} parent=1 // pred_fallthru
      _
    // Predicated region
    $region10: #{tpu_custom_call.1} parent=1 // pred_check
      _
    $region11: #{tpu_custom_call.1} parent=1 // pred_check_branch
      %28 = sbr.rel (0) target = $region13
    $region12: #{tpu_custom_call.1} parent=1 // pred_region
      _
    $region13: #{tpu_custom_call.1} parent=1 // pred_fallthru
      _
    // Predicated region
    $region14: #{tpu_custom_call.1} parent=1 // pred_check
      _
    $region15: #{tpu_custom_call.1} parent=1 // pred_check_branch
      %30 = sbr.rel (0) target = $region17
    $region16: #{tpu_custom_call.1} parent=1 // pred_region
      %s32 = ssub.s32 1024, 1024
      %33 = vsyncadd [#allocation6], %s32
      %s34 = sshll.u32 [#allocation5], 4
      %s35 = int_to_ptr.vmem [resolvable:$true] %s34
      %40 = dma.hbm_to_vmem [thread:$0]  %s3, 1024, %s35, [#allocation6], 256, 256, 16
    $region17: #{tpu_custom_call.1} parent=1 // pred_fallthru
      _
    // Predicated region
    $region18: #{tpu_custom_call.1} parent=1 // pred_check
      _
    $region19: #{tpu_custom_call.1} parent=1 // pred_check_branch
      %42 = sbr.rel (0) target = $region21
    $region20: #{tpu_custom_call.1} parent=1 // pred_region
      _
    $region21: #{tpu_custom_call.1} parent=1 // pred_fallthru
      _
    // Predicated region
    $region22: #{tpu_custom_call.1} parent=1 // pred_check
      _
    $region23: #{tpu_custom_call.1} parent=1 // pred_check_branch
      %44 = sbr.rel (0) target = $region25
    $region24: #{tpu_custom_call.1} parent=1 // pred_region
      _
    $region25: #{tpu_custom_call.1} parent=1 // pred_fallthru
      _
    // Predicated region
    $region26: #{tpu_custom_call.1} parent=1 // pred_check
      _
    $region27: #{tpu_custom_call.1} parent=1 // pred_check_branch
      %46 = sbr.rel (0) target = $region29
    $region28: #{tpu_custom_call.1} parent=1 // pred_region
      %s48 = ssub.s32 2048, 2048
      %49 = vsyncadd [#allocation9], %s48
      %s50 = sshll.u32 [#allocation8], 4
      %s51 = int_to_ptr.vmem [resolvable:$true] %s50
      %56 = dma.hbm_to_vmem [thread:$0]  %s6, 2048, %s51, [#allocation9], 256, 256, 16
    $region29: #{tpu_custom_call.1} parent=1 // pred_fallthru
      _
    // Predicated region
    $region30: #{tpu_custom_call.1} parent=1 // pred_check
      _
    $region31: #{tpu_custom_call.1} parent=1 // pred_check_branch
      %58 = sbr.rel (0) target = $region33
    $region32: #{tpu_custom_call.1} parent=1 // pred_region
      %s60 = ssub.s32 2048, 2048
      %61 = vsyncadd [#allocation9], %s60
      %s62 = sshll.u32 [#allocation10], 4
      %s63 = int_to_ptr.vmem [resolvable:$true] %s62
      %68 = dma.hbm_to_vmem [thread:$0]  %s7, 2048, %s63, [#allocation9], 256, 256, 16
    $region33: #{tpu_custom_call.1} parent=1 // pred_fallthru
      _
    // Predicated region
    $region34: #{tpu_custom_call.1} parent=1 // pred_check
      _
    $region35: #{tpu_custom_call.1} parent=1 // pred_check_branch
      %70 = sbr.rel (0) target = $region37
    $region36: #{tpu_custom_call.1} parent=1 // pred_region
      %s72 = ssub.s32 2048, 2048
      %73 = vsyncadd [#allocation12], %s72
      %s74 = sshll.u32 [#allocation11], 4
      %s75 = int_to_ptr.vmem [resolvable:$true] %s74
      %80 = dma.hbm_to_vmem [thread:$0]  %s8, 2048, %s75, [#allocation12], 256, 256, 16
    $region37: #{tpu_custom_call.1} parent=1 // pred_fallthru
      _
    // Predicated region
    $region38: #{tpu_custom_call.1} parent=1 // pred_check
      _
    $region39: #{tpu_custom_call.1} parent=1 // pred_check_branch
      %82 = sbr.rel (0) target = $region41
    $region40: #{tpu_custom_call.1} parent=1 // pred_region
      _
    $region41: #{tpu_custom_call.1} parent=1 // pred_fallthru
      _
    // Predicated region
    $region42: #{tpu_custom_call.1} parent=1 // pred_check
      _
    $region43: #{tpu_custom_call.1} parent=1 // pred_check_branch
      %84 = sbr.rel (0) target = $region45
    $region44: #{tpu_custom_call.1} parent=1 // pred_region
      %85 = dma.done [#allocation6], 1024
    $region45: #{tpu_custom_call.1} parent=1 // pred_fallthru
      _
    // Predicated region
    $region46: #{tpu_custom_call.1} parent=1 // pred_check
      _
    $region47: #{tpu_custom_call.1} parent=1 // pred_check_branch
      %87 = sbr.rel (0) target = $region49
    $region48: #{tpu_custom_call.1} parent=1 // pred_region
      %88 = dma.done [#allocation9], 2048
    $region49: #{tpu_custom_call.1} parent=1 // pred_fallthru
      _
    // Predicated region
    $region50: #{tpu_custom_call.1} parent=1 // pred_check
      _
    $region51: #{tpu_custom_call.1} parent=1 // pred_check_branch
      %90 = sbr.rel (0) target = $region53
    $region52: #{tpu_custom_call.1} parent=1 // pred_region
      %91 = dma.done [#allocation9], 2048
    $region53: #{tpu_custom_call.1} parent=1 // pred_fallthru
      _
    // Predicated region
    $region54: #{tpu_custom_call.1} parent=1 // pred_check
      _
    $region55: #{tpu_custom_call.1} parent=1 // pred_check_branch
      %93 = sbr.rel (0) target = $region57
    $region56: #{tpu_custom_call.1} parent=1 // pred_region
      %94 = dma.done [#allocation12], 2048
    $region57: #{tpu_custom_call.1} parent=1 // pred_fallthru
      _
    %v95 = vld [vmem:[%s2] sm:$0xff]
    %v96 = vld [vmem:[%s2 + $0x8] sm:$0xff]
    %v97 = vld [vmem:[%s2 + $0x10] sm:$0xff]
    %v98 = vld [vmem:[%s2 + $0x18] sm:$0xff]
    %v99 = vld [vmem:[%s2 + $0x20] sm:$0xff]
    %v100 = vld [vmem:[%s2 + $0x28] sm:$0xff]
    %v101 = vld [vmem:[%s2 + $0x30] sm:$0xff]
    %v102 = vld [vmem:[%s2 + $0x38] sm:$0xff]
    %v103 = vld [vmem:[#allocation5] sm:$0xff]
    %v104 = vld [vmem:[#allocation5 + $0x8] sm:$0xff]
    %v105 = vld [vmem:[#allocation5 + $0x10] sm:$0xff]
    %v106 = vld [vmem:[#allocation5 + $0x18] sm:$0xff]
    %v107 = vld [vmem:[#allocation5 + $0x20] sm:$0xff]
    %v108 = vld [vmem:[#allocation5 + $0x28] sm:$0xff]
    %v109 = vld [vmem:[#allocation5 + $0x30] sm:$0xff]
    %v110 = vld [vmem:[#allocation5 + $0x38] sm:$0xff]
    %v111 = vld [vmem:[%s4] sm:$0xff]
    %v112 = vld [vmem:[%s4 + $0x8] sm:$0xff]
    %v113 = vld [vmem:[%s4 + $0x10] sm:$0xff]
    %v114 = vld [vmem:[%s4 + $0x18] sm:$0xff]
    %v115 = vld [vmem:[%s4 + $0x20] sm:$0xff]
    %v116 = vld [vmem:[%s4 + $0x28] sm:$0xff]
    %v117 = vld [vmem:[%s4 + $0x30] sm:$0xff]
    %v118 = vld [vmem:[%s4 + $0x38] sm:$0xff]
    %v119 = vld [vmem:[%s4 + $0x40] sm:$0xff]
    %v120 = vld [vmem:[%s4 + $0x48] sm:$0xff]
    %v121 = vld [vmem:[%s4 + $0x50] sm:$0xff]
    %v122 = vld [vmem:[%s4 + $0x58] sm:$0xff]
    %v123 = vld [vmem:[%s4 + $0x60] sm:$0xff]
    %v124 = vld [vmem:[%s4 + $0x68] sm:$0xff]
    %v125 = vld [vmem:[%s4 + $0x70] sm:$0xff]
    %v126 = vld [vmem:[%s4 + $0x78] sm:$0xff]
    %v127 = vld [vmem:[%s5] sm:$0x3]
    %v128 = vld [vmem:[%s0] sm:$0xff]
    %v129 = vld [vmem:[%s0 + $0x8] sm:$0xff]
    %v130 = vld [vmem:[%s0 + $0x10] sm:$0xff]
    %v131 = vld [vmem:[%s0 + $0x18] sm:$0xff]
    %v132 = vld [vmem:[%s0 + $0x20] sm:$0xff]
    %v133 = vld [vmem:[%s0 + $0x28] sm:$0xff]
    %v134 = vld [vmem:[%s0 + $0x30] sm:$0xff]
    %v135 = vld [vmem:[%s0 + $0x38] sm:$0xff]
    %v136 = vld [vmem:[%s1] sm:$0xff]
    %v137 = vld [vmem:[%s1 + $0x8] sm:$0xff]
    %v138 = vld [vmem:[%s1 + $0x10] sm:$0xff]
    %v139 = vld [vmem:[%s1 + $0x18] sm:$0xff]
    %v140 = vld [vmem:[%s1 + $0x20] sm:$0xff]
    %v141 = vld [vmem:[%s1 + $0x28] sm:$0xff]
    %v142 = vld [vmem:[%s1 + $0x30] sm:$0xff]
    %v143 = vld [vmem:[%s1 + $0x38] sm:$0xff]
    %vm144 = vcmask 261120
    %v146 = vsel %vm144, %v136, 0
    %v149 = vsel %vm144, %v137, 0
    %v152 = vsel %vm144, %v138, 0
    %v155 = vsel %vm144, %v139, 0
    %v158 = vsel %vm144, %v140, 0
    %v161 = vsel %vm144, %v141, 0
    %v164 = vsel %vm144, %v142, 0
    %v167 = vsel %vm144, %v143, 0
    %169 = vmatprep.subr.mxu0 %v104
    %170 = vmatpush1.msra.mxu0 %v103
    %171 = vmatprep.subr.mxu0 %v106
    %172 = vmatpush1.msra.mxu0 %v105
    %173 = vmatprep.subr.mxu0 %v108
    %174 = vmatpush1.msra.mxu0 %v107
    %175 = vmatprep.subr.mxu0 %v110
    %176 = vmatpush1.msra.mxu0 %v109
    %177 = vmatprep.subr.mxu0 0.0
    %178 = vmatpush1.msra.mxu0 0.0
    %179 = vmatprep.subr.mxu0 0.0
    %180 = vmatpush1.msra.mxu0 0.0
    %181 = vmatprep.subr.mxu0 0.0
    %182 = vmatpush1.msra.mxu0 0.0
    %183 = vmatprep.subr.mxu0 0.0
    %184 = vmatpush1.msra.mxu0 0.0
    %185 = vmatprep.subr.mxu0 0.0
    %186 = vmatpush1.msra.mxu0 0.0
    %187 = vmatprep.subr.mxu0 0.0
    %188 = vmatpush1.msra.mxu0 0.0
    %189 = vmatprep.subr.mxu0 0.0
    %190 = vmatpush1.msra.mxu0 0.0
    %191 = vmatprep.subr.mxu0 0.0
    %192 = vmatpush1.msra.mxu0 0.0
    %193 = vmatprep.subr.mxu0 0.0
    %194 = vmatpush1.msra.mxu0 0.0
    %195 = vmatprep.subr.mxu0 0.0
    %196 = vmatpush1.msra.mxu0 0.0
    %197 = vmatprep.subr.mxu0 0.0
    %198 = vmatpush1.msra.mxu0 0.0
    %199 = vmatprep.subr.mxu0 0.0
    %200 = vmatpush1.msra.mxu0 0.0
    %201 = vmatprep.subr.mxu0 0.0
    %202 = vmatpush1.msra.mxu0 0.0
    %203 = vmatprep.subr.mxu0 0.0
    %204 = vmatpush1.msra.mxu0 0.0
    %205 = vmatprep.subr.mxu0 0.0
    %206 = vmatpush1.msra.mxu0 0.0
    %207 = vmatprep.subr.mxu0 0.0
    %208 = vmatpush1.msra.mxu0 0.0
    %209 = vmatprep.subr.mxu0 0.0
    %210 = vmatpush1.msra.mxu0 0.0
    %211 = vmatprep.subr.mxu0 0.0
    %212 = vmatpush1.msra.mxu0 0.0
    %213 = vmatprep.subr.mxu0 0.0
    %214 = vmatpush1.msra.mxu0 0.0
    %215 = vmatprep.subr.mxu0 0.0
    %216 = vmatpush1.msra.mxu0 0.0
    %217 = vmatprep.subr.mxu0 0.0
    %218 = vmatpush1.msra.mxu0 0.0
    %219 = vmatprep.subr.mxu0 0.0
    %220 = vmatpush1.msra.mxu0 0.0
    %221 = vmatprep.subr.mxu0 0.0
    %222 = vmatpush1.msra.mxu0 0.0
    %223 = vmatprep.subr.mxu0 0.0
    %224 = vmatpush1.msra.mxu0 0.0
    %225 = vmatprep.subr.mxu0 0.0
    %226 = vmatpush1.msra.mxu0 0.0
    %227 = vmatprep.subr.mxu0 0.0
    %228 = vmatpush1.msra.mxu0 0.0
    %229 = vmatprep.subr.mxu0 0.0
    %230 = vmatpush1.msra.mxu0 0.0
    %231 = vmatprep.subr.mxu0 0.0
    %232 = vmatpush1.msra.mxu0 0.0
    %233 = vmatprep.mubr.f32.mxu0 0.0
    %234 = vmatmul.mubr.f32.gmra.mrb[0].mxu0 %v146
    %v235 = vpop.f32.mrb[0].mxu0
    %v236 = vadd.f32 0.0, %v235
    %v237 = vpop.f32.mrb[0].mxu0
    %v238 = vadd.f32 0.0, %v237
    %239 = vmatprep.mubr.f32.mxu0 0.0
    %240 = vmatmul.mubr.f32.gmra.mrb[0].mxu0 %v149
    %v241 = vpop.f32.mrb[0].mxu0
    %v242 = vadd.f32 0.0, %v241
    %v243 = vpop.f32.mrb[0].mxu0
    %v244 = vadd.f32 0.0, %v243
    %245 = vmatprep.mubr.f32.mxu0 0.0
    %246 = vmatmul.mubr.f32.gmra.mrb[0].mxu0 %v152
    %v247 = vpop.f32.mrb[0].mxu0
    %v248 = vadd.f32 0.0, %v247
    %v249 = vpop.f32.mrb[0].mxu0
    %v250 = vadd.f32 0.0, %v249
    %251 = vmatprep.mubr.f32.mxu0 0.0
    %252 = vmatmul.mubr.f32.gmra.mrb[0].mxu0 %v155
    %v253 = vpop.f32.mrb[0].mxu0
    %v254 = vadd.f32 0.0, %v253
    %v255 = vpop.f32.mrb[0].mxu0
    %v256 = vadd.f32 0.0, %v255
    %257 = vmatprep.mubr.f32.mxu0 0.0
    %258 = vmatmul.mubr.f32.gmra.mrb[0].mxu0 %v158
    %v259 = vpop.f32.mrb[0].mxu0
    %v260 = vadd.f32 0.0, %v259
    %v261 = vpop.f32.mrb[0].mxu0
    %v262 = vadd.f32 0.0, %v261
    %263 = vmatprep.mubr.f32.mxu0 0.0
    %264 = vmatmul.mubr.f32.gmra.mrb[0].mxu0 %v161
    %v265 = vpop.f32.mrb[0].mxu0
    %v266 = vadd.f32 0.0, %v265
    %v267 = vpop.f32.mrb[0].mxu0
    %v268 = vadd.f32 0.0, %v267
    %269 = vmatprep.mubr.f32.mxu0 0.0
    %270 = vmatmul.mubr.f32.gmra.mrb[0].mxu0 %v164
    %v271 = vpop.f32.mrb[0].mxu0
    %v272 = vadd.f32 0.0, %v271
    %v273 = vpop.f32.mrb[0].mxu0
    %v274 = vadd.f32 0.0, %v273
    %275 = vmatprep.mubr.f32.mxu0 0.0
    %276 = vmatmul.mubr.f32.gmra.mrb[0].mxu0 %v167
    %v277 = vpop.f32.mrb[0].mxu0
    %v278 = vadd.f32 0.0, %v277
    %v279 = vpop.f32.mrb[0].mxu0
    %v280 = vadd.f32 0.0, %v279
    %281 = vdwg.mxu0
    %v283 = vsel %vm144, %v128, 0
    %v286 = vsel %vm144, %v129, 0
    %v289 = vsel %vm144, %v130, 0
    %v292 = vsel %vm144, %v131, 0
    %v295 = vsel %vm144, %v132, 0
    %v298 = vsel %vm144, %v133, 0
    %v301 = vsel %vm144, %v134, 0
    %v304 = vsel %vm144, %v135, 0
    %306 = vmatprep.subr.mxu0 %v96
    %307 = vmatpush1.msra.mxu0 %v95
    %308 = vmatprep.subr.mxu0 %v98
    %309 = vmatpush1.msra.mxu0 %v97
    %310 = vmatprep.subr.mxu0 %v100
    %311 = vmatpush1.msra.mxu0 %v99
    %312 = vmatprep.subr.mxu0 %v102
    %313 = vmatpush1.msra.mxu0 %v101
    %314 = vmatprep.subr.mxu0 0.0
    %315 = vmatpush1.msra.mxu0 0.0
    %316 = vmatprep.subr.mxu0 0.0
    %317 = vmatpush1.msra.mxu0 0.0
    %318 = vmatprep.subr.mxu0 0.0
    %319 = vmatpush1.msra.mxu0 0.0
    %320 = vmatprep.subr.mxu0 0.0
    %321 = vmatpush1.msra.mxu0 0.0
    %322 = vmatprep.subr.mxu0 0.0
    %323 = vmatpush1.msra.mxu0 0.0
    %324 = vmatprep.subr.mxu0 0.0
    %325 = vmatpush1.msra.mxu0 0.0
    %326 = vmatprep.subr.mxu0 0.0
    %327 = vmatpush1.msra.mxu0 0.0
    %328 = vmatprep.subr.mxu0 0.0
    %329 = vmatpush1.msra.mxu0 0.0
    %330 = vmatprep.subr.mxu0 0.0
    %331 = vmatpush1.msra.mxu0 0.0
    %332 = vmatprep.subr.mxu0 0.0
    %333 = vmatpush1.msra.mxu0 0.0
    %334 = vmatprep.subr.mxu0 0.0
    %335 = vmatpush1.msra.mxu0 0.0
    %336 = vmatprep.subr.mxu0 0.0
    %337 = vmatpush1.msra.mxu0 0.0
    %338 = vmatprep.subr.mxu0 0.0
    %339 = vmatpush1.msra.mxu0 0.0
    %340 = vmatprep.subr.mxu0 0.0
    %341 = vmatpush1.msra.mxu0 0.0
    %342 = vmatprep.subr.mxu0 0.0
    %343 = vmatpush1.msra.mxu0 0.0
    %344 = vmatprep.subr.mxu0 0.0
    %345 = vmatpush1.msra.mxu0 0.0
    %346 = vmatprep.subr.mxu0 0.0
    %347 = vmatpush1.msra.mxu0 0.0
    %348 = vmatprep.subr.mxu0 0.0
    %349 = vmatpush1.msra.mxu0 0.0
    %350 = vmatprep.subr.mxu0 0.0
    %351 = vmatpush1.msra.mxu0 0.0
    %352 = vmatprep.subr.mxu0 0.0
    %353 = vmatpush1.msra.mxu0 0.0
    %354 = vmatprep.subr.mxu0 0.0
    %355 = vmatpush1.msra.mxu0 0.0
    %356 = vmatprep.subr.mxu0 0.0
    %357 = vmatpush1.msra.mxu0 0.0
    %358 = vmatprep.subr.mxu0 0.0
    %359 = vmatpush1.msra.mxu0 0.0
    %360 = vmatprep.subr.mxu0 0.0
    %361 = vmatpush1.msra.mxu0 0.0
    %362 = vmatprep.subr.mxu0 0.0
    %363 = vmatpush1.msra.mxu0 0.0
    %364 = vmatprep.subr.mxu0 0.0
    %365 = vmatpush1.msra.mxu0 0.0
    %366 = vmatprep.subr.mxu0 0.0
    %367 = vmatpush1.msra.mxu0 0.0
    %368 = vmatprep.subr.mxu0 0.0
    %369 = vmatpush1.msra.mxu0 0.0
    %370 = vmatprep.mubr.f32.mxu0 0.0
    %371 = vmatmul.mubr.f32.gmra.mrb[0].mxu0 %v283
    %v372 = vpop.f32.mrb[0].mxu0
    %v373 = vadd.f32 %v236, %v372
    %v374 = vpop.f32.mrb[0].mxu0
    %v375 = vadd.f32 %v238, %v374
    %376 = vmatprep.mubr.f32.mxu0 0.0
    %377 = vmatmul.mubr.f32.gmra.mrb[0].mxu0 %v286
    %v378 = vpop.f32.mrb[0].mxu0
    %v379 = vadd.f32 %v242, %v378
    %v380 = vpop.f32.mrb[0].mxu0
    %v381 = vadd.f32 %v244, %v380
    %382 = vmatprep.mubr.f32.mxu0 0.0
    %383 = vmatmul.mubr.f32.gmra.mrb[0].mxu0 %v289
    %v384 = vpop.f32.mrb[0].mxu0
    %v385 = vadd.f32 %v248, %v384
    %v386 = vpop.f32.mrb[0].mxu0
    %v387 = vadd.f32 %v250, %v386
    %388 = vmatprep.mubr.f32.mxu0 0.0
    %389 = vmatmul.mubr.f32.gmra.mrb[0].mxu0 %v292
    %v390 = vpop.f32.mrb[0].mxu0
    %v391 = vadd.f32 %v254, %v390
    %v392 = vpop.f32.mrb[0].mxu0
    %v393 = vadd.f32 %v256, %v392
    %394 = vmatprep.mubr.f32.mxu0 0.0
    %395 = vmatmul.mubr.f32.gmra.mrb[0].mxu0 %v295
    %v396 = vpop.f32.mrb[0].mxu0
    %v397 = vadd.f32 %v260, %v396
    %v398 = vpop.f32.mrb[0].mxu0
    %v399 = vadd.f32 %v262, %v398
    %400 = vmatprep.mubr.f32.mxu0 0.0
    %401 = vmatmul.mubr.f32.gmra.mrb[0].mxu0 %v298
    %v402 = vpop.f32.mrb[0].mxu0
    %v403 = vadd.f32 %v266, %v402
    %v404 = vpop.f32.mrb[0].mxu0
    %v405 = vadd.f32 %v268, %v404
    %406 = vmatprep.mubr.f32.mxu0 0.0
    %407 = vmatmul.mubr.f32.gmra.mrb[0].mxu0 %v301
    %v408 = vpop.f32.mrb[0].mxu0
    %v409 = vadd.f32 %v272, %v408
    %v410 = vpop.f32.mrb[0].mxu0
    %v411 = vadd.f32 %v274, %v410
    %412 = vmatprep.mubr.f32.mxu0 0.0
    %413 = vmatmul.mubr.f32.gmra.mrb[0].mxu0 %v304
    %v414 = vpop.f32.mrb[0].mxu0
    %v415 = vadd.f32 %v278, %v414
    %v416 = vpop.f32.mrb[0].mxu0
    %v417 = vadd.f32 %v280, %v416
    %418 = vdwg.mxu0
    %v420 = vlaneseq
    %v421 = vshrl.u32 %v420, 7
    %v422 = vsub.s32 0, %v421
    %v423 = vrot.slane %v127, %v422
    %v424 = vlaneseq
    %v425 = vshrl.u32 %v424, 7
    %v426 = vsub.s32 1, %v425
    %v427 = vrot.slane %v127, %v426
    %v430 = vadd.f32 %v373, %v423
    %v431 = vadd.f32 %v375, %v427
    %v432 = vadd.f32 %v379, %v423
    %v433 = vadd.f32 %v381, %v427
    %v434 = vadd.f32 %v385, %v423
    %v435 = vadd.f32 %v387, %v427
    %v436 = vadd.f32 %v391, %v423
    %v437 = vadd.f32 %v393, %v427
    %v438 = vadd.f32 %v397, %v423
    %v439 = vadd.f32 %v399, %v427
    %v440 = vadd.f32 %v403, %v423
    %v441 = vadd.f32 %v405, %v427
    %v442 = vadd.f32 %v409, %v423
    %v443 = vadd.f32 %v411, %v427
    %v444 = vadd.f32 %v415, %v423
    %v445 = vadd.f32 %v417, %v427
    %446 = vst [vmem:[#allocation2] sm:$0xff] %v430
    %447 = vst [vmem:[#allocation2 + $0x8] sm:$0xff] %v431
    %448 = vst [vmem:[#allocation2 + $0x10] sm:$0xff] %v432
    %449 = vst [vmem:[#allocation2 + $0x18] sm:$0xff] %v433
    %450 = vst [vmem:[#allocation2 + $0x20] sm:$0xff] %v434
    %451 = vst [vmem:[#allocation2 + $0x28] sm:$0xff] %v435
    %452 = vst [vmem:[#allocation2 + $0x30] sm:$0xff] %v436
    %453 = vst [vmem:[#allocation2 + $0x38] sm:$0xff] %v437
    %454 = vst [vmem:[#allocation2 + $0x40] sm:$0xff] %v438
    %455 = vst [vmem:[#allocation2 + $0x48] sm:$0xff] %v439
    %456 = vst [vmem:[#allocation2 + $0x50] sm:$0xff] %v440
    %457 = vst [vmem:[#allocation2 + $0x58] sm:$0xff] %v441
    %458 = vst [vmem:[#allocation2 + $0x60] sm:$0xff] %v442
    %459 = vst [vmem:[#allocation2 + $0x68] sm:$0xff] %v443
    %460 = vst [vmem:[#allocation2 + $0x70] sm:$0xff] %v444
    %461 = vst [vmem:[#allocation2 + $0x78] sm:$0xff] %v445
    %v462 = vld [vmem:[#allocation2] sm:$0xff]
    %v463 = vld [vmem:[#allocation2 + $0x8] sm:$0xff]
    %vm464 = vcmask 523264
    %v466 = vsel %vm464, 0.0, 0
    %468 = vmatprep.subr.mxu0 %v112
    %469 = vmatpush1.msra.mxu0 %v111
    %470 = vmatprep.subr.mxu0 %v114
    %471 = vmatpush1.msra.mxu0 %v113
    %472 = vmatprep.subr.mxu0 %v116
    %473 = vmatpush1.msra.mxu0 %v115
    %474 = vmatprep.subr.mxu0 %v118
    %475 = vmatpush1.msra.mxu0 %v117
    %476 = vmatprep.subr.mxu0 %v120
    %477 = vmatpush1.msra.mxu0 %v119
    %478 = vmatprep.subr.mxu0 %v122
    %479 = vmatpush1.msra.mxu0 %v121
    %480 = vmatprep.subr.mxu0 %v124
    %481 = vmatpush1.msra.mxu0 %v123
    %482 = vmatprep.subr.mxu0 %v126
    %483 = vmatpush1.msra.mxu0 %v125
    %484 = vmatprep.subr.mxu0 0.0
    %485 = vmatpush1.msra.mxu0 0.0
    %486 = vmatprep.subr.mxu0 0.0
    %487 = vmatpush1.msra.mxu0 0.0
    %488 = vmatprep.subr.mxu0 0.0
    %489 = vmatpush1.msra.mxu0 0.0
    %490 = vmatprep.subr.mxu0 0.0
    %491 = vmatpush1.msra.mxu0 0.0
    %492 = vmatprep.subr.mxu0 0.0
    %493 = vmatpush1.msra.mxu0 0.0
    %494 = vmatprep.subr.mxu0 0.0
    %495 = vmatpush1.msra.mxu0 0.0
    %496 = vmatprep.subr.mxu0 0.0
    %497 = vmatpush1.msra.mxu0 0.0
    %498 = vmatprep.subr.mxu0 0.0
    %499 = vmatpush1.msra.mxu0 0.0
    %500 = vmatprep.subr.mxu0 0.0
    %501 = vmatpush1.msra.mxu0 0.0
    %502 = vmatprep.subr.mxu0 0.0
    %503 = vmatpush1.msra.mxu0 0.0
    %504 = vmatprep.subr.mxu0 0.0
    %505 = vmatpush1.msra.mxu0 0.0
    %506 = vmatprep.subr.mxu0 0.0
    %507 = vmatpush1.msra.mxu0 0.0
    %508 = vmatprep.subr.mxu0 0.0
    %509 = vmatpush1.msra.mxu0 0.0
    %510 = vmatprep.subr.mxu0 0.0
    %511 = vmatpush1.msra.mxu0 0.0
    %512 = vmatprep.subr.mxu0 0.0
    %513 = vmatpush1.msra.mxu0 0.0
    %514 = vmatprep.subr.mxu0 0.0
    %515 = vmatpush1.msra.mxu0 0.0
    %516 = vmatprep.subr.mxu0 0.0
    %517 = vmatpush1.msra.mxu0 0.0
    %518 = vmatprep.subr.mxu0 0.0
    %519 = vmatpush1.msra.mxu0 0.0
    %520 = vmatprep.subr.mxu0 0.0
    %521 = vmatpush1.msra.mxu0 0.0
    %522 = vmatprep.subr.mxu0 0.0
    %523 = vmatpush1.msra.mxu0 0.0
    %524 = vmatprep.subr.mxu0 0.0
    %525 = vmatpush1.msra.mxu0 0.0
    %526 = vmatprep.subr.mxu0 0.0
    %527 = vmatpush1.msra.mxu0 0.0
    %528 = vmatprep.subr.mxu0 0.0
    %529 = vmatpush1.msra.mxu0 0.0
    %530 = vmatprep.subr.mxu0 0.0
    %531 = vmatpush1.msra.mxu0 0.0
    %532 = vmatprep.mubr.f32.mxu0 0.0
    %533 = vmatmul.mubr.f32.gmra.mrb[0].mxu0 %v466
    %v534 = vpop.f32.mrb[0].mxu0
    %v535 = vadd.f32 0.0, %v534
    %v536 = vpop.f32.mrb[0].mxu0
    %v537 = vadd.f32 0.0, %v536
    %538 = vdwg.mxu0
    %v539 = vadd.f32 %v462, %v535
    %v540 = vadd.f32 %v463, %v537
    %v541 = vxor.u32 %v539, 2147483648
    %v542 = vxor.u32 %v540, 2147483648
    %v543 = vmul.f32 %v541, 1.442695
    %v544 = vpow.pop %v543
    %v545 = vmul.f32 %v542, 1.442695
    %v546 = vpow.pop %v545
    %v547 = vadd.f32 %v544, 1.0
    %v548 = vadd.f32 %v546, 1.0
    %v549 = vrcp.pop %v547
    %v550 = vmul.f32 1.0, %v549
    %v551 = vrcp.pop %v548
    %v552 = vmul.f32 1.0, %v551
    %v553 = vtanh.pop %v540
    %v554 = vmul.f32 %v550, 0.0
    %556 = vrot.lane.b32.xlu0 %v553, 64
    %v557 = vpop.permute.xlu0 %556
    %v559 = vmul.f32 %v550, %v557
    %561 = vrot.lane.b32.xlu0 %v559, 64
    %v562 = vpop.permute.xlu0 %561
    %v564 = vadd.f32 %v554, %v562
    %v565 = vtanh.pop %v564
    %567 = vrot.lane.b32.xlu0 %v565, 64
    %v568 = vpop.permute.xlu0 %567
    %v570 = vmul.f32 %v552, %v568
    %571 = vst.msk [vmem:[#allocation3] sm:$0xff] %vm144, %v570
    %vm572 = vcmask 523520
    %573 = vst.msk [vmem:[#allocation3 + $0x38] sm:$0xff] %vm572, %v570
    %574 = vst.msk [vmem:[#allocation4 + $0x38] sm:$0xff] %vm144, %v570
    %575 = vst.msk [vmem:[#allocation4] sm:$0xff] %vm572, %v570
    %v576 = vld [vmem:[#allocation2 + $0x10] sm:$0xff]
    %v577 = vld [vmem:[#allocation2 + $0x18] sm:$0xff]
    %v579 = vsel %vm464, %v570, 0
    %581 = vmatprep.subr.mxu0 %v112
    %582 = vmatpush1.msra.mxu0 %v111
    %583 = vmatprep.subr.mxu0 %v114
    %584 = vmatpush1.msra.mxu0 %v113
    %585 = vmatprep.subr.mxu0 %v116
    %586 = vmatpush1.msra.mxu0 %v115
    %587 = vmatprep.subr.mxu0 %v118
    %588 = vmatpush1.msra.mxu0 %v117
    %589 = vmatprep.subr.mxu0 %v120
    %590 = vmatpush1.msra.mxu0 %v119
    %591 = vmatprep.subr.mxu0 %v122
    %592 = vmatpush1.msra.mxu0 %v121
    %593 = vmatprep.subr.mxu0 %v124
    %594 = vmatpush1.msra.mxu0 %v123
    %595 = vmatprep.subr.mxu0 %v126
    %596 = vmatpush1.msra.mxu0 %v125
    %597 = vmatprep.subr.mxu0 0.0
    %598 = vmatpush1.msra.mxu0 0.0
    %599 = vmatprep.subr.mxu0 0.0
    %600 = vmatpush1.msra.mxu0 0.0
    %601 = vmatprep.subr.mxu0 0.0
    %602 = vmatpush1.msra.mxu0 0.0
    %603 = vmatprep.subr.mxu0 0.0
    %604 = vmatpush1.msra.mxu0 0.0
    %605 = vmatprep.subr.mxu0 0.0
    %606 = vmatpush1.msra.mxu0 0.0
    %607 = vmatprep.subr.mxu0 0.0
    %608 = vmatpush1.msra.mxu0 0.0
    %609 = vmatprep.subr.mxu0 0.0
    %610 = vmatpush1.msra.mxu0 0.0
    %611 = vmatprep.subr.mxu0 0.0
    %612 = vmatpush1.msra.mxu0 0.0
    %613 = vmatprep.subr.mxu0 0.0
    %614 = vmatpush1.msra.mxu0 0.0
    %615 = vmatprep.subr.mxu0 0.0
    %616 = vmatpush1.msra.mxu0 0.0
    %617 = vmatprep.subr.mxu0 0.0
    %618 = vmatpush1.msra.mxu0 0.0
    %619 = vmatprep.subr.mxu0 0.0
    %620 = vmatpush1.msra.mxu0 0.0
    %621 = vmatprep.subr.mxu0 0.0
    %622 = vmatpush1.msra.mxu0 0.0
    %623 = vmatprep.subr.mxu0 0.0
    %624 = vmatpush1.msra.mxu0 0.0
    %625 = vmatprep.subr.mxu0 0.0
    %626 = vmatpush1.msra.mxu0 0.0
    %627 = vmatprep.subr.mxu0 0.0
    %628 = vmatpush1.msra.mxu0 0.0
    %629 = vmatprep.subr.mxu0 0.0
    %630 = vmatpush1.msra.mxu0 0.0
    %631 = vmatprep.subr.mxu0 0.0
    %632 = vmatpush1.msra.mxu0 0.0
    %633 = vmatprep.subr.mxu0 0.0
    %634 = vmatpush1.msra.mxu0 0.0
    %635 = vmatprep.subr.mxu0 0.0
    %636 = vmatpush1.msra.mxu0 0.0
    %637 = vmatprep.subr.mxu0 0.0
    %638 = vmatpush1.msra.mxu0 0.0
    %639 = vmatprep.subr.mxu0 0.0
    %640 = vmatpush1.msra.mxu0 0.0
    %641 = vmatprep.subr.mxu0 0.0
    %642 = vmatpush1.msra.mxu0 0.0
    %643 = vmatprep.subr.mxu0 0.0
    %644 = vmatpush1.msra.mxu0 0.0
    %645 = vmatprep.mubr.f32.mxu0 0.0
    %646 = vmatmul.mubr.f32.gmra.mrb[0].mxu0 %v579
    %v647 = vpop.f32.mrb[0].mxu0
    %v648 = vadd.f32 0.0, %v647
    %v649 = vpop.f32.mrb[0].mxu0
    %v650 = vadd.f32 0.0, %v649
    %651 = vdwg.mxu0
    %v652 = vadd.f32 %v576, %v648
    %v653 = vadd.f32 %v577, %v650
    %v654 = vxor.u32 %v652, 2147483648
    %v655 = vxor.u32 %v653, 2147483648
    %v656 = vmul.f32 %v654, 1.442695
    %v657 = vpow.pop %v656
    %v658 = vmul.f32 %v655, 1.442695
    %v659 = vpow.pop %v658
    %v660 = vadd.f32 %v657, 1.0
    %v661 = vadd.f32 %v659, 1.0
    %v662 = vrcp.pop %v660
    %v663 = vmul.f32 1.0, %v662
    %v664 = vrcp.pop %v661
    %v665 = vmul.f32 1.0, %v664
    %v666 = vtanh.pop %v653
    %v667 = vmul.f32 %v663, %v564
    %669 = vrot.lane.b32.xlu0 %v666, 64
    %v670 = vpop.permute.xlu0 %669
    %v672 = vmul.f32 %v663, %v670
    %674 = vrot.lane.b32.xlu0 %v672, 64
    %v675 = vpop.permute.xlu0 %674
    %v677 = vadd.f32 %v667, %v675
    %v678 = vtanh.pop %v677
    %680 = vrot.lane.b32.xlu0 %v678, 64
    %v681 = vpop.permute.xlu0 %680
    %v683 = vmul.f32 %v665, %v681
    %684 = vst.msk [vmem:[#allocation3 + $0x8] sm:$0xff] %vm144, %v683
    %685 = vst.msk [vmem:[#allocation3 + $0x30] sm:$0xff] %vm572, %v683
    %686 = vst.msk [vmem:[#allocation4 + $0x30] sm:$0xff] %vm144, %v683
    %687 = vst.msk [vmem:[#allocation4 + $0x8] sm:$0xff] %vm572, %v683
    %v688 = vld [vmem:[#allocation2 + $0x20] sm:$0xff]
    %v689 = vld [vmem:[#allocation2 + $0x28] sm:$0xff]
    %v691 = vsel %vm464, %v683, 0
    %693 = vmatprep.subr.mxu0 %v112
    %694 = vmatpush1.msra.mxu0 %v111
    %695 = vmatprep.subr.mxu0 %v114
    %696 = vmatpush1.msra.mxu0 %v113
    %697 = vmatprep.subr.mxu0 %v116
    %698 = vmatpush1.msra.mxu0 %v115
    %699 = vmatprep.subr.mxu0 %v118
    %700 = vmatpush1.msra.mxu0 %v117
    %701 = vmatprep.subr.mxu0 %v120
    %702 = vmatpush1.msra.mxu0 %v119
    %703 = vmatprep.subr.mxu0 %v122
    %704 = vmatpush1.msra.mxu0 %v121
    %705 = vmatprep.subr.mxu0 %v124
    %706 = vmatpush1.msra.mxu0 %v123
    %707 = vmatprep.subr.mxu0 %v126
    %708 = vmatpush1.msra.mxu0 %v125
    %709 = vmatprep.subr.mxu0 0.0
    %710 = vmatpush1.msra.mxu0 0.0
    %711 = vmatprep.subr.mxu0 0.0
    %712 = vmatpush1.msra.mxu0 0.0
    %713 = vmatprep.subr.mxu0 0.0
    %714 = vmatpush1.msra.mxu0 0.0
    %715 = vmatprep.subr.mxu0 0.0
    %716 = vmatpush1.msra.mxu0 0.0
    %717 = vmatprep.subr.mxu0 0.0
    %718 = vmatpush1.msra.mxu0 0.0
    %719 = vmatprep.subr.mxu0 0.0
    %720 = vmatpush1.msra.mxu0 0.0
    %721 = vmatprep.subr.mxu0 0.0
    %722 = vmatpush1.msra.mxu0 0.0
    %723 = vmatprep.subr.mxu0 0.0
    %724 = vmatpush1.msra.mxu0 0.0
    %725 = vmatprep.subr.mxu0 0.0
    %726 = vmatpush1.msra.mxu0 0.0
    %727 = vmatprep.subr.mxu0 0.0
    %728 = vmatpush1.msra.mxu0 0.0
    %729 = vmatprep.subr.mxu0 0.0
    %730 = vmatpush1.msra.mxu0 0.0
    %731 = vmatprep.subr.mxu0 0.0
    %732 = vmatpush1.msra.mxu0 0.0
    %733 = vmatprep.subr.mxu0 0.0
    %734 = vmatpush1.msra.mxu0 0.0
    %735 = vmatprep.subr.mxu0 0.0
    %736 = vmatpush1.msra.mxu0 0.0
    %737 = vmatprep.subr.mxu0 0.0
    %738 = vmatpush1.msra.mxu0 0.0
    %739 = vmatprep.subr.mxu0 0.0
    %740 = vmatpush1.msra.mxu0 0.0
    %741 = vmatprep.subr.mxu0 0.0
    %742 = vmatpush1.msra.mxu0 0.0
    %743 = vmatprep.subr.mxu0 0.0
    %744 = vmatpush1.msra.mxu0 0.0
    %745 = vmatprep.subr.mxu0 0.0
    %746 = vmatpush1.msra.mxu0 0.0
    %747 = vmatprep.subr.mxu0 0.0
    %748 = vmatpush1.msra.mxu0 0.0
    %749 = vmatprep.subr.mxu0 0.0
    %750 = vmatpush1.msra.mxu0 0.0
    %751 = vmatprep.subr.mxu0 0.0
    %752 = vmatpush1.msra.mxu0 0.0
    %753 = vmatprep.subr.mxu0 0.0
    %754 = vmatpush1.msra.mxu0 0.0
    %755 = vmatprep.subr.mxu0 0.0
    %756 = vmatpush1.msra.mxu0 0.0
    %757 = vmatprep.mubr.f32.mxu0 0.0
    %758 = vmatmul.mubr.f32.gmra.mrb[0].mxu0 %v691
    %v759 = vpop.f32.mrb[0].mxu0
    %v760 = vadd.f32 0.0, %v759
    %v761 = vpop.f32.mrb[0].mxu0
    %v762 = vadd.f32 0.0, %v761
    %763 = vdwg.mxu0
    %v764 = vadd.f32 %v688, %v760
    %v765 = vadd.f32 %v689, %v762
    %v766 = vxor.u32 %v764, 2147483648
    %v767 = vxor.u32 %v765, 2147483648
    %v768 = vmul.f32 %v766, 1.442695
    %v769 = vpow.pop %v768
    %v770 = vmul.f32 %v767, 1.442695
    %v771 = vpow.pop %v770
    %v772 = vadd.f32 %v769, 1.0
    %v773 = vadd.f32 %v771, 1.0
    %v774 = vrcp.pop %v772
    %v775 = vmul.f32 1.0, %v774
    %v776 = vrcp.pop %v773
    %v777 = vmul.f32 1.0, %v776
    %v778 = vtanh.pop %v765
    %v779 = vmul.f32 %v775, %v677
    %781 = vrot.lane.b32.xlu0 %v778, 64
    %v782 = vpop.permute.xlu0 %781
    %v784 = vmul.f32 %v775, %v782
    %786 = vrot.lane.b32.xlu0 %v784, 64
    %v787 = vpop.permute.xlu0 %786
    %v789 = vadd.f32 %v779, %v787
    %v790 = vtanh.pop %v789
    %792 = vrot.lane.b32.xlu0 %v790, 64
    %v793 = vpop.permute.xlu0 %792
    %v795 = vmul.f32 %v777, %v793
    %796 = vst.msk [vmem:[#allocation3 + $0x10] sm:$0xff] %vm144, %v795
    %797 = vst.msk [vmem:[#allocation3 + $0x28] sm:$0xff] %vm572, %v795
    %798 = vst.msk [vmem:[#allocation4 + $0x28] sm:$0xff] %vm144, %v795
    %799 = vst.msk [vmem:[#allocation4 + $0x10] sm:$0xff] %vm572, %v795
    %v800 = vld [vmem:[#allocation2 + $0x30] sm:$0xff]
    %v801 = vld [vmem:[#allocation2 + $0x38] sm:$0xff]
    %v803 = vsel %vm464, %v795, 0
    %805 = vmatprep.subr.mxu0 %v112
    %806 = vmatpush1.msra.mxu0 %v111
    %807 = vmatprep.subr.mxu0 %v114
    %808 = vmatpush1.msra.mxu0 %v113
    %809 = vmatprep.subr.mxu0 %v116
    %810 = vmatpush1.msra.mxu0 %v115
    %811 = vmatprep.subr.mxu0 %v118
    %812 = vmatpush1.msra.mxu0 %v117
    %813 = vmatprep.subr.mxu0 %v120
    %814 = vmatpush1.msra.mxu0 %v119
    %815 = vmatprep.subr.mxu0 %v122
    %816 = vmatpush1.msra.mxu0 %v121
    %817 = vmatprep.subr.mxu0 %v124
    %818 = vmatpush1.msra.mxu0 %v123
    %819 = vmatprep.subr.mxu0 %v126
    %820 = vmatpush1.msra.mxu0 %v125
    %821 = vmatprep.subr.mxu0 0.0
    %822 = vmatpush1.msra.mxu0 0.0
    %823 = vmatprep.subr.mxu0 0.0
    %824 = vmatpush1.msra.mxu0 0.0
    %825 = vmatprep.subr.mxu0 0.0
    %826 = vmatpush1.msra.mxu0 0.0
    %827 = vmatprep.subr.mxu0 0.0
    %828 = vmatpush1.msra.mxu0 0.0
    %829 = vmatprep.subr.mxu0 0.0
    %830 = vmatpush1.msra.mxu0 0.0
    %831 = vmatprep.subr.mxu0 0.0
    %832 = vmatpush1.msra.mxu0 0.0
    %833 = vmatprep.subr.mxu0 0.0
    %834 = vmatpush1.msra.mxu0 0.0
    %835 = vmatprep.subr.mxu0 0.0
    %836 = vmatpush1.msra.mxu0 0.0
    %837 = vmatprep.subr.mxu0 0.0
    %838 = vmatpush1.msra.mxu0 0.0
    %839 = vmatprep.subr.mxu0 0.0
    %840 = vmatpush1.msra.mxu0 0.0
    %841 = vmatprep.subr.mxu0 0.0
    %842 = vmatpush1.msra.mxu0 0.0
    %843 = vmatprep.subr.mxu0 0.0
    %844 = vmatpush1.msra.mxu0 0.0
    %845 = vmatprep.subr.mxu0 0.0
    %846 = vmatpush1.msra.mxu0 0.0
    %847 = vmatprep.subr.mxu0 0.0
    %848 = vmatpush1.msra.mxu0 0.0
    %849 = vmatprep.subr.mxu0 0.0
    %850 = vmatpush1.msra.mxu0 0.0
    %851 = vmatprep.subr.mxu0 0.0
    %852 = vmatpush1.msra.mxu0 0.0
    %853 = vmatprep.subr.mxu0 0.0
    %854 = vmatpush1.msra.mxu0 0.0
    %855 = vmatprep.subr.mxu0 0.0
    %856 = vmatpush1.msra.mxu0 0.0
    %857 = vmatprep.subr.mxu0 0.0
    %858 = vmatpush1.msra.mxu0 0.0
    %859 = vmatprep.subr.mxu0 0.0
    %860 = vmatpush1.msra.mxu0 0.0
    %861 = vmatprep.subr.mxu0 0.0
    %862 = vmatpush1.msra.mxu0 0.0
    %863 = vmatprep.subr.mxu0 0.0
    %864 = vmatpush1.msra.mxu0 0.0
    %865 = vmatprep.subr.mxu0 0.0
    %866 = vmatpush1.msra.mxu0 0.0
    %867 = vmatprep.subr.mxu0 0.0
    %868 = vmatpush1.msra.mxu0 0.0
    %869 = vmatprep.mubr.f32.mxu0 0.0
    %870 = vmatmul.mubr.f32.gmra.mrb[0].mxu0 %v803
    %v871 = vpop.f32.mrb[0].mxu0
    %v872 = vadd.f32 0.0, %v871
    %v873 = vpop.f32.mrb[0].mxu0
    %v874 = vadd.f32 0.0, %v873
    %875 = vdwg.mxu0
    %v876 = vadd.f32 %v800, %v872
    %v877 = vadd.f32 %v801, %v874
    %v878 = vxor.u32 %v876, 2147483648
    %v879 = vxor.u32 %v877, 2147483648
    %v880 = vmul.f32 %v878, 1.442695
    %v881 = vpow.pop %v880
    %v882 = vmul.f32 %v879, 1.442695
    %v883 = vpow.pop %v882
    %v884 = vadd.f32 %v881, 1.0
    %v885 = vadd.f32 %v883, 1.0
    %v886 = vrcp.pop %v884
    %v887 = vmul.f32 1.0, %v886
    %v888 = vrcp.pop %v885
    %v889 = vmul.f32 1.0, %v888
    %v890 = vtanh.pop %v877
    %v891 = vmul.f32 %v887, %v789
    %893 = vrot.lane.b32.xlu0 %v890, 64
    %v894 = vpop.permute.xlu0 %893
    %v896 = vmul.f32 %v887, %v894
    %898 = vrot.lane.b32.xlu0 %v896, 64
    %v899 = vpop.permute.xlu0 %898
    %v901 = vadd.f32 %v891, %v899
    %v902 = vtanh.pop %v901
    %904 = vrot.lane.b32.xlu0 %v902, 64
    %v905 = vpop.permute.xlu0 %904
    %v907 = vmul.f32 %v889, %v905
    %908 = vst.msk [vmem:[#allocation3 + $0x18] sm:$0xff] %vm144, %v907
    %909 = vst.msk [vmem:[#allocation3 + $0x20] sm:$0xff] %vm572, %v907
    %910 = vst.msk [vmem:[#allocation4 + $0x20] sm:$0xff] %vm144, %v907
    %911 = vst.msk [vmem:[#allocation4 + $0x18] sm:$0xff] %vm572, %v907
    %v912 = vld [vmem:[#allocation2 + $0x40] sm:$0xff]
    %v913 = vld [vmem:[#allocation2 + $0x48] sm:$0xff]
    %v915 = vsel %vm464, %v907, 0
    %917 = vmatprep.subr.mxu0 %v112
    %918 = vmatpush1.msra.mxu0 %v111
    %919 = vmatprep.subr.mxu0 %v114
    %920 = vmatpush1.msra.mxu0 %v113
    %921 = vmatprep.subr.mxu0 %v116
    %922 = vmatpush1.msra.mxu0 %v115
    %923 = vmatprep.subr.mxu0 %v118
    %924 = vmatpush1.msra.mxu0 %v117
    %925 = vmatprep.subr.mxu0 %v120
    %926 = vmatpush1.msra.mxu0 %v119
    %927 = vmatprep.subr.mxu0 %v122
    %928 = vmatpush1.msra.mxu0 %v121
    %929 = vmatprep.subr.mxu0 %v124
    %930 = vmatpush1.msra.mxu0 %v123
    %931 = vmatprep.subr.mxu0 %v126
    %932 = vmatpush1.msra.mxu0 %v125
    %933 = vmatprep.subr.mxu0 0.0
    %934 = vmatpush1.msra.mxu0 0.0
    %935 = vmatprep.subr.mxu0 0.0
    %936 = vmatpush1.msra.mxu0 0.0
    %937 = vmatprep.subr.mxu0 0.0
    %938 = vmatpush1.msra.mxu0 0.0
    %939 = vmatprep.subr.mxu0 0.0
    %940 = vmatpush1.msra.mxu0 0.0
    %941 = vmatprep.subr.mxu0 0.0
    %942 = vmatpush1.msra.mxu0 0.0
    %943 = vmatprep.subr.mxu0 0.0
    %944 = vmatpush1.msra.mxu0 0.0
    %945 = vmatprep.subr.mxu0 0.0
    %946 = vmatpush1.msra.mxu0 0.0
    %947 = vmatprep.subr.mxu0 0.0
    %948 = vmatpush1.msra.mxu0 0.0
    %949 = vmatprep.subr.mxu0 0.0
    %950 = vmatpush1.msra.mxu0 0.0
    %951 = vmatprep.subr.mxu0 0.0
    %952 = vmatpush1.msra.mxu0 0.0
    %953 = vmatprep.subr.mxu0 0.0
    %954 = vmatpush1.msra.mxu0 0.0
    %955 = vmatprep.subr.mxu0 0.0
    %956 = vmatpush1.msra.mxu0 0.0
    %957 = vmatprep.subr.mxu0 0.0
    %958 = vmatpush1.msra.mxu0 0.0
    %959 = vmatprep.subr.mxu0 0.0
    %960 = vmatpush1.msra.mxu0 0.0
    %961 = vmatprep.subr.mxu0 0.0
    %962 = vmatpush1.msra.mxu0 0.0
    %963 = vmatprep.subr.mxu0 0.0
    %964 = vmatpush1.msra.mxu0 0.0
    %965 = vmatprep.subr.mxu0 0.0
    %966 = vmatpush1.msra.mxu0 0.0
    %967 = vmatprep.subr.mxu0 0.0
    %968 = vmatpush1.msra.mxu0 0.0
    %969 = vmatprep.subr.mxu0 0.0
    %970 = vmatpush1.msra.mxu0 0.0
    %971 = vmatprep.subr.mxu0 0.0
    %972 = vmatpush1.msra.mxu0 0.0
    %973 = vmatprep.subr.mxu0 0.0
    %974 = vmatpush1.msra.mxu0 0.0
    %975 = vmatprep.subr.mxu0 0.0
    %976 = vmatpush1.msra.mxu0 0.0
    %977 = vmatprep.subr.mxu0 0.0
    %978 = vmatpush1.msra.mxu0 0.0
    %979 = vmatprep.subr.mxu0 0.0
    %980 = vmatpush1.msra.mxu0 0.0
    %981 = vmatprep.mubr.f32.mxu0 0.0
    %982 = vmatmul.mubr.f32.gmra.mrb[0].mxu0 %v915
    %v983 = vpop.f32.mrb[0].mxu0
    %v984 = vadd.f32 0.0, %v983
    %v985 = vpop.f32.mrb[0].mxu0
    %v986 = vadd.f32 0.0, %v985
    %987 = vdwg.mxu0
    %v988 = vadd.f32 %v912, %v984
    %v989 = vadd.f32 %v913, %v986
    %v990 = vxor.u32 %v988, 2147483648
    %v991 = vxor.u32 %v989, 2147483648
    %v992 = vmul.f32 %v990, 1.442695
    %v993 = vpow.pop %v992
    %v994 = vmul.f32 %v991, 1.442695
    %v995 = vpow.pop %v994
    %v996 = vadd.f32 %v993, 1.0
    %v997 = vadd.f32 %v995, 1.0
    %v998 = vrcp.pop %v996
    %v999 = vmul.f32 1.0, %v998
    %v1000 = vrcp.pop %v997
    %v1001 = vmul.f32 1.0, %v1000
    %v1002 = vtanh.pop %v989
    %v1003 = vmul.f32 %v999, %v901
    %1005 = vrot.lane.b32.xlu0 %v1002, 64
    %v1006 = vpop.permute.xlu0 %1005
    %v1008 = vmul.f32 %v999, %v1006
    %1010 = vrot.lane.b32.xlu0 %v1008, 64
    %v1011 = vpop.permute.xlu0 %1010
    %v1013 = vadd.f32 %v1003, %v1011
    %v1014 = vtanh.pop %v1013
    %1016 = vrot.lane.b32.xlu0 %v1014, 64
    %v1017 = vpop.permute.xlu0 %1016
    %v1019 = vmul.f32 %v1001, %v1017
    %1020 = vst.msk [vmem:[#allocation3 + $0x20] sm:$0xff] %vm144, %v1019
    %1021 = vst.msk [vmem:[#allocation3 + $0x18] sm:$0xff] %vm572, %v1019
    %1022 = vst.msk [vmem:[#allocation4 + $0x18] sm:$0xff] %vm144, %v1019
    %1023 = vst.msk [vmem:[#allocation4 + $0x20] sm:$0xff] %vm572, %v1019
    %v1024 = vld [vmem:[#allocation2 + $0x50] sm:$0xff]
    %v1025 = vld [vmem:[#allocation2 + $0x58] sm:$0xff]
    %v1027 = vsel %vm464, %v1019, 0
    %1029 = vmatprep.subr.mxu0 %v112
    %1030 = vmatpush1.msra.mxu0 %v111
    %1031 = vmatprep.subr.mxu0 %v114
    %1032 = vmatpush1.msra.mxu0 %v113
    %1033 = vmatprep.subr.mxu0 %v116
    %1034 = vmatpush1.msra.mxu0 %v115
    %1035 = vmatprep.subr.mxu0 %v118
    %1036 = vmatpush1.msra.mxu0 %v117
    %1037 = vmatprep.subr.mxu0 %v120
    %1038 = vmatpush1.msra.mxu0 %v119
    %1039 = vmatprep.subr.mxu0 %v122
    %1040 = vmatpush1.msra.mxu0 %v121
    %1041 = vmatprep.subr.mxu0 %v124
    %1042 = vmatpush1.msra.mxu0 %v123
    %1043 = vmatprep.subr.mxu0 %v126
    %1044 = vmatpush1.msra.mxu0 %v125
    %1045 = vmatprep.subr.mxu0 0.0
    %1046 = vmatpush1.msra.mxu0 0.0
    %1047 = vmatprep.subr.mxu0 0.0
    %1048 = vmatpush1.msra.mxu0 0.0
    %1049 = vmatprep.subr.mxu0 0.0
    %1050 = vmatpush1.msra.mxu0 0.0
    %1051 = vmatprep.subr.mxu0 0.0
    %1052 = vmatpush1.msra.mxu0 0.0
    %1053 = vmatprep.subr.mxu0 0.0
    %1054 = vmatpush1.msra.mxu0 0.0
    %1055 = vmatprep.subr.mxu0 0.0
    %1056 = vmatpush1.msra.mxu0 0.0
    %1057 = vmatprep.subr.mxu0 0.0
    %1058 = vmatpush1.msra.mxu0 0.0
    %1059 = vmatprep.subr.mxu0 0.0
    %1060 = vmatpush1.msra.mxu0 0.0
    %1061 = vmatprep.subr.mxu0 0.0
    %1062 = vmatpush1.msra.mxu0 0.0
    %1063 = vmatprep.subr.mxu0 0.0
    %1064 = vmatpush1.msra.mxu0 0.0
    %1065 = vmatprep.subr.mxu0 0.0
    %1066 = vmatpush1.msra.mxu0 0.0
    %1067 = vmatprep.subr.mxu0 0.0
    %1068 = vmatpush1.msra.mxu0 0.0
    %1069 = vmatprep.subr.mxu0 0.0
    %1070 = vmatpush1.msra.mxu0 0.0
    %1071 = vmatprep.subr.mxu0 0.0
    %1072 = vmatpush1.msra.mxu0 0.0
    %1073 = vmatprep.subr.mxu0 0.0
    %1074 = vmatpush1.msra.mxu0 0.0
    %1075 = vmatprep.subr.mxu0 0.0
    %1076 = vmatpush1.msra.mxu0 0.0
    %1077 = vmatprep.subr.mxu0 0.0
    %1078 = vmatpush1.msra.mxu0 0.0
    %1079 = vmatprep.subr.mxu0 0.0
    %1080 = vmatpush1.msra.mxu0 0.0
    %1081 = vmatprep.subr.mxu0 0.0
    %1082 = vmatpush1.msra.mxu0 0.0
    %1083 = vmatprep.subr.mxu0 0.0
    %1084 = vmatpush1.msra.mxu0 0.0
    %1085 = vmatprep.subr.mxu0 0.0
    %1086 = vmatpush1.msra.mxu0 0.0
    %1087 = vmatprep.subr.mxu0 0.0
    %1088 = vmatpush1.msra.mxu0 0.0
    %1089 = vmatprep.subr.mxu0 0.0
    %1090 = vmatpush1.msra.mxu0 0.0
    %1091 = vmatprep.subr.mxu0 0.0
    %1092 = vmatpush1.msra.mxu0 0.0
    %1093 = vmatprep.mubr.f32.mxu0 0.0
    %1094 = vmatmul.mubr.f32.gmra.mrb[0].mxu0 %v1027
    %v1095 = vpop.f32.mrb[0].mxu0
    %v1096 = vadd.f32 0.0, %v1095
    %v1097 = vpop.f32.mrb[0].mxu0
    %v1098 = vadd.f32 0.0, %v1097
    %1099 = vdwg.mxu0
    %v1100 = vadd.f32 %v1024, %v1096
    %v1101 = vadd.f32 %v1025, %v1098
    %v1102 = vxor.u32 %v1100, 2147483648
    %v1103 = vxor.u32 %v1101, 2147483648
    %v1104 = vmul.f32 %v1102, 1.442695
    %v1105 = vpow.pop %v1104
    %v1106 = vmul.f32 %v1103, 1.442695
    %v1107 = vpow.pop %v1106
    %v1108 = vadd.f32 %v1105, 1.0
    %v1109 = vadd.f32 %v1107, 1.0
    %v1110 = vrcp.pop %v1108
    %v1111 = vmul.f32 1.0, %v1110
    %v1112 = vrcp.pop %v1109
    %v1113 = vmul.f32 1.0, %v1112
    %v1114 = vtanh.pop %v1101
    %v1115 = vmul.f32 %v1111, %v1013
    %1117 = vrot.lane.b32.xlu0 %v1114, 64
    %v1118 = vpop.permute.xlu0 %1117
    %v1120 = vmul.f32 %v1111, %v1118
    %1122 = vrot.lane.b32.xlu0 %v1120, 64
    %v1123 = vpop.permute.xlu0 %1122
    %v1125 = vadd.f32 %v1115, %v1123
    %v1126 = vtanh.pop %v1125
    %1128 = vrot.lane.b32.xlu0 %v1126, 64
    %v1129 = vpop.permute.xlu0 %1128
    %v1131 = vmul.f32 %v1113, %v1129
    %1132 = vst.msk [vmem:[#allocation3 + $0x28] sm:$0xff] %vm144, %v1131
    %1133 = vst.msk [vmem:[#allocation3 + $0x10] sm:$0xff] %vm572, %v1131
    %1134 = vst.msk [vmem:[#allocation4 + $0x10] sm:$0xff] %vm144, %v1131
    %1135 = vst.msk [vmem:[#allocation4 + $0x28] sm:$0xff] %vm572, %v1131
    %v1136 = vld [vmem:[#allocation2 + $0x60] sm:$0xff]
    %v1137 = vld [vmem:[#allocation2 + $0x68] sm:$0xff]
    %v1139 = vsel %vm464, %v1131, 0
    %1141 = vmatprep.subr.mxu0 %v112
    %1142 = vmatpush1.msra.mxu0 %v111
    %1143 = vmatprep.subr.mxu0 %v114
    %1144 = vmatpush1.msra.mxu0 %v113
    %1145 = vmatprep.subr.mxu0 %v116
    %1146 = vmatpush1.msra.mxu0 %v115
    %1147 = vmatprep.subr.mxu0 %v118
    %1148 = vmatpush1.msra.mxu0 %v117
    %1149 = vmatprep.subr.mxu0 %v120
    %1150 = vmatpush1.msra.mxu0 %v119
    %1151 = vmatprep.subr.mxu0 %v122
    %1152 = vmatpush1.msra.mxu0 %v121
    %1153 = vmatprep.subr.mxu0 %v124
    %1154 = vmatpush1.msra.mxu0 %v123
    %1155 = vmatprep.subr.mxu0 %v126
    %1156 = vmatpush1.msra.mxu0 %v125
    %1157 = vmatprep.subr.mxu0 0.0
    %1158 = vmatpush1.msra.mxu0 0.0
    %1159 = vmatprep.subr.mxu0 0.0
    %1160 = vmatpush1.msra.mxu0 0.0
    %1161 = vmatprep.subr.mxu0 0.0
    %1162 = vmatpush1.msra.mxu0 0.0
    %1163 = vmatprep.subr.mxu0 0.0
    %1164 = vmatpush1.msra.mxu0 0.0
    %1165 = vmatprep.subr.mxu0 0.0
    %1166 = vmatpush1.msra.mxu0 0.0
    %1167 = vmatprep.subr.mxu0 0.0
    %1168 = vmatpush1.msra.mxu0 0.0
    %1169 = vmatprep.subr.mxu0 0.0
    %1170 = vmatpush1.msra.mxu0 0.0
    %1171 = vmatprep.subr.mxu0 0.0
    %1172 = vmatpush1.msra.mxu0 0.0
    %1173 = vmatprep.subr.mxu0 0.0
    %1174 = vmatpush1.msra.mxu0 0.0
    %1175 = vmatprep.subr.mxu0 0.0
    %1176 = vmatpush1.msra.mxu0 0.0
    %1177 = vmatprep.subr.mxu0 0.0
    %1178 = vmatpush1.msra.mxu0 0.0
    %1179 = vmatprep.subr.mxu0 0.0
    %1180 = vmatpush1.msra.mxu0 0.0
    %1181 = vmatprep.subr.mxu0 0.0
    %1182 = vmatpush1.msra.mxu0 0.0
    %1183 = vmatprep.subr.mxu0 0.0
    %1184 = vmatpush1.msra.mxu0 0.0
    %1185 = vmatprep.subr.mxu0 0.0
    %1186 = vmatpush1.msra.mxu0 0.0
    %1187 = vmatprep.subr.mxu0 0.0
    %1188 = vmatpush1.msra.mxu0 0.0
    %1189 = vmatprep.subr.mxu0 0.0
    %1190 = vmatpush1.msra.mxu0 0.0
    %1191 = vmatprep.subr.mxu0 0.0
    %1192 = vmatpush1.msra.mxu0 0.0
    %1193 = vmatprep.subr.mxu0 0.0
    %1194 = vmatpush1.msra.mxu0 0.0
    %1195 = vmatprep.subr.mxu0 0.0
    %1196 = vmatpush1.msra.mxu0 0.0
    %1197 = vmatprep.subr.mxu0 0.0
    %1198 = vmatpush1.msra.mxu0 0.0
    %1199 = vmatprep.subr.mxu0 0.0
    %1200 = vmatpush1.msra.mxu0 0.0
    %1201 = vmatprep.subr.mxu0 0.0
    %1202 = vmatpush1.msra.mxu0 0.0
    %1203 = vmatprep.subr.mxu0 0.0
    %1204 = vmatpush1.msra.mxu0 0.0
    %1205 = vmatprep.mubr.f32.mxu0 0.0
    %1206 = vmatmul.mubr.f32.gmra.mrb[0].mxu0 %v1139
    %v1207 = vpop.f32.mrb[0].mxu0
    %v1208 = vadd.f32 0.0, %v1207
    %v1209 = vpop.f32.mrb[0].mxu0
    %v1210 = vadd.f32 0.0, %v1209
    %1211 = vdwg.mxu0
    %v1212 = vadd.f32 %v1136, %v1208
    %v1213 = vadd.f32 %v1137, %v1210
    %v1214 = vxor.u32 %v1212, 2147483648
    %v1215 = vxor.u32 %v1213, 2147483648
    %v1216 = vmul.f32 %v1214, 1.442695
    %v1217 = vpow.pop %v1216
    %v1218 = vmul.f32 %v1215, 1.442695
    %v1219 = vpow.pop %v1218
    %v1220 = vadd.f32 %v1217, 1.0
    %v1221 = vadd.f32 %v1219, 1.0
    %v1222 = vrcp.pop %v1220
    %v1223 = vmul.f32 1.0, %v1222
    %v1224 = vrcp.pop %v1221
    %v1225 = vmul.f32 1.0, %v1224
    %v1226 = vtanh.pop %v1213
    %v1227 = vmul.f32 %v1223, %v1125
    %1229 = vrot.lane.b32.xlu0 %v1226, 64
    %v1230 = vpop.permute.xlu0 %1229
    %v1232 = vmul.f32 %v1223, %v1230
    %1234 = vrot.lane.b32.xlu0 %v1232, 64
    %v1235 = vpop.permute.xlu0 %1234
    %v1237 = vadd.f32 %v1227, %v1235
    %v1238 = vtanh.pop %v1237
    %1240 = vrot.lane.b32.xlu0 %v1238, 64
    %v1241 = vpop.permute.xlu0 %1240
    %v1243 = vmul.f32 %v1225, %v1241
    %1244 = vst.msk [vmem:[#allocation3 + $0x30] sm:$0xff] %vm144, %v1243
    %1245 = vst.msk [vmem:[#allocation3 + $0x8] sm:$0xff] %vm572, %v1243
    %1246 = vst.msk [vmem:[#allocation4 + $0x8] sm:$0xff] %vm144, %v1243
    %1247 = vst.msk [vmem:[#allocation4 + $0x30] sm:$0xff] %vm572, %v1243
    %v1248 = vld [vmem:[#allocation2 + $0x70] sm:$0xff]
    %v1249 = vld [vmem:[#allocation2 + $0x78] sm:$0xff]
    %v1251 = vsel %vm464, %v1243, 0
    %1253 = vmatprep.subr.mxu0 %v112
    %1254 = vmatpush1.msra.mxu0 %v111
    %1255 = vmatprep.subr.mxu0 %v114
    %1256 = vmatpush1.msra.mxu0 %v113
    %1257 = vmatprep.subr.mxu0 %v116
    %1258 = vmatpush1.msra.mxu0 %v115
    %1259 = vmatprep.subr.mxu0 %v118
    %1260 = vmatpush1.msra.mxu0 %v117
    %1261 = vmatprep.subr.mxu0 %v120
    %1262 = vmatpush1.msra.mxu0 %v119
    %1263 = vmatprep.subr.mxu0 %v122
    %1264 = vmatpush1.msra.mxu0 %v121
    %1265 = vmatprep.subr.mxu0 %v124
    %1266 = vmatpush1.msra.mxu0 %v123
    %1267 = vmatprep.subr.mxu0 %v126
    %1268 = vmatpush1.msra.mxu0 %v125
    %1269 = vmatprep.subr.mxu0 0.0
    %1270 = vmatpush1.msra.mxu0 0.0
    %1271 = vmatprep.subr.mxu0 0.0
    %1272 = vmatpush1.msra.mxu0 0.0
    %1273 = vmatprep.subr.mxu0 0.0
    %1274 = vmatpush1.msra.mxu0 0.0
    %1275 = vmatprep.subr.mxu0 0.0
    %1276 = vmatpush1.msra.mxu0 0.0
    %1277 = vmatprep.subr.mxu0 0.0
    %1278 = vmatpush1.msra.mxu0 0.0
    %1279 = vmatprep.subr.mxu0 0.0
    %1280 = vmatpush1.msra.mxu0 0.0
    %1281 = vmatprep.subr.mxu0 0.0
    %1282 = vmatpush1.msra.mxu0 0.0
    %1283 = vmatprep.subr.mxu0 0.0
    %1284 = vmatpush1.msra.mxu0 0.0
    %1285 = vmatprep.subr.mxu0 0.0
    %1286 = vmatpush1.msra.mxu0 0.0
    %1287 = vmatprep.subr.mxu0 0.0
    %1288 = vmatpush1.msra.mxu0 0.0
    %1289 = vmatprep.subr.mxu0 0.0
    %1290 = vmatpush1.msra.mxu0 0.0
    %1291 = vmatprep.subr.mxu0 0.0
    %1292 = vmatpush1.msra.mxu0 0.0
    %1293 = vmatprep.subr.mxu0 0.0
    %1294 = vmatpush1.msra.mxu0 0.0
    %1295 = vmatprep.subr.mxu0 0.0
    %1296 = vmatpush1.msra.mxu0 0.0
    %1297 = vmatprep.subr.mxu0 0.0
    %1298 = vmatpush1.msra.mxu0 0.0
    %1299 = vmatprep.subr.mxu0 0.0
    %1300 = vmatpush1.msra.mxu0 0.0
    %1301 = vmatprep.subr.mxu0 0.0
    %1302 = vmatpush1.msra.mxu0 0.0
    %1303 = vmatprep.subr.mxu0 0.0
    %1304 = vmatpush1.msra.mxu0 0.0
    %1305 = vmatprep.subr.mxu0 0.0
    %1306 = vmatpush1.msra.mxu0 0.0
    %1307 = vmatprep.subr.mxu0 0.0
    %1308 = vmatpush1.msra.mxu0 0.0
    %1309 = vmatprep.subr.mxu0 0.0
    %1310 = vmatpush1.msra.mxu0 0.0
    %1311 = vmatprep.subr.mxu0 0.0
    %1312 = vmatpush1.msra.mxu0 0.0
    %1313 = vmatprep.subr.mxu0 0.0
    %1314 = vmatpush1.msra.mxu0 0.0
    %1315 = vmatprep.subr.mxu0 0.0
    %1316 = vmatpush1.msra.mxu0 0.0
    %1317 = vmatprep.mubr.f32.mxu0 0.0
    %1318 = vmatmul.mubr.f32.gmra.mrb[0].mxu0 %v1251
    %v1319 = vpop.f32.mrb[0].mxu0
    %v1320 = vadd.f32 0.0, %v1319
    %v1321 = vpop.f32.mrb[0].mxu0
    %v1322 = vadd.f32 0.0, %v1321
    %1323 = vdwg.mxu0
    %v1324 = vadd.f32 %v1248, %v1320
    %v1325 = vadd.f32 %v1249, %v1322
    %v1326 = vxor.u32 %v1324, 2147483648
    %v1327 = vxor.u32 %v1325, 2147483648
    %v1328 = vmul.f32 %v1326, 1.442695
    %v1329 = vpow.pop %v1328
    %v1330 = vmul.f32 %v1327, 1.442695
    %v1331 = vpow.pop %v1330
    %v1332 = vadd.f32 %v1329, 1.0
    %v1333 = vadd.f32 %v1331, 1.0
    %v1334 = vrcp.pop %v1332
    %v1335 = vmul.f32 1.0, %v1334
    %v1336 = vrcp.pop %v1333
    %v1337 = vmul.f32 1.0, %v1336
    %v1338 = vtanh.pop %v1325
    %v1339 = vmul.f32 %v1335, %v1237
    %1341 = vrot.lane.b32.xlu0 %v1338, 64
    %v1342 = vpop.permute.xlu0 %1341
    %v1344 = vmul.f32 %v1335, %v1342
    %1346 = vrot.lane.b32.xlu0 %v1344, 64
    %v1347 = vpop.permute.xlu0 %1346
    %v1349 = vadd.f32 %v1339, %v1347
    %v1350 = vtanh.pop %v1349
    %1352 = vrot.lane.b32.xlu0 %v1350, 64
    %v1353 = vpop.permute.xlu0 %1352
    %v1355 = vmul.f32 %v1337, %v1353
    %1356 = vst.msk [vmem:[#allocation3 + $0x38] sm:$0xff] %vm144, %v1355
    %1357 = vst.msk [vmem:[#allocation3] sm:$0xff] %vm572, %v1355
    %1358 = vst.msk [vmem:[#allocation4] sm:$0xff] %vm144, %v1355
    %1359 = vst.msk [vmem:[#allocation4 + $0x38] sm:$0xff] %vm572, %v1355
    %1360 = vst.msk [vmem:[#allocation13] sm:$0xff] %vm144, %v1355
    %1362 = vrot.lane.b32.xlu0 %v1355, 96
    %v1363 = vpop.permute.xlu0 %1362
    %s1365 = scalar_lea.vmem [#allocation13], 8
    %1366 = vst.msk [vmem:[%s1365] sm:$0xff] %vm144, %v1363
    %1368 = vrot.lane.b32.xlu0 %v1349, 64
    %v1369 = vpop.permute.xlu0 %1368
    %1371 = vst.msk [vmem:[#allocation14] sm:$0xff] %vm144, %v1369
    %1372 = vrot.lane.b32.xlu0 %v1349, 32
    %v1373 = vpop.permute.xlu0 %1372
    %s1375 = scalar_lea.vmem [#allocation14], 8
    %1376 = vst.msk [vmem:[%s1375] sm:$0xff] %vm144, %v1373
    %v1377 = vld [vmem:[#allocation8] sm:$0xff]
    %v1378 = vld [vmem:[#allocation8 + $0x8] sm:$0xff]
    %v1379 = vld [vmem:[#allocation8 + $0x10] sm:$0xff]
    %v1380 = vld [vmem:[#allocation8 + $0x18] sm:$0xff]
    %v1381 = vld [vmem:[#allocation8 + $0x20] sm:$0xff]
    %v1382 = vld [vmem:[#allocation8 + $0x28] sm:$0xff]
    %v1383 = vld [vmem:[#allocation8 + $0x30] sm:$0xff]
    %v1384 = vld [vmem:[#allocation8 + $0x38] sm:$0xff]
    %v1385 = vld [vmem:[#allocation8 + $0x40] sm:$0xff]
    %v1386 = vld [vmem:[#allocation8 + $0x48] sm:$0xff]
    %v1387 = vld [vmem:[#allocation8 + $0x50] sm:$0xff]
    %v1388 = vld [vmem:[#allocation8 + $0x58] sm:$0xff]
    %v1389 = vld [vmem:[#allocation8 + $0x60] sm:$0xff]
    %v1390 = vld [vmem:[#allocation8 + $0x68] sm:$0xff]
    %v1391 = vld [vmem:[#allocation8 + $0x70] sm:$0xff]
    %v1392 = vld [vmem:[#allocation8 + $0x78] sm:$0xff]
    %v1393 = vld [vmem:[#allocation10] sm:$0xff]
    %v1394 = vld [vmem:[#allocation10 + $0x8] sm:$0xff]
    %v1395 = vld [vmem:[#allocation10 + $0x10] sm:$0xff]
    %v1396 = vld [vmem:[#allocation10 + $0x18] sm:$0xff]
    %v1397 = vld [vmem:[#allocation10 + $0x20] sm:$0xff]
    %v1398 = vld [vmem:[#allocation10 + $0x28] sm:$0xff]
    %v1399 = vld [vmem:[#allocation10 + $0x30] sm:$0xff]
    %v1400 = vld [vmem:[#allocation10 + $0x38] sm:$0xff]
    %v1401 = vld [vmem:[#allocation10 + $0x40] sm:$0xff]
    %v1402 = vld [vmem:[#allocation10 + $0x48] sm:$0xff]
    %v1403 = vld [vmem:[#allocation10 + $0x50] sm:$0xff]
    %v1404 = vld [vmem:[#allocation10 + $0x58] sm:$0xff]
    %v1405 = vld [vmem:[#allocation10 + $0x60] sm:$0xff]
    %v1406 = vld [vmem:[#allocation10 + $0x68] sm:$0xff]
    %v1407 = vld [vmem:[#allocation10 + $0x70] sm:$0xff]
    %v1408 = vld [vmem:[#allocation10 + $0x78] sm:$0xff]
    %v1409 = vld [vmem:[#allocation11] sm:$0xff]
    %v1410 = vld [vmem:[#allocation11 + $0x8] sm:$0xff]
    %v1411 = vld [vmem:[#allocation11 + $0x10] sm:$0xff]
    %v1412 = vld [vmem:[#allocation11 + $0x18] sm:$0xff]
    %v1413 = vld [vmem:[#allocation11 + $0x20] sm:$0xff]
    %v1414 = vld [vmem:[#allocation11 + $0x28] sm:$0xff]
    %v1415 = vld [vmem:[#allocation11 + $0x30] sm:$0xff]
    %v1416 = vld [vmem:[#allocation11 + $0x38] sm:$0xff]
    %v1417 = vld [vmem:[#allocation11 + $0x40] sm:$0xff]
    %v1418 = vld [vmem:[#allocation11 + $0x48] sm:$0xff]
    %v1419 = vld [vmem:[#allocation11 + $0x50] sm:$0xff]
    %v1420 = vld [vmem:[#allocation11 + $0x58] sm:$0xff]
    %v1421 = vld [vmem:[#allocation11 + $0x60] sm:$0xff]
    %v1422 = vld [vmem:[#allocation11 + $0x68] sm:$0xff]
    %v1423 = vld [vmem:[#allocation11 + $0x70] sm:$0xff]
    %v1424 = vld [vmem:[#allocation11 + $0x78] sm:$0xff]
    %v1425 = vld [vmem:[%s9] sm:$0x3]
    %v1426 = vld [vmem:[#allocation3] sm:$0xff]
    %v1427 = vld [vmem:[#allocation3 + $0x8] sm:$0xff]
    %v1428 = vld [vmem:[#allocation3 + $0x10] sm:$0xff]
    %v1429 = vld [vmem:[#allocation3 + $0x18] sm:$0xff]
    %v1430 = vld [vmem:[#allocation3 + $0x20] sm:$0xff]
    %v1431 = vld [vmem:[#allocation3 + $0x28] sm:$0xff]
    %v1432 = vld [vmem:[#allocation3 + $0x30] sm:$0xff]
    %v1433 = vld [vmem:[#allocation3 + $0x38] sm:$0xff]
    %v1434 = vld [vmem:[#allocation4] sm:$0xff]
    %v1435 = vld [vmem:[#allocation4 + $0x8] sm:$0xff]
    %v1436 = vld [vmem:[#allocation4 + $0x10] sm:$0xff]
    %v1437 = vld [vmem:[#allocation4 + $0x18] sm:$0xff]
    %v1438 = vld [vmem:[#allocation4 + $0x20] sm:$0xff]
    %v1439 = vld [vmem:[#allocation4 + $0x28] sm:$0xff]
    %v1440 = vld [vmem:[#allocation4 + $0x30] sm:$0xff]
    %v1441 = vld [vmem:[#allocation4 + $0x38] sm:$0xff]
    %v1443 = vsel %vm464, %v1434, 0
    %v1446 = vsel %vm464, %v1435, 0
    %v1449 = vsel %vm464, %v1436, 0
    %v1452 = vsel %vm464, %v1437, 0
    %v1455 = vsel %vm464, %v1438, 0
    %v1458 = vsel %vm464, %v1439, 0
    %v1461 = vsel %vm464, %v1440, 0
    %v1464 = vsel %vm464, %v1441, 0
    %1466 = vmatprep.subr.mxu0 %v1394
    %1467 = vmatpush1.msra.mxu0 %v1393
    %1468 = vmatprep.subr.mxu0 %v1396
    %1469 = vmatpush1.msra.mxu0 %v1395
    %1470 = vmatprep.subr.mxu0 %v1398
    %1471 = vmatpush1.msra.mxu0 %v1397
    %1472 = vmatprep.subr.mxu0 %v1400
    %1473 = vmatpush1.msra.mxu0 %v1399
    %1474 = vmatprep.subr.mxu0 %v1402
    %1475 = vmatpush1.msra.mxu0 %v1401
    %1476 = vmatprep.subr.mxu0 %v1404
    %1477 = vmatpush1.msra.mxu0 %v1403
    %1478 = vmatprep.subr.mxu0 %v1406
    %1479 = vmatpush1.msra.mxu0 %v1405
    %1480 = vmatprep.subr.mxu0 %v1408
    %1481 = vmatpush1.msra.mxu0 %v1407
    %1482 = vmatprep.subr.mxu0 0.0
    %1483 = vmatpush1.msra.mxu0 0.0
    %1484 = vmatprep.subr.mxu0 0.0
    %1485 = vmatpush1.msra.mxu0 0.0
    %1486 = vmatprep.subr.mxu0 0.0
    %1487 = vmatpush1.msra.mxu0 0.0
    %1488 = vmatprep.subr.mxu0 0.0
    %1489 = vmatpush1.msra.mxu0 0.0
    %1490 = vmatprep.subr.mxu0 0.0
    %1491 = vmatpush1.msra.mxu0 0.0
    %1492 = vmatprep.subr.mxu0 0.0
    %1493 = vmatpush1.msra.mxu0 0.0
    %1494 = vmatprep.subr.mxu0 0.0
    %1495 = vmatpush1.msra.mxu0 0.0
    %1496 = vmatprep.subr.mxu0 0.0
    %1497 = vmatpush1.msra.mxu0 0.0
    %1498 = vmatprep.subr.mxu0 0.0
    %1499 = vmatpush1.msra.mxu0 0.0
    %1500 = vmatprep.subr.mxu0 0.0
    %1501 = vmatpush1.msra.mxu0 0.0
    %1502 = vmatprep.subr.mxu0 0.0
    %1503 = vmatpush1.msra.mxu0 0.0
    %1504 = vmatprep.subr.mxu0 0.0
    %1505 = vmatpush1.msra.mxu0 0.0
    %1506 = vmatprep.subr.mxu0 0.0
    %1507 = vmatpush1.msra.mxu0 0.0
    %1508 = vmatprep.subr.mxu0 0.0
    %1509 = vmatpush1.msra.mxu0 0.0
    %1510 = vmatprep.subr.mxu0 0.0
    %1511 = vmatpush1.msra.mxu0 0.0
    %1512 = vmatprep.subr.mxu0 0.0
    %1513 = vmatpush1.msra.mxu0 0.0
    %1514 = vmatprep.subr.mxu0 0.0
    %1515 = vmatpush1.msra.mxu0 0.0
    %1516 = vmatprep.subr.mxu0 0.0
    %1517 = vmatpush1.msra.mxu0 0.0
    %1518 = vmatprep.subr.mxu0 0.0
    %1519 = vmatpush1.msra.mxu0 0.0
    %1520 = vmatprep.subr.mxu0 0.0
    %1521 = vmatpush1.msra.mxu0 0.0
    %1522 = vmatprep.subr.mxu0 0.0
    %1523 = vmatpush1.msra.mxu0 0.0
    %1524 = vmatprep.subr.mxu0 0.0
    %1525 = vmatpush1.msra.mxu0 0.0
    %1526 = vmatprep.subr.mxu0 0.0
    %1527 = vmatpush1.msra.mxu0 0.0
    %1528 = vmatprep.subr.mxu0 0.0
    %1529 = vmatpush1.msra.mxu0 0.0
    %1530 = vmatprep.mubr.f32.mxu0 0.0
    %1531 = vmatmul.mubr.f32.gmra.mrb[0].mxu0 %v1443
    %v1532 = vpop.f32.mrb[0].mxu0
    %v1533 = vadd.f32 0.0, %v1532
    %v1534 = vpop.f32.mrb[0].mxu0
    %v1535 = vadd.f32 0.0, %v1534
    %1536 = vmatprep.mubr.f32.mxu0 0.0
    %1537 = vmatmul.mubr.f32.gmra.mrb[0].mxu0 %v1446
    %v1538 = vpop.f32.mrb[0].mxu0
    %v1539 = vadd.f32 0.0, %v1538
    %v1540 = vpop.f32.mrb[0].mxu0
    %v1541 = vadd.f32 0.0, %v1540
    %1542 = vmatprep.mubr.f32.mxu0 0.0
    %1543 = vmatmul.mubr.f32.gmra.mrb[0].mxu0 %v1449
    %v1544 = vpop.f32.mrb[0].mxu0
    %v1545 = vadd.f32 0.0, %v1544
    %v1546 = vpop.f32.mrb[0].mxu0
    %v1547 = vadd.f32 0.0, %v1546
    %1548 = vmatprep.mubr.f32.mxu0 0.0
    %1549 = vmatmul.mubr.f32.gmra.mrb[0].mxu0 %v1452
    %v1550 = vpop.f32.mrb[0].mxu0
    %v1551 = vadd.f32 0.0, %v1550
    %v1552 = vpop.f32.mrb[0].mxu0
    %v1553 = vadd.f32 0.0, %v1552
    %1554 = vmatprep.mubr.f32.mxu0 0.0
    %1555 = vmatmul.mubr.f32.gmra.mrb[0].mxu0 %v1455
    %v1556 = vpop.f32.mrb[0].mxu0
    %v1557 = vadd.f32 0.0, %v1556
    %v1558 = vpop.f32.mrb[0].mxu0
    %v1559 = vadd.f32 0.0, %v1558
    %1560 = vmatprep.mubr.f32.mxu0 0.0
    %1561 = vmatmul.mubr.f32.gmra.mrb[0].mxu0 %v1458
    %v1562 = vpop.f32.mrb[0].mxu0
    %v1563 = vadd.f32 0.0, %v1562
    %v1564 = vpop.f32.mrb[0].mxu0
    %v1565 = vadd.f32 0.0, %v1564
    %1566 = vmatprep.mubr.f32.mxu0 0.0
    %1567 = vmatmul.mubr.f32.gmra.mrb[0].mxu0 %v1461
    %v1568 = vpop.f32.mrb[0].mxu0
    %v1569 = vadd.f32 0.0, %v1568
    %v1570 = vpop.f32.mrb[0].mxu0
    %v1571 = vadd.f32 0.0, %v1570
    %1572 = vmatprep.mubr.f32.mxu0 0.0
    %1573 = vmatmul.mubr.f32.gmra.mrb[0].mxu0 %v1464
    %v1574 = vpop.f32.mrb[0].mxu0
    %v1575 = vadd.f32 0.0, %v1574
    %v1576 = vpop.f32.mrb[0].mxu0
    %v1577 = vadd.f32 0.0, %v1576
    %1578 = vdwg.mxu0
    %v1580 = vsel %vm464, %v1426, 0
    %v1583 = vsel %vm464, %v1427, 0
    %v1586 = vsel %vm464, %v1428, 0
    %v1589 = vsel %vm464, %v1429, 0
    %v1592 = vsel %vm464, %v1430, 0
    %v1595 = vsel %vm464, %v1431, 0
    %v1598 = vsel %vm464, %v1432, 0
    %v1601 = vsel %vm464, %v1433, 0
    %1603 = vmatprep.subr.mxu0 %v1378
    %1604 = vmatpush1.msra.mxu0 %v1377
    %1605 = vmatprep.subr.mxu0 %v1380
    %1606 = vmatpush1.msra.mxu0 %v1379
    %1607 = vmatprep.subr.mxu0 %v1382
    %1608 = vmatpush1.msra.mxu0 %v1381
    %1609 = vmatprep.subr.mxu0 %v1384
    %1610 = vmatpush1.msra.mxu0 %v1383
    %1611 = vmatprep.subr.mxu0 %v1386
    %1612 = vmatpush1.msra.mxu0 %v1385
    %1613 = vmatprep.subr.mxu0 %v1388
    %1614 = vmatpush1.msra.mxu0 %v1387
    %1615 = vmatprep.subr.mxu0 %v1390
    %1616 = vmatpush1.msra.mxu0 %v1389
    %1617 = vmatprep.subr.mxu0 %v1392
    %1618 = vmatpush1.msra.mxu0 %v1391
    %1619 = vmatprep.subr.mxu0 0.0
    %1620 = vmatpush1.msra.mxu0 0.0
    %1621 = vmatprep.subr.mxu0 0.0
    %1622 = vmatpush1.msra.mxu0 0.0
    %1623 = vmatprep.subr.mxu0 0.0
    %1624 = vmatpush1.msra.mxu0 0.0
    %1625 = vmatprep.subr.mxu0 0.0
    %1626 = vmatpush1.msra.mxu0 0.0
    %1627 = vmatprep.subr.mxu0 0.0
    %1628 = vmatpush1.msra.mxu0 0.0
    %1629 = vmatprep.subr.mxu0 0.0
    %1630 = vmatpush1.msra.mxu0 0.0
    %1631 = vmatprep.subr.mxu0 0.0
    %1632 = vmatpush1.msra.mxu0 0.0
    %1633 = vmatprep.subr.mxu0 0.0
    %1634 = vmatpush1.msra.mxu0 0.0
    %1635 = vmatprep.subr.mxu0 0.0
    %1636 = vmatpush1.msra.mxu0 0.0
    %1637 = vmatprep.subr.mxu0 0.0
    %1638 = vmatpush1.msra.mxu0 0.0
    %1639 = vmatprep.subr.mxu0 0.0
    %1640 = vmatpush1.msra.mxu0 0.0
    %1641 = vmatprep.subr.mxu0 0.0
    %1642 = vmatpush1.msra.mxu0 0.0
    %1643 = vmatprep.subr.mxu0 0.0
    %1644 = vmatpush1.msra.mxu0 0.0
    %1645 = vmatprep.subr.mxu0 0.0
    %1646 = vmatpush1.msra.mxu0 0.0
    %1647 = vmatprep.subr.mxu0 0.0
    %1648 = vmatpush1.msra.mxu0 0.0
    %1649 = vmatprep.subr.mxu0 0.0
    %1650 = vmatpush1.msra.mxu0 0.0
    %1651 = vmatprep.subr.mxu0 0.0
    %1652 = vmatpush1.msra.mxu0 0.0
    %1653 = vmatprep.subr.mxu0 0.0
    %1654 = vmatpush1.msra.mxu0 0.0
    %1655 = vmatprep.subr.mxu0 0.0
    %1656 = vmatpush1.msra.mxu0 0.0
    %1657 = vmatprep.subr.mxu0 0.0
    %1658 = vmatpush1.msra.mxu0 0.0
    %1659 = vmatprep.subr.mxu0 0.0
    %1660 = vmatpush1.msra.mxu0 0.0
    %1661 = vmatprep.subr.mxu0 0.0
    %1662 = vmatpush1.msra.mxu0 0.0
    %1663 = vmatprep.subr.mxu0 0.0
    %1664 = vmatpush1.msra.mxu0 0.0
    %1665 = vmatprep.subr.mxu0 0.0
    %1666 = vmatpush1.msra.mxu0 0.0
    %1667 = vmatprep.mubr.f32.mxu0 0.0
    %1668 = vmatmul.mubr.f32.gmra.mrb[0].mxu0 %v1580
    %v1669 = vpop.f32.mrb[0].mxu0
    %v1670 = vadd.f32 %v1533, %v1669
    %v1671 = vpop.f32.mrb[0].mxu0
    %v1672 = vadd.f32 %v1535, %v1671
    %1673 = vmatprep.mubr.f32.mxu0 0.0
    %1674 = vmatmul.mubr.f32.gmra.mrb[0].mxu0 %v1583
    %v1675 = vpop.f32.mrb[0].mxu0
    %v1676 = vadd.f32 %v1539, %v1675
    %v1677 = vpop.f32.mrb[0].mxu0
    %v1678 = vadd.f32 %v1541, %v1677
    %1679 = vmatprep.mubr.f32.mxu0 0.0
    %1680 = vmatmul.mubr.f32.gmra.mrb[0].mxu0 %v1586
    %v1681 = vpop.f32.mrb[0].mxu0
    %v1682 = vadd.f32 %v1545, %v1681
    %v1683 = vpop.f32.mrb[0].mxu0
    %v1684 = vadd.f32 %v1547, %v1683
    %1685 = vmatprep.mubr.f32.mxu0 0.0
    %1686 = vmatmul.mubr.f32.gmra.mrb[0].mxu0 %v1589
    %v1687 = vpop.f32.mrb[0].mxu0
    %v1688 = vadd.f32 %v1551, %v1687
    %v1689 = vpop.f32.mrb[0].mxu0
    %v1690 = vadd.f32 %v1553, %v1689
    %1691 = vmatprep.mubr.f32.mxu0 0.0
    %1692 = vmatmul.mubr.f32.gmra.mrb[0].mxu0 %v1592
    %v1693 = vpop.f32.mrb[0].mxu0
    %v1694 = vadd.f32 %v1557, %v1693
    %v1695 = vpop.f32.mrb[0].mxu0
    %v1696 = vadd.f32 %v1559, %v1695
    %1697 = vmatprep.mubr.f32.mxu0 0.0
    %1698 = vmatmul.mubr.f32.gmra.mrb[0].mxu0 %v1595
    %v1699 = vpop.f32.mrb[0].mxu0
    %v1700 = vadd.f32 %v1563, %v1699
    %v1701 = vpop.f32.mrb[0].mxu0
    %v1702 = vadd.f32 %v1565, %v1701
    %1703 = vmatprep.mubr.f32.mxu0 0.0
    %1704 = vmatmul.mubr.f32.gmra.mrb[0].mxu0 %v1598
    %v1705 = vpop.f32.mrb[0].mxu0
    %v1706 = vadd.f32 %v1569, %v1705
    %v1707 = vpop.f32.mrb[0].mxu0
    %v1708 = vadd.f32 %v1571, %v1707
    %1709 = vmatprep.mubr.f32.mxu0 0.0
    %1710 = vmatmul.mubr.f32.gmra.mrb[0].mxu0 %v1601
    %v1711 = vpop.f32.mrb[0].mxu0
    %v1712 = vadd.f32 %v1575, %v1711
    %v1713 = vpop.f32.mrb[0].mxu0
    %v1714 = vadd.f32 %v1577, %v1713
    %1715 = vdwg.mxu0
    %v1717 = vlaneseq
    %v1718 = vshrl.u32 %v1717, 7
    %v1719 = vsub.s32 0, %v1718
    %v1720 = vrot.slane %v1425, %v1719
    %v1721 = vlaneseq
    %v1722 = vshrl.u32 %v1721, 7
    %v1723 = vsub.s32 1, %v1722
    %v1724 = vrot.slane %v1425, %v1723
    %v1727 = vadd.f32 %v1670, %v1720
    %v1728 = vadd.f32 %v1672, %v1724
    %v1729 = vadd.f32 %v1676, %v1720
    %v1730 = vadd.f32 %v1678, %v1724
    %v1731 = vadd.f32 %v1682, %v1720
    %v1732 = vadd.f32 %v1684, %v1724
    %v1733 = vadd.f32 %v1688, %v1720
    %v1734 = vadd.f32 %v1690, %v1724
    %v1735 = vadd.f32 %v1694, %v1720
    %v1736 = vadd.f32 %v1696, %v1724
    %v1737 = vadd.f32 %v1700, %v1720
    %v1738 = vadd.f32 %v1702, %v1724
    %v1739 = vadd.f32 %v1706, %v1720
    %v1740 = vadd.f32 %v1708, %v1724
    %v1741 = vadd.f32 %v1712, %v1720
    %v1742 = vadd.f32 %v1714, %v1724
    %1743 = vst [vmem:[#allocation2] sm:$0xff] %v1727
    %1744 = vst [vmem:[#allocation2 + $0x8] sm:$0xff] %v1728
    %1745 = vst [vmem:[#allocation2 + $0x10] sm:$0xff] %v1729
    %1746 = vst [vmem:[#allocation2 + $0x18] sm:$0xff] %v1730
    %1747 = vst [vmem:[#allocation2 + $0x20] sm:$0xff] %v1731
    %1748 = vst [vmem:[#allocation2 + $0x28] sm:$0xff] %v1732
    %1749 = vst [vmem:[#allocation2 + $0x30] sm:$0xff] %v1733
    %1750 = vst [vmem:[#allocation2 + $0x38] sm:$0xff] %v1734
    %1751 = vst [vmem:[#allocation2 + $0x40] sm:$0xff] %v1735
    %1752 = vst [vmem:[#allocation2 + $0x48] sm:$0xff] %v1736
    %1753 = vst [vmem:[#allocation2 + $0x50] sm:$0xff] %v1737
    %1754 = vst [vmem:[#allocation2 + $0x58] sm:$0xff] %v1738
    %1755 = vst [vmem:[#allocation2 + $0x60] sm:$0xff] %v1739
    %1756 = vst [vmem:[#allocation2 + $0x68] sm:$0xff] %v1740
    %1757 = vst [vmem:[#allocation2 + $0x70] sm:$0xff] %v1741
    %1758 = vst [vmem:[#allocation2 + $0x78] sm:$0xff] %v1742
    %v1759 = vld [vmem:[#allocation2] sm:$0xff]
    %v1760 = vld [vmem:[#allocation2 + $0x8] sm:$0xff]
    %1761 = vmatprep.subr.mxu0 %v1410
    %1762 = vmatpush1.msra.mxu0 %v1409
    %1763 = vmatprep.subr.mxu0 %v1412
    %1764 = vmatpush1.msra.mxu0 %v1411
    %1765 = vmatprep.subr.mxu0 %v1414
    %1766 = vmatpush1.msra.mxu0 %v1413
    %1767 = vmatprep.subr.mxu0 %v1416
    %1768 = vmatpush1.msra.mxu0 %v1415
    %1769 = vmatprep.subr.mxu0 %v1418
    %1770 = vmatpush1.msra.mxu0 %v1417
    %1771 = vmatprep.subr.mxu0 %v1420
    %1772 = vmatpush1.msra.mxu0 %v1419
    %1773 = vmatprep.subr.mxu0 %v1422
    %1774 = vmatpush1.msra.mxu0 %v1421
    %1775 = vmatprep.subr.mxu0 %v1424
    %1776 = vmatpush1.msra.mxu0 %v1423
    %1777 = vmatprep.subr.mxu0 0.0
    %1778 = vmatpush1.msra.mxu0 0.0
    %1779 = vmatprep.subr.mxu0 0.0
    %1780 = vmatpush1.msra.mxu0 0.0
    %1781 = vmatprep.subr.mxu0 0.0
    %1782 = vmatpush1.msra.mxu0 0.0
    %1783 = vmatprep.subr.mxu0 0.0
    %1784 = vmatpush1.msra.mxu0 0.0
    %1785 = vmatprep.subr.mxu0 0.0
    %1786 = vmatpush1.msra.mxu0 0.0
    %1787 = vmatprep.subr.mxu0 0.0
    %1788 = vmatpush1.msra.mxu0 0.0
    %1789 = vmatprep.subr.mxu0 0.0
    %1790 = vmatpush1.msra.mxu0 0.0
    %1791 = vmatprep.subr.mxu0 0.0
    %1792 = vmatpush1.msra.mxu0 0.0
    %1793 = vmatprep.subr.mxu0 0.0
    %1794 = vmatpush1.msra.mxu0 0.0
    %1795 = vmatprep.subr.mxu0 0.0
    %1796 = vmatpush1.msra.mxu0 0.0
    %1797 = vmatprep.subr.mxu0 0.0
    %1798 = vmatpush1.msra.mxu0 0.0
    %1799 = vmatprep.subr.mxu0 0.0
    %1800 = vmatpush1.msra.mxu0 0.0
    %1801 = vmatprep.subr.mxu0 0.0
    %1802 = vmatpush1.msra.mxu0 0.0
    %1803 = vmatprep.subr.mxu0 0.0
    %1804 = vmatpush1.msra.mxu0 0.0
    %1805 = vmatprep.subr.mxu0 0.0
    %1806 = vmatpush1.msra.mxu0 0.0
    %1807 = vmatprep.subr.mxu0 0.0
    %1808 = vmatpush1.msra.mxu0 0.0
    %1809 = vmatprep.subr.mxu0 0.0
    %1810 = vmatpush1.msra.mxu0 0.0
    %1811 = vmatprep.subr.mxu0 0.0
    %1812 = vmatpush1.msra.mxu0 0.0
    %1813 = vmatprep.subr.mxu0 0.0
    %1814 = vmatpush1.msra.mxu0 0.0
    %1815 = vmatprep.subr.mxu0 0.0
    %1816 = vmatpush1.msra.mxu0 0.0
    %1817 = vmatprep.subr.mxu0 0.0
    %1818 = vmatpush1.msra.mxu0 0.0
    %1819 = vmatprep.subr.mxu0 0.0
    %1820 = vmatpush1.msra.mxu0 0.0
    %1821 = vmatprep.subr.mxu0 0.0
    %1822 = vmatpush1.msra.mxu0 0.0
    %1823 = vmatprep.subr.mxu0 0.0
    %1824 = vmatpush1.msra.mxu0 0.0
    %1825 = vmatprep.mubr.f32.mxu0 0.0
    %1826 = vmatmul.mubr.f32.gmra.mrb[0].mxu0 %v466
    %v1827 = vpop.f32.mrb[0].mxu0
    %v1828 = vadd.f32 0.0, %v1827
    %v1829 = vpop.f32.mrb[0].mxu0
    %v1830 = vadd.f32 0.0, %v1829
    %1831 = vdwg.mxu0
    %v1832 = vadd.f32 %v1759, %v1828
    %v1833 = vadd.f32 %v1760, %v1830
    %v1834 = vxor.u32 %v1832, 2147483648
    %v1835 = vxor.u32 %v1833, 2147483648
    %v1836 = vmul.f32 %v1834, 1.442695
    %v1837 = vpow.pop %v1836
    %v1838 = vmul.f32 %v1835, 1.442695
    %v1839 = vpow.pop %v1838
    %v1840 = vadd.f32 %v1837, 1.0
    %v1841 = vadd.f32 %v1839, 1.0
    %v1842 = vrcp.pop %v1840
    %v1843 = vmul.f32 1.0, %v1842
    %v1844 = vrcp.pop %v1841
    %v1845 = vmul.f32 1.0, %v1844
    %v1846 = vtanh.pop %v1833
    %v1847 = vmul.f32 %v1843, 0.0
    %1849 = vrot.lane.b32.xlu0 %v1846, 64
    %v1850 = vpop.permute.xlu0 %1849
    %v1852 = vmul.f32 %v1843, %v1850
    %1854 = vrot.lane.b32.xlu0 %v1852, 64
    %v1855 = vpop.permute.xlu0 %1854
    %v1857 = vadd.f32 %v1847, %v1855
    %v1858 = vtanh.pop %v1857
    %1860 = vrot.lane.b32.xlu0 %v1858, 64
    %v1861 = vpop.permute.xlu0 %1860
    %v1863 = vmul.f32 %v1845, %v1861
    %1864 = vst.msk [vmem:[#allocation3] sm:$0xff] %vm144, %v1863
    %1865 = vst.msk [vmem:[#allocation3 + $0x38] sm:$0xff] %vm572, %v1863
    %v1866 = vld [vmem:[#allocation2 + $0x10] sm:$0xff]
    %v1867 = vld [vmem:[#allocation2 + $0x18] sm:$0xff]
    %v1869 = vsel %vm464, %v1863, 0
    %1871 = vmatprep.subr.mxu0 %v1410
    %1872 = vmatpush1.msra.mxu0 %v1409
    %1873 = vmatprep.subr.mxu0 %v1412
    %1874 = vmatpush1.msra.mxu0 %v1411
    %1875 = vmatprep.subr.mxu0 %v1414
    %1876 = vmatpush1.msra.mxu0 %v1413
    %1877 = vmatprep.subr.mxu0 %v1416
    %1878 = vmatpush1.msra.mxu0 %v1415
    %1879 = vmatprep.subr.mxu0 %v1418
    %1880 = vmatpush1.msra.mxu0 %v1417
    %1881 = vmatprep.subr.mxu0 %v1420
    %1882 = vmatpush1.msra.mxu0 %v1419
    %1883 = vmatprep.subr.mxu0 %v1422
    %1884 = vmatpush1.msra.mxu0 %v1421
    %1885 = vmatprep.subr.mxu0 %v1424
    %1886 = vmatpush1.msra.mxu0 %v1423
    %1887 = vmatprep.subr.mxu0 0.0
    %1888 = vmatpush1.msra.mxu0 0.0
    %1889 = vmatprep.subr.mxu0 0.0
    %1890 = vmatpush1.msra.mxu0 0.0
    %1891 = vmatprep.subr.mxu0 0.0
    %1892 = vmatpush1.msra.mxu0 0.0
    %1893 = vmatprep.subr.mxu0 0.0
    %1894 = vmatpush1.msra.mxu0 0.0
    %1895 = vmatprep.subr.mxu0 0.0
    %1896 = vmatpush1.msra.mxu0 0.0
    %1897 = vmatprep.subr.mxu0 0.0
    %1898 = vmatpush1.msra.mxu0 0.0
    %1899 = vmatprep.subr.mxu0 0.0
    %1900 = vmatpush1.msra.mxu0 0.0
    %1901 = vmatprep.subr.mxu0 0.0
    %1902 = vmatpush1.msra.mxu0 0.0
    %1903 = vmatprep.subr.mxu0 0.0
    %1904 = vmatpush1.msra.mxu0 0.0
    %1905 = vmatprep.subr.mxu0 0.0
    %1906 = vmatpush1.msra.mxu0 0.0
    %1907 = vmatprep.subr.mxu0 0.0
    %1908 = vmatpush1.msra.mxu0 0.0
    %1909 = vmatprep.subr.mxu0 0.0
    %1910 = vmatpush1.msra.mxu0 0.0
    %1911 = vmatprep.subr.mxu0 0.0
    %1912 = vmatpush1.msra.mxu0 0.0
    %1913 = vmatprep.subr.mxu0 0.0
    %1914 = vmatpush1.msra.mxu0 0.0
    %1915 = vmatprep.subr.mxu0 0.0
    %1916 = vmatpush1.msra.mxu0 0.0
    %1917 = vmatprep.subr.mxu0 0.0
    %1918 = vmatpush1.msra.mxu0 0.0
    %1919 = vmatprep.subr.mxu0 0.0
    %1920 = vmatpush1.msra.mxu0 0.0
    %1921 = vmatprep.subr.mxu0 0.0
    %1922 = vmatpush1.msra.mxu0 0.0
    %1923 = vmatprep.subr.mxu0 0.0
    %1924 = vmatpush1.msra.mxu0 0.0
    %1925 = vmatprep.subr.mxu0 0.0
    %1926 = vmatpush1.msra.mxu0 0.0
    %1927 = vmatprep.subr.mxu0 0.0
    %1928 = vmatpush1.msra.mxu0 0.0
    %1929 = vmatprep.subr.mxu0 0.0
    %1930 = vmatpush1.msra.mxu0 0.0
    %1931 = vmatprep.subr.mxu0 0.0
    %1932 = vmatpush1.msra.mxu0 0.0
    %1933 = vmatprep.subr.mxu0 0.0
    %1934 = vmatpush1.msra.mxu0 0.0
    %1935 = vmatprep.mubr.f32.mxu0 0.0
    %1936 = vmatmul.mubr.f32.gmra.mrb[0].mxu0 %v1869
    %v1937 = vpop.f32.mrb[0].mxu0
    %v1938 = vadd.f32 0.0, %v1937
    %v1939 = vpop.f32.mrb[0].mxu0
    %v1940 = vadd.f32 0.0, %v1939
    %1941 = vdwg.mxu0
    %v1942 = vadd.f32 %v1866, %v1938
    %v1943 = vadd.f32 %v1867, %v1940
    %v1944 = vxor.u32 %v1942, 2147483648
    %v1945 = vxor.u32 %v1943, 2147483648
    %v1946 = vmul.f32 %v1944, 1.442695
    %v1947 = vpow.pop %v1946
    %v1948 = vmul.f32 %v1945, 1.442695
    %v1949 = vpow.pop %v1948
    %v1950 = vadd.f32 %v1947, 1.0
    %v1951 = vadd.f32 %v1949, 1.0
    %v1952 = vrcp.pop %v1950
    %v1953 = vmul.f32 1.0, %v1952
    %v1954 = vrcp.pop %v1951
    %v1955 = vmul.f32 1.0, %v1954
    %v1956 = vtanh.pop %v1943
    %v1957 = vmul.f32 %v1953, %v1857
    %1959 = vrot.lane.b32.xlu0 %v1956, 64
    %v1960 = vpop.permute.xlu0 %1959
    %v1962 = vmul.f32 %v1953, %v1960
    %1964 = vrot.lane.b32.xlu0 %v1962, 64
    %v1965 = vpop.permute.xlu0 %1964
    %v1967 = vadd.f32 %v1957, %v1965
    %v1968 = vtanh.pop %v1967
    %1970 = vrot.lane.b32.xlu0 %v1968, 64
    %v1971 = vpop.permute.xlu0 %1970
    %v1973 = vmul.f32 %v1955, %v1971
    %1974 = vst.msk [vmem:[#allocation3 + $0x8] sm:$0xff] %vm144, %v1973
    %1975 = vst.msk [vmem:[#allocation3 + $0x30] sm:$0xff] %vm572, %v1973
    %v1976 = vld [vmem:[#allocation2 + $0x20] sm:$0xff]
    %v1977 = vld [vmem:[#allocation2 + $0x28] sm:$0xff]
    %v1979 = vsel %vm464, %v1973, 0
    %1981 = vmatprep.subr.mxu0 %v1410
    %1982 = vmatpush1.msra.mxu0 %v1409
    %1983 = vmatprep.subr.mxu0 %v1412
    %1984 = vmatpush1.msra.mxu0 %v1411
    %1985 = vmatprep.subr.mxu0 %v1414
    %1986 = vmatpush1.msra.mxu0 %v1413
    %1987 = vmatprep.subr.mxu0 %v1416
    %1988 = vmatpush1.msra.mxu0 %v1415
    %1989 = vmatprep.subr.mxu0 %v1418
    %1990 = vmatpush1.msra.mxu0 %v1417
    %1991 = vmatprep.subr.mxu0 %v1420
    %1992 = vmatpush1.msra.mxu0 %v1419
    %1993 = vmatprep.subr.mxu0 %v1422
    %1994 = vmatpush1.msra.mxu0 %v1421
    %1995 = vmatprep.subr.mxu0 %v1424
    %1996 = vmatpush1.msra.mxu0 %v1423
    %1997 = vmatprep.subr.mxu0 0.0
    %1998 = vmatpush1.msra.mxu0 0.0
    %1999 = vmatprep.subr.mxu0 0.0
    %2000 = vmatpush1.msra.mxu0 0.0
    %2001 = vmatprep.subr.mxu0 0.0
    %2002 = vmatpush1.msra.mxu0 0.0
    %2003 = vmatprep.subr.mxu0 0.0
    %2004 = vmatpush1.msra.mxu0 0.0
    %2005 = vmatprep.subr.mxu0 0.0
    %2006 = vmatpush1.msra.mxu0 0.0
    %2007 = vmatprep.subr.mxu0 0.0
    %2008 = vmatpush1.msra.mxu0 0.0
    %2009 = vmatprep.subr.mxu0 0.0
    %2010 = vmatpush1.msra.mxu0 0.0
    %2011 = vmatprep.subr.mxu0 0.0
    %2012 = vmatpush1.msra.mxu0 0.0
    %2013 = vmatprep.subr.mxu0 0.0
    %2014 = vmatpush1.msra.mxu0 0.0
    %2015 = vmatprep.subr.mxu0 0.0
    %2016 = vmatpush1.msra.mxu0 0.0
    %2017 = vmatprep.subr.mxu0 0.0
    %2018 = vmatpush1.msra.mxu0 0.0
    %2019 = vmatprep.subr.mxu0 0.0
    %2020 = vmatpush1.msra.mxu0 0.0
    %2021 = vmatprep.subr.mxu0 0.0
    %2022 = vmatpush1.msra.mxu0 0.0
    %2023 = vmatprep.subr.mxu0 0.0
    %2024 = vmatpush1.msra.mxu0 0.0
    %2025 = vmatprep.subr.mxu0 0.0
    %2026 = vmatpush1.msra.mxu0 0.0
    %2027 = vmatprep.subr.mxu0 0.0
    %2028 = vmatpush1.msra.mxu0 0.0
    %2029 = vmatprep.subr.mxu0 0.0
    %2030 = vmatpush1.msra.mxu0 0.0
    %2031 = vmatprep.subr.mxu0 0.0
    %2032 = vmatpush1.msra.mxu0 0.0
    %2033 = vmatprep.subr.mxu0 0.0
    %2034 = vmatpush1.msra.mxu0 0.0
    %2035 = vmatprep.subr.mxu0 0.0
    %2036 = vmatpush1.msra.mxu0 0.0
    %2037 = vmatprep.subr.mxu0 0.0
    %2038 = vmatpush1.msra.mxu0 0.0
    %2039 = vmatprep.subr.mxu0 0.0
    %2040 = vmatpush1.msra.mxu0 0.0
    %2041 = vmatprep.subr.mxu0 0.0
    %2042 = vmatpush1.msra.mxu0 0.0
    %2043 = vmatprep.subr.mxu0 0.0
    %2044 = vmatpush1.msra.mxu0 0.0
    %2045 = vmatprep.mubr.f32.mxu0 0.0
    %2046 = vmatmul.mubr.f32.gmra.mrb[0].mxu0 %v1979
    %v2047 = vpop.f32.mrb[0].mxu0
    %v2048 = vadd.f32 0.0, %v2047
    %v2049 = vpop.f32.mrb[0].mxu0
    %v2050 = vadd.f32 0.0, %v2049
    %2051 = vdwg.mxu0
    %v2052 = vadd.f32 %v1976, %v2048
    %v2053 = vadd.f32 %v1977, %v2050
    %v2054 = vxor.u32 %v2052, 2147483648
    %v2055 = vxor.u32 %v2053, 2147483648
    %v2056 = vmul.f32 %v2054, 1.442695
    %v2057 = vpow.pop %v2056
    %v2058 = vmul.f32 %v2055, 1.442695
    %v2059 = vpow.pop %v2058
    %v2060 = vadd.f32 %v2057, 1.0
    %v2061 = vadd.f32 %v2059, 1.0
    %v2062 = vrcp.pop %v2060
    %v2063 = vmul.f32 1.0, %v2062
    %v2064 = vrcp.pop %v2061
    %v2065 = vmul.f32 1.0, %v2064
    %v2066 = vtanh.pop %v2053
    %v2067 = vmul.f32 %v2063, %v1967
    %2069 = vrot.lane.b32.xlu0 %v2066, 64
    %v2070 = vpop.permute.xlu0 %2069
    %v2072 = vmul.f32 %v2063, %v2070
    %2074 = vrot.lane.b32.xlu0 %v2072, 64
    %v2075 = vpop.permute.xlu0 %2074
    %v2077 = vadd.f32 %v2067, %v2075
    %v2078 = vtanh.pop %v2077
    %2080 = vrot.lane.b32.xlu0 %v2078, 64
    %v2081 = vpop.permute.xlu0 %2080
    %v2083 = vmul.f32 %v2065, %v2081
    %2084 = vst.msk [vmem:[#allocation3 + $0x10] sm:$0xff] %vm144, %v2083
    %2085 = vst.msk [vmem:[#allocation3 + $0x28] sm:$0xff] %vm572, %v2083
    %v2086 = vld [vmem:[#allocation2 + $0x30] sm:$0xff]
    %v2087 = vld [vmem:[#allocation2 + $0x38] sm:$0xff]
    %v2089 = vsel %vm464, %v2083, 0
    %2091 = vmatprep.subr.mxu0 %v1410
    %2092 = vmatpush1.msra.mxu0 %v1409
    %2093 = vmatprep.subr.mxu0 %v1412
    %2094 = vmatpush1.msra.mxu0 %v1411
    %2095 = vmatprep.subr.mxu0 %v1414
    %2096 = vmatpush1.msra.mxu0 %v1413
    %2097 = vmatprep.subr.mxu0 %v1416
    %2098 = vmatpush1.msra.mxu0 %v1415
    %2099 = vmatprep.subr.mxu0 %v1418
    %2100 = vmatpush1.msra.mxu0 %v1417
    %2101 = vmatprep.subr.mxu0 %v1420
    %2102 = vmatpush1.msra.mxu0 %v1419
    %2103 = vmatprep.subr.mxu0 %v1422
    %2104 = vmatpush1.msra.mxu0 %v1421
    %2105 = vmatprep.subr.mxu0 %v1424
    %2106 = vmatpush1.msra.mxu0 %v1423
    %2107 = vmatprep.subr.mxu0 0.0
    %2108 = vmatpush1.msra.mxu0 0.0
    %2109 = vmatprep.subr.mxu0 0.0
    %2110 = vmatpush1.msra.mxu0 0.0
    %2111 = vmatprep.subr.mxu0 0.0
    %2112 = vmatpush1.msra.mxu0 0.0
    %2113 = vmatprep.subr.mxu0 0.0
    %2114 = vmatpush1.msra.mxu0 0.0
    %2115 = vmatprep.subr.mxu0 0.0
    %2116 = vmatpush1.msra.mxu0 0.0
    %2117 = vmatprep.subr.mxu0 0.0
    %2118 = vmatpush1.msra.mxu0 0.0
    %2119 = vmatprep.subr.mxu0 0.0
    %2120 = vmatpush1.msra.mxu0 0.0
    %2121 = vmatprep.subr.mxu0 0.0
    %2122 = vmatpush1.msra.mxu0 0.0
    %2123 = vmatprep.subr.mxu0 0.0
    %2124 = vmatpush1.msra.mxu0 0.0
    %2125 = vmatprep.subr.mxu0 0.0
    %2126 = vmatpush1.msra.mxu0 0.0
    %2127 = vmatprep.subr.mxu0 0.0
    %2128 = vmatpush1.msra.mxu0 0.0
    %2129 = vmatprep.subr.mxu0 0.0
    %2130 = vmatpush1.msra.mxu0 0.0
    %2131 = vmatprep.subr.mxu0 0.0
    %2132 = vmatpush1.msra.mxu0 0.0
    %2133 = vmatprep.subr.mxu0 0.0
    %2134 = vmatpush1.msra.mxu0 0.0
    %2135 = vmatprep.subr.mxu0 0.0
    %2136 = vmatpush1.msra.mxu0 0.0
    %2137 = vmatprep.subr.mxu0 0.0
    %2138 = vmatpush1.msra.mxu0 0.0
    %2139 = vmatprep.subr.mxu0 0.0
    %2140 = vmatpush1.msra.mxu0 0.0
    %2141 = vmatprep.subr.mxu0 0.0
    %2142 = vmatpush1.msra.mxu0 0.0
    %2143 = vmatprep.subr.mxu0 0.0
    %2144 = vmatpush1.msra.mxu0 0.0
    %2145 = vmatprep.subr.mxu0 0.0
    %2146 = vmatpush1.msra.mxu0 0.0
    %2147 = vmatprep.subr.mxu0 0.0
    %2148 = vmatpush1.msra.mxu0 0.0
    %2149 = vmatprep.subr.mxu0 0.0
    %2150 = vmatpush1.msra.mxu0 0.0
    %2151 = vmatprep.subr.mxu0 0.0
    %2152 = vmatpush1.msra.mxu0 0.0
    %2153 = vmatprep.subr.mxu0 0.0
    %2154 = vmatpush1.msra.mxu0 0.0
    %2155 = vmatprep.mubr.f32.mxu0 0.0
    %2156 = vmatmul.mubr.f32.gmra.mrb[0].mxu0 %v2089
    %v2157 = vpop.f32.mrb[0].mxu0
    %v2158 = vadd.f32 0.0, %v2157
    %v2159 = vpop.f32.mrb[0].mxu0
    %v2160 = vadd.f32 0.0, %v2159
    %2161 = vdwg.mxu0
    %v2162 = vadd.f32 %v2086, %v2158
    %v2163 = vadd.f32 %v2087, %v2160
    %v2164 = vxor.u32 %v2162, 2147483648
    %v2165 = vxor.u32 %v2163, 2147483648
    %v2166 = vmul.f32 %v2164, 1.442695
    %v2167 = vpow.pop %v2166
    %v2168 = vmul.f32 %v2165, 1.442695
    %v2169 = vpow.pop %v2168
    %v2170 = vadd.f32 %v2167, 1.0
    %v2171 = vadd.f32 %v2169, 1.0
    %v2172 = vrcp.pop %v2170
    %v2173 = vmul.f32 1.0, %v2172
    %v2174 = vrcp.pop %v2171
    %v2175 = vmul.f32 1.0, %v2174
    %v2176 = vtanh.pop %v2163
    %v2177 = vmul.f32 %v2173, %v2077
    %2179 = vrot.lane.b32.xlu0 %v2176, 64
    %v2180 = vpop.permute.xlu0 %2179
    %v2182 = vmul.f32 %v2173, %v2180
    %2184 = vrot.lane.b32.xlu0 %v2182, 64
    %v2185 = vpop.permute.xlu0 %2184
    %v2187 = vadd.f32 %v2177, %v2185
    %v2188 = vtanh.pop %v2187
    %2190 = vrot.lane.b32.xlu0 %v2188, 64
    %v2191 = vpop.permute.xlu0 %2190
    %v2193 = vmul.f32 %v2175, %v2191
    %2194 = vst.msk [vmem:[#allocation3 + $0x18] sm:$0xff] %vm144, %v2193
    %2195 = vst.msk [vmem:[#allocation3 + $0x20] sm:$0xff] %vm572, %v2193
    %v2196 = vld [vmem:[#allocation2 + $0x40] sm:$0xff]
    %v2197 = vld [vmem:[#allocation2 + $0x48] sm:$0xff]
    %v2199 = vsel %vm464, %v2193, 0
    %2201 = vmatprep.subr.mxu0 %v1410
    %2202 = vmatpush1.msra.mxu0 %v1409
    %2203 = vmatprep.subr.mxu0 %v1412
    %2204 = vmatpush1.msra.mxu0 %v1411
    %2205 = vmatprep.subr.mxu0 %v1414
    %2206 = vmatpush1.msra.mxu0 %v1413
    %2207 = vmatprep.subr.mxu0 %v1416
    %2208 = vmatpush1.msra.mxu0 %v1415
    %2209 = vmatprep.subr.mxu0 %v1418
    %2210 = vmatpush1.msra.mxu0 %v1417
    %2211 = vmatprep.subr.mxu0 %v1420
    %2212 = vmatpush1.msra.mxu0 %v1419
    %2213 = vmatprep.subr.mxu0 %v1422
    %2214 = vmatpush1.msra.mxu0 %v1421
    %2215 = vmatprep.subr.mxu0 %v1424
    %2216 = vmatpush1.msra.mxu0 %v1423
    %2217 = vmatprep.subr.mxu0 0.0
    %2218 = vmatpush1.msra.mxu0 0.0
    %2219 = vmatprep.subr.mxu0 0.0
    %2220 = vmatpush1.msra.mxu0 0.0
    %2221 = vmatprep.subr.mxu0 0.0
    %2222 = vmatpush1.msra.mxu0 0.0
    %2223 = vmatprep.subr.mxu0 0.0
    %2224 = vmatpush1.msra.mxu0 0.0
    %2225 = vmatprep.subr.mxu0 0.0
    %2226 = vmatpush1.msra.mxu0 0.0
    %2227 = vmatprep.subr.mxu0 0.0
    %2228 = vmatpush1.msra.mxu0 0.0
    %2229 = vmatprep.subr.mxu0 0.0
    %2230 = vmatpush1.msra.mxu0 0.0
    %2231 = vmatprep.subr.mxu0 0.0
    %2232 = vmatpush1.msra.mxu0 0.0
    %2233 = vmatprep.subr.mxu0 0.0
    %2234 = vmatpush1.msra.mxu0 0.0
    %2235 = vmatprep.subr.mxu0 0.0
    %2236 = vmatpush1.msra.mxu0 0.0
    %2237 = vmatprep.subr.mxu0 0.0
    %2238 = vmatpush1.msra.mxu0 0.0
    %2239 = vmatprep.subr.mxu0 0.0
    %2240 = vmatpush1.msra.mxu0 0.0
    %2241 = vmatprep.subr.mxu0 0.0
    %2242 = vmatpush1.msra.mxu0 0.0
    %2243 = vmatprep.subr.mxu0 0.0
    %2244 = vmatpush1.msra.mxu0 0.0
    %2245 = vmatprep.subr.mxu0 0.0
    %2246 = vmatpush1.msra.mxu0 0.0
    %2247 = vmatprep.subr.mxu0 0.0
    %2248 = vmatpush1.msra.mxu0 0.0
    %2249 = vmatprep.subr.mxu0 0.0
    %2250 = vmatpush1.msra.mxu0 0.0
    %2251 = vmatprep.subr.mxu0 0.0
    %2252 = vmatpush1.msra.mxu0 0.0
    %2253 = vmatprep.subr.mxu0 0.0
    %2254 = vmatpush1.msra.mxu0 0.0
    %2255 = vmatprep.subr.mxu0 0.0
    %2256 = vmatpush1.msra.mxu0 0.0
    %2257 = vmatprep.subr.mxu0 0.0
    %2258 = vmatpush1.msra.mxu0 0.0
    %2259 = vmatprep.subr.mxu0 0.0
    %2260 = vmatpush1.msra.mxu0 0.0
    %2261 = vmatprep.subr.mxu0 0.0
    %2262 = vmatpush1.msra.mxu0 0.0
    %2263 = vmatprep.subr.mxu0 0.0
    %2264 = vmatpush1.msra.mxu0 0.0
    %2265 = vmatprep.mubr.f32.mxu0 0.0
    %2266 = vmatmul.mubr.f32.gmra.mrb[0].mxu0 %v2199
    %v2267 = vpop.f32.mrb[0].mxu0
    %v2268 = vadd.f32 0.0, %v2267
    %v2269 = vpop.f32.mrb[0].mxu0
    %v2270 = vadd.f32 0.0, %v2269
    %2271 = vdwg.mxu0
    %v2272 = vadd.f32 %v2196, %v2268
    %v2273 = vadd.f32 %v2197, %v2270
    %v2274 = vxor.u32 %v2272, 2147483648
    %v2275 = vxor.u32 %v2273, 2147483648
    %v2276 = vmul.f32 %v2274, 1.442695
    %v2277 = vpow.pop %v2276
    %v2278 = vmul.f32 %v2275, 1.442695
    %v2279 = vpow.pop %v2278
    %v2280 = vadd.f32 %v2277, 1.0
    %v2281 = vadd.f32 %v2279, 1.0
    %v2282 = vrcp.pop %v2280
    %v2283 = vmul.f32 1.0, %v2282
    %v2284 = vrcp.pop %v2281
    %v2285 = vmul.f32 1.0, %v2284
    %v2286 = vtanh.pop %v2273
    %v2287 = vmul.f32 %v2283, %v2187
    %2289 = vrot.lane.b32.xlu0 %v2286, 64
    %v2290 = vpop.permute.xlu0 %2289
    %v2292 = vmul.f32 %v2283, %v2290
    %2294 = vrot.lane.b32.xlu0 %v2292, 64
    %v2295 = vpop.permute.xlu0 %2294
    %v2297 = vadd.f32 %v2287, %v2295
    %v2298 = vtanh.pop %v2297
    %2300 = vrot.lane.b32.xlu0 %v2298, 64
    %v2301 = vpop.permute.xlu0 %2300
    %v2303 = vmul.f32 %v2285, %v2301
    %2304 = vst.msk [vmem:[#allocation3 + $0x20] sm:$0xff] %vm144, %v2303
    %2305 = vst.msk [vmem:[#allocation3 + $0x18] sm:$0xff] %vm572, %v2303
    %v2306 = vld [vmem:[#allocation2 + $0x50] sm:$0xff]
    %v2307 = vld [vmem:[#allocation2 + $0x58] sm:$0xff]
    %v2309 = vsel %vm464, %v2303, 0
    %2311 = vmatprep.subr.mxu0 %v1410
    %2312 = vmatpush1.msra.mxu0 %v1409
    %2313 = vmatprep.subr.mxu0 %v1412
    %2314 = vmatpush1.msra.mxu0 %v1411
    %2315 = vmatprep.subr.mxu0 %v1414
    %2316 = vmatpush1.msra.mxu0 %v1413
    %2317 = vmatprep.subr.mxu0 %v1416
    %2318 = vmatpush1.msra.mxu0 %v1415
    %2319 = vmatprep.subr.mxu0 %v1418
    %2320 = vmatpush1.msra.mxu0 %v1417
    %2321 = vmatprep.subr.mxu0 %v1420
    %2322 = vmatpush1.msra.mxu0 %v1419
    %2323 = vmatprep.subr.mxu0 %v1422
    %2324 = vmatpush1.msra.mxu0 %v1421
    %2325 = vmatprep.subr.mxu0 %v1424
    %2326 = vmatpush1.msra.mxu0 %v1423
    %2327 = vmatprep.subr.mxu0 0.0
    %2328 = vmatpush1.msra.mxu0 0.0
    %2329 = vmatprep.subr.mxu0 0.0
    %2330 = vmatpush1.msra.mxu0 0.0
    %2331 = vmatprep.subr.mxu0 0.0
    %2332 = vmatpush1.msra.mxu0 0.0
    %2333 = vmatprep.subr.mxu0 0.0
    %2334 = vmatpush1.msra.mxu0 0.0
    %2335 = vmatprep.subr.mxu0 0.0
    %2336 = vmatpush1.msra.mxu0 0.0
    %2337 = vmatprep.subr.mxu0 0.0
    %2338 = vmatpush1.msra.mxu0 0.0
    %2339 = vmatprep.subr.mxu0 0.0
    %2340 = vmatpush1.msra.mxu0 0.0
    %2341 = vmatprep.subr.mxu0 0.0
    %2342 = vmatpush1.msra.mxu0 0.0
    %2343 = vmatprep.subr.mxu0 0.0
    %2344 = vmatpush1.msra.mxu0 0.0
    %2345 = vmatprep.subr.mxu0 0.0
    %2346 = vmatpush1.msra.mxu0 0.0
    %2347 = vmatprep.subr.mxu0 0.0
    %2348 = vmatpush1.msra.mxu0 0.0
    %2349 = vmatprep.subr.mxu0 0.0
    %2350 = vmatpush1.msra.mxu0 0.0
    %2351 = vmatprep.subr.mxu0 0.0
    %2352 = vmatpush1.msra.mxu0 0.0
    %2353 = vmatprep.subr.mxu0 0.0
    %2354 = vmatpush1.msra.mxu0 0.0
    %2355 = vmatprep.subr.mxu0 0.0
    %2356 = vmatpush1.msra.mxu0 0.0
    %2357 = vmatprep.subr.mxu0 0.0
    %2358 = vmatpush1.msra.mxu0 0.0
    %2359 = vmatprep.subr.mxu0 0.0
    %2360 = vmatpush1.msra.mxu0 0.0
    %2361 = vmatprep.subr.mxu0 0.0
    %2362 = vmatpush1.msra.mxu0 0.0
    %2363 = vmatprep.subr.mxu0 0.0
    %2364 = vmatpush1.msra.mxu0 0.0
    %2365 = vmatprep.subr.mxu0 0.0
    %2366 = vmatpush1.msra.mxu0 0.0
    %2367 = vmatprep.subr.mxu0 0.0
    %2368 = vmatpush1.msra.mxu0 0.0
    %2369 = vmatprep.subr.mxu0 0.0
    %2370 = vmatpush1.msra.mxu0 0.0
    %2371 = vmatprep.subr.mxu0 0.0
    %2372 = vmatpush1.msra.mxu0 0.0
    %2373 = vmatprep.subr.mxu0 0.0
    %2374 = vmatpush1.msra.mxu0 0.0
    %2375 = vmatprep.mubr.f32.mxu0 0.0
    %2376 = vmatmul.mubr.f32.gmra.mrb[0].mxu0 %v2309
    %v2377 = vpop.f32.mrb[0].mxu0
    %v2378 = vadd.f32 0.0, %v2377
    %v2379 = vpop.f32.mrb[0].mxu0
    %v2380 = vadd.f32 0.0, %v2379
    %2381 = vdwg.mxu0
    %v2382 = vadd.f32 %v2306, %v2378
    %v2383 = vadd.f32 %v2307, %v2380
    %v2384 = vxor.u32 %v2382, 2147483648
    %v2385 = vxor.u32 %v2383, 2147483648
    %v2386 = vmul.f32 %v2384, 1.442695
    %v2387 = vpow.pop %v2386
    %v2388 = vmul.f32 %v2385, 1.442695
    %v2389 = vpow.pop %v2388
    %v2390 = vadd.f32 %v2387, 1.0
    %v2391 = vadd.f32 %v2389, 1.0
    %v2392 = vrcp.pop %v2390
    %v2393 = vmul.f32 1.0, %v2392
    %v2394 = vrcp.pop %v2391
    %v2395 = vmul.f32 1.0, %v2394
    %v2396 = vtanh.pop %v2383
    %v2397 = vmul.f32 %v2393, %v2297
    %2399 = vrot.lane.b32.xlu0 %v2396, 64
    %v2400 = vpop.permute.xlu0 %2399
    %v2402 = vmul.f32 %v2393, %v2400
    %2404 = vrot.lane.b32.xlu0 %v2402, 64
    %v2405 = vpop.permute.xlu0 %2404
    %v2407 = vadd.f32 %v2397, %v2405
    %v2408 = vtanh.pop %v2407
    %2410 = vrot.lane.b32.xlu0 %v2408, 64
    %v2411 = vpop.permute.xlu0 %2410
    %v2413 = vmul.f32 %v2395, %v2411
    %2414 = vst.msk [vmem:[#allocation3 + $0x28] sm:$0xff] %vm144, %v2413
    %2415 = vst.msk [vmem:[#allocation3 + $0x10] sm:$0xff] %vm572, %v2413
    %v2416 = vld [vmem:[#allocation2 + $0x60] sm:$0xff]
    %v2417 = vld [vmem:[#allocation2 + $0x68] sm:$0xff]
    %v2419 = vsel %vm464, %v2413, 0
    %2421 = vmatprep.subr.mxu0 %v1410
    %2422 = vmatpush1.msra.mxu0 %v1409
    %2423 = vmatprep.subr.mxu0 %v1412
    %2424 = vmatpush1.msra.mxu0 %v1411
    %2425 = vmatprep.subr.mxu0 %v1414
    %2426 = vmatpush1.msra.mxu0 %v1413
    %2427 = vmatprep.subr.mxu0 %v1416
    %2428 = vmatpush1.msra.mxu0 %v1415
    %2429 = vmatprep.subr.mxu0 %v1418
    %2430 = vmatpush1.msra.mxu0 %v1417
    %2431 = vmatprep.subr.mxu0 %v1420
    %2432 = vmatpush1.msra.mxu0 %v1419
    %2433 = vmatprep.subr.mxu0 %v1422
    %2434 = vmatpush1.msra.mxu0 %v1421
    %2435 = vmatprep.subr.mxu0 %v1424
    %2436 = vmatpush1.msra.mxu0 %v1423
    %2437 = vmatprep.subr.mxu0 0.0
    %2438 = vmatpush1.msra.mxu0 0.0
    %2439 = vmatprep.subr.mxu0 0.0
    %2440 = vmatpush1.msra.mxu0 0.0
    %2441 = vmatprep.subr.mxu0 0.0
    %2442 = vmatpush1.msra.mxu0 0.0
    %2443 = vmatprep.subr.mxu0 0.0
    %2444 = vmatpush1.msra.mxu0 0.0
    %2445 = vmatprep.subr.mxu0 0.0
    %2446 = vmatpush1.msra.mxu0 0.0
    %2447 = vmatprep.subr.mxu0 0.0
    %2448 = vmatpush1.msra.mxu0 0.0
    %2449 = vmatprep.subr.mxu0 0.0
    %2450 = vmatpush1.msra.mxu0 0.0
    %2451 = vmatprep.subr.mxu0 0.0
    %2452 = vmatpush1.msra.mxu0 0.0
    %2453 = vmatprep.subr.mxu0 0.0
    %2454 = vmatpush1.msra.mxu0 0.0
    %2455 = vmatprep.subr.mxu0 0.0
    %2456 = vmatpush1.msra.mxu0 0.0
    %2457 = vmatprep.subr.mxu0 0.0
    %2458 = vmatpush1.msra.mxu0 0.0
    %2459 = vmatprep.subr.mxu0 0.0
    %2460 = vmatpush1.msra.mxu0 0.0
    %2461 = vmatprep.subr.mxu0 0.0
    %2462 = vmatpush1.msra.mxu0 0.0
    %2463 = vmatprep.subr.mxu0 0.0
    %2464 = vmatpush1.msra.mxu0 0.0
    %2465 = vmatprep.subr.mxu0 0.0
    %2466 = vmatpush1.msra.mxu0 0.0
    %2467 = vmatprep.subr.mxu0 0.0
    %2468 = vmatpush1.msra.mxu0 0.0
    %2469 = vmatprep.subr.mxu0 0.0
    %2470 = vmatpush1.msra.mxu0 0.0
    %2471 = vmatprep.subr.mxu0 0.0
    %2472 = vmatpush1.msra.mxu0 0.0
    %2473 = vmatprep.subr.mxu0 0.0
    %2474 = vmatpush1.msra.mxu0 0.0
    %2475 = vmatprep.subr.mxu0 0.0
    %2476 = vmatpush1.msra.mxu0 0.0
    %2477 = vmatprep.subr.mxu0 0.0
    %2478 = vmatpush1.msra.mxu0 0.0
    %2479 = vmatprep.subr.mxu0 0.0
    %2480 = vmatpush1.msra.mxu0 0.0
    %2481 = vmatprep.subr.mxu0 0.0
    %2482 = vmatpush1.msra.mxu0 0.0
    %2483 = vmatprep.subr.mxu0 0.0
    %2484 = vmatpush1.msra.mxu0 0.0
    %2485 = vmatprep.mubr.f32.mxu0 0.0
    %2486 = vmatmul.mubr.f32.gmra.mrb[0].mxu0 %v2419
    %v2487 = vpop.f32.mrb[0].mxu0
    %v2488 = vadd.f32 0.0, %v2487
    %v2489 = vpop.f32.mrb[0].mxu0
    %v2490 = vadd.f32 0.0, %v2489
    %2491 = vdwg.mxu0
    %v2492 = vadd.f32 %v2416, %v2488
    %v2493 = vadd.f32 %v2417, %v2490
    %v2494 = vxor.u32 %v2492, 2147483648
    %v2495 = vxor.u32 %v2493, 2147483648
    %v2496 = vmul.f32 %v2494, 1.442695
    %v2497 = vpow.pop %v2496
    %v2498 = vmul.f32 %v2495, 1.442695
    %v2499 = vpow.pop %v2498
    %v2500 = vadd.f32 %v2497, 1.0
    %v2501 = vadd.f32 %v2499, 1.0
    %v2502 = vrcp.pop %v2500
    %v2503 = vmul.f32 1.0, %v2502
    %v2504 = vrcp.pop %v2501
    %v2505 = vmul.f32 1.0, %v2504
    %v2506 = vtanh.pop %v2493
    %v2507 = vmul.f32 %v2503, %v2407
    %2509 = vrot.lane.b32.xlu0 %v2506, 64
    %v2510 = vpop.permute.xlu0 %2509
    %v2512 = vmul.f32 %v2503, %v2510
    %2514 = vrot.lane.b32.xlu0 %v2512, 64
    %v2515 = vpop.permute.xlu0 %2514
    %v2517 = vadd.f32 %v2507, %v2515
    %v2518 = vtanh.pop %v2517
    %2520 = vrot.lane.b32.xlu0 %v2518, 64
    %v2521 = vpop.permute.xlu0 %2520
    %v2523 = vmul.f32 %v2505, %v2521
    %2524 = vst.msk [vmem:[#allocation3 + $0x30] sm:$0xff] %vm144, %v2523
    %2525 = vst.msk [vmem:[#allocation3 + $0x8] sm:$0xff] %vm572, %v2523
    %v2526 = vld [vmem:[#allocation2 + $0x70] sm:$0xff]
    %v2527 = vld [vmem:[#allocation2 + $0x78] sm:$0xff]
    %v2529 = vsel %vm464, %v2523, 0
    %2531 = vmatprep.subr.mxu0 %v1410
    %2532 = vmatpush1.msra.mxu0 %v1409
    %2533 = vmatprep.subr.mxu0 %v1412
    %2534 = vmatpush1.msra.mxu0 %v1411
    %2535 = vmatprep.subr.mxu0 %v1414
    %2536 = vmatpush1.msra.mxu0 %v1413
    %2537 = vmatprep.subr.mxu0 %v1416
    %2538 = vmatpush1.msra.mxu0 %v1415
    %2539 = vmatprep.subr.mxu0 %v1418
    %2540 = vmatpush1.msra.mxu0 %v1417
    %2541 = vmatprep.subr.mxu0 %v1420
    %2542 = vmatpush1.msra.mxu0 %v1419
    %2543 = vmatprep.subr.mxu0 %v1422
    %2544 = vmatpush1.msra.mxu0 %v1421
    %2545 = vmatprep.subr.mxu0 %v1424
    %2546 = vmatpush1.msra.mxu0 %v1423
    %2547 = vmatprep.subr.mxu0 0.0
    %2548 = vmatpush1.msra.mxu0 0.0
    %2549 = vmatprep.subr.mxu0 0.0
    %2550 = vmatpush1.msra.mxu0 0.0
    %2551 = vmatprep.subr.mxu0 0.0
    %2552 = vmatpush1.msra.mxu0 0.0
    %2553 = vmatprep.subr.mxu0 0.0
    %2554 = vmatpush1.msra.mxu0 0.0
    %2555 = vmatprep.subr.mxu0 0.0
    %2556 = vmatpush1.msra.mxu0 0.0
    %2557 = vmatprep.subr.mxu0 0.0
    %2558 = vmatpush1.msra.mxu0 0.0
    %2559 = vmatprep.subr.mxu0 0.0
    %2560 = vmatpush1.msra.mxu0 0.0
    %2561 = vmatprep.subr.mxu0 0.0
    %2562 = vmatpush1.msra.mxu0 0.0
    %2563 = vmatprep.subr.mxu0 0.0
    %2564 = vmatpush1.msra.mxu0 0.0
    %2565 = vmatprep.subr.mxu0 0.0
    %2566 = vmatpush1.msra.mxu0 0.0
    %2567 = vmatprep.subr.mxu0 0.0
    %2568 = vmatpush1.msra.mxu0 0.0
    %2569 = vmatprep.subr.mxu0 0.0
    %2570 = vmatpush1.msra.mxu0 0.0
    %2571 = vmatprep.subr.mxu0 0.0
    %2572 = vmatpush1.msra.mxu0 0.0
    %2573 = vmatprep.subr.mxu0 0.0
    %2574 = vmatpush1.msra.mxu0 0.0
    %2575 = vmatprep.subr.mxu0 0.0
    %2576 = vmatpush1.msra.mxu0 0.0
    %2577 = vmatprep.subr.mxu0 0.0
    %2578 = vmatpush1.msra.mxu0 0.0
    %2579 = vmatprep.subr.mxu0 0.0
    %2580 = vmatpush1.msra.mxu0 0.0
    %2581 = vmatprep.subr.mxu0 0.0
    %2582 = vmatpush1.msra.mxu0 0.0
    %2583 = vmatprep.subr.mxu0 0.0
    %2584 = vmatpush1.msra.mxu0 0.0
    %2585 = vmatprep.subr.mxu0 0.0
    %2586 = vmatpush1.msra.mxu0 0.0
    %2587 = vmatprep.subr.mxu0 0.0
    %2588 = vmatpush1.msra.mxu0 0.0
    %2589 = vmatprep.subr.mxu0 0.0
    %2590 = vmatpush1.msra.mxu0 0.0
    %2591 = vmatprep.subr.mxu0 0.0
    %2592 = vmatpush1.msra.mxu0 0.0
    %2593 = vmatprep.subr.mxu0 0.0
    %2594 = vmatpush1.msra.mxu0 0.0
    %2595 = vmatprep.mubr.f32.mxu0 0.0
    %2596 = vmatmul.mubr.f32.gmra.mrb[0].mxu0 %v2529
    %v2597 = vpop.f32.mrb[0].mxu0
    %v2598 = vadd.f32 0.0, %v2597
    %v2599 = vpop.f32.mrb[0].mxu0
    %v2600 = vadd.f32 0.0, %v2599
    %2601 = vdwg.mxu0
    %v2602 = vadd.f32 %v2526, %v2598
    %v2603 = vadd.f32 %v2527, %v2600
    %v2604 = vxor.u32 %v2602, 2147483648
    %v2605 = vxor.u32 %v2603, 2147483648
    %v2606 = vmul.f32 %v2604, 1.442695
    %v2607 = vpow.pop %v2606
    %v2608 = vmul.f32 %v2605, 1.442695
    %v2609 = vpow.pop %v2608
    %v2610 = vadd.f32 %v2607, 1.0
    %v2611 = vadd.f32 %v2609, 1.0
    %v2612 = vrcp.pop %v2610
    %v2613 = vmul.f32 1.0, %v2612
    %v2614 = vrcp.pop %v2611
    %v2615 = vmul.f32 1.0, %v2614
    %v2616 = vtanh.pop %v2603
    %v2617 = vmul.f32 %v2613, %v2517
    %2619 = vrot.lane.b32.xlu0 %v2616, 64
    %v2620 = vpop.permute.xlu0 %2619
    %v2622 = vmul.f32 %v2613, %v2620
    %2624 = vrot.lane.b32.xlu0 %v2622, 64
    %v2625 = vpop.permute.xlu0 %2624
    %v2627 = vadd.f32 %v2617, %v2625
    %v2628 = vtanh.pop %v2627
    %2630 = vrot.lane.b32.xlu0 %v2628, 64
    %v2631 = vpop.permute.xlu0 %2630
    %v2633 = vmul.f32 %v2615, %v2631
    %2634 = vst.msk [vmem:[#allocation3 + $0x38] sm:$0xff] %vm144, %v2633
    %2635 = vst.msk [vmem:[#allocation3] sm:$0xff] %vm572, %v2633
    %s2636 = scalar_lea.vmem [#allocation13], 16
    %2637 = vst.msk [vmem:[%s2636] sm:$0xff] %vm144, %v2633
    %2639 = vrot.lane.b32.xlu0 %v2633, 96
    %v2640 = vpop.permute.xlu0 %2639
    %s2642 = scalar_lea.vmem [#allocation13], 24
    %2643 = vst.msk [vmem:[%s2642] sm:$0xff] %vm144, %v2640
    %2645 = vrot.lane.b32.xlu0 %v2627, 64
    %v2646 = vpop.permute.xlu0 %2645
    %s2648 = scalar_lea.vmem [#allocation14], 16
    %2649 = vst.msk [vmem:[%s2648] sm:$0xff] %vm144, %v2646
    %2650 = vrot.lane.b32.xlu0 %v2627, 32
    %v2651 = vpop.permute.xlu0 %2650
    %s2653 = scalar_lea.vmem [#allocation14], 24
    %2654 = vst.msk [vmem:[%s2653] sm:$0xff] %vm144, %v2651
    %v2655 = vld [vmem:[#allocation3] sm:$0xff]
    %v2656 = vld [vmem:[#allocation3 + $0x8] sm:$0xff]
    %v2657 = vld [vmem:[#allocation3 + $0x10] sm:$0xff]
    %v2658 = vld [vmem:[#allocation3 + $0x18] sm:$0xff]
    %v2659 = vld [vmem:[#allocation3 + $0x20] sm:$0xff]
    %v2660 = vld [vmem:[#allocation3 + $0x28] sm:$0xff]
    %v2661 = vld [vmem:[#allocation3 + $0x30] sm:$0xff]
    %v2662 = vld [vmem:[#allocation3 + $0x38] sm:$0xff]
    %2671 = vrot.lane.b32.xlu0 %v2655, 96
    %v2672 = vpop.permute.xlu0 %2671
    %2673 = vrot.lane.b32.xlu0 %v2656, 96
    %v2674 = vpop.permute.xlu0 %2673
    %2675 = vrot.lane.b32.xlu0 %v2657, 96
    %v2676 = vpop.permute.xlu0 %2675
    %2677 = vrot.lane.b32.xlu0 %v2658, 96
    %v2678 = vpop.permute.xlu0 %2677
    %2679 = vrot.lane.b32.xlu0 %v2659, 96
    %v2680 = vpop.permute.xlu0 %2679
    %2681 = vrot.lane.b32.xlu0 %v2660, 96
    %v2682 = vpop.permute.xlu0 %2681
    %2683 = vrot.lane.b32.xlu0 %v2661, 96
    %v2684 = vpop.permute.xlu0 %2683
    %2685 = vrot.lane.b32.xlu0 %v2662, 96
    %v2686 = vpop.permute.xlu0 %2685
    %v2695 = vadd.f32 %v2655, %v2672
    %v2696 = vadd.f32 %v2656, %v2674
    %v2697 = vadd.f32 %v2657, %v2676
    %v2698 = vadd.f32 %v2658, %v2678
    %v2699 = vadd.f32 %v2659, %v2680
    %v2700 = vadd.f32 %v2660, %v2682
    %v2701 = vadd.f32 %v2661, %v2684
    %v2702 = vadd.f32 %v2662, %v2686
    %v2703 = vld [vmem:[%s0] sm:$0xff]
    %v2704 = vld [vmem:[%s0 + $0x8] sm:$0xff]
    %v2705 = vld [vmem:[%s0 + $0x10] sm:$0xff]
    %v2706 = vld [vmem:[%s0 + $0x18] sm:$0xff]
    %v2707 = vld [vmem:[%s0 + $0x20] sm:$0xff]
    %v2708 = vld [vmem:[%s0 + $0x28] sm:$0xff]
    %v2709 = vld [vmem:[%s0 + $0x30] sm:$0xff]
    %v2710 = vld [vmem:[%s0 + $0x38] sm:$0xff]
    %v2711 = vadd.f32 %v2695, %v2703
    %v2712 = vadd.f32 %v2696, %v2704
    %v2713 = vadd.f32 %v2697, %v2705
    %v2714 = vadd.f32 %v2698, %v2706
    %v2715 = vadd.f32 %v2699, %v2707
    %v2716 = vadd.f32 %v2700, %v2708
    %v2717 = vadd.f32 %v2701, %v2709
    %v2718 = vadd.f32 %v2702, %v2710
    %2719 = vst.msk [vmem:[%s10] sm:$0xff] %vm144, %v2711
    %2720 = vst.msk [vmem:[%s10 + $0x8] sm:$0xff] %vm144, %v2712
    %2721 = vst.msk [vmem:[%s10 + $0x10] sm:$0xff] %vm144, %v2713
    %2722 = vst.msk [vmem:[%s10 + $0x18] sm:$0xff] %vm144, %v2714
    %2723 = vst.msk [vmem:[%s10 + $0x20] sm:$0xff] %vm144, %v2715
    %2724 = vst.msk [vmem:[%s10 + $0x28] sm:$0xff] %vm144, %v2716
    %2725 = vst.msk [vmem:[%s10 + $0x30] sm:$0xff] %vm144, %v2717
    %2726 = vst.msk [vmem:[%s10 + $0x38] sm:$0xff] %vm144, %v2718
    // Predicated region
    $region58: #{tpu_custom_call.1} parent=1 // pred_check
      _
    $region59: #{tpu_custom_call.1} parent=1 // pred_check_branch
      %2728 = sbr.rel (0) target = $region61
    $region60: #{tpu_custom_call.1} parent=1 // pred_region
      _
    $region61: #{tpu_custom_call.1} parent=1 // pred_fallthru
      _
    // Predicated region
    $region62: #{tpu_custom_call.1} parent=1 // pred_check
      _
    $region63: #{tpu_custom_call.1} parent=1 // pred_check_branch
      %2730 = sbr.rel (0) target = $region65
    $region64: #{tpu_custom_call.1} parent=1 // pred_region
      %s2732 = ssub.s32 512, 512
      %2733 = vsyncadd [#allocation7], %s2732
      %s2734 = sshll.u32 [#allocation13], 4
      %s2735 = int_to_ptr.vmem [resolvable:$true] %s2734
      %2740 = dma.vmem_to_hbm [thread:$0]  %s2735, 512, %s11, [#allocation7], 128, 128, 8
    $region65: #{tpu_custom_call.1} parent=1 // pred_fallthru
      _
    // Predicated region
    $region66: #{tpu_custom_call.1} parent=1 // pred_check
      _
    $region67: #{tpu_custom_call.1} parent=1 // pred_check_branch
      %2742 = sbr.rel (0) target = $region69
    $region68: #{tpu_custom_call.1} parent=1 // pred_region
      %s2744 = ssub.s32 512, 512
      %2745 = vsyncadd [#allocation15], %s2744
      %s2746 = sshll.u32 [#allocation14], 4
      %s2747 = int_to_ptr.vmem [resolvable:$true] %s2746
      %2752 = dma.vmem_to_hbm [thread:$0]  %s2747, 512, %s12, [#allocation15], 128, 128, 8
    $region69: #{tpu_custom_call.1} parent=1 // pred_fallthru
      _
    // Predicated region
    $region70: #{tpu_custom_call.1} parent=1 // pred_check
      _
    $region71: #{tpu_custom_call.1} parent=1 // pred_check_branch
      %2754 = sbr.rel (0) target = $region73
    $region72: #{tpu_custom_call.1} parent=1 // pred_region
      _
    $region73: #{tpu_custom_call.1} parent=1 // pred_fallthru
      _
    // Predicated region
    $region74: #{tpu_custom_call.1} parent=1 // pred_check
      _
    $region75: #{tpu_custom_call.1} parent=1 // pred_check_branch
      %2756 = sbr.rel (0) target = $region77
    $region76: #{tpu_custom_call.1} parent=1 // pred_region
      %2757 = dma.done [#allocation7], 512
    $region77: #{tpu_custom_call.1} parent=1 // pred_fallthru
      _
    // Predicated region
    $region78: #{tpu_custom_call.1} parent=1 // pred_check
      _
    $region79: #{tpu_custom_call.1} parent=1 // pred_check_branch
      %2759 = sbr.rel (0) target = $region81
    $region80: #{tpu_custom_call.1} parent=1 // pred_region
      %2760 = dma.done [#allocation15], 512
    $region81: #{tpu_custom_call.1} parent=1 // pred_fallthru
      _
    %2761 = vsyncpa [#allocation6], 1
    %2762 = vsyncpa [#allocation9], 1
    %2763 = vsyncpa [#allocation12], 1
    %2764 = vsyncpa [#allocation7], 1
    %2765 = vsyncpa [#allocation15], 1

</llo_original>
